<compile_context>
chip_gen: v7x
topology: tpu7x:2x2x1
jax: 0.10.0
libtpu: 0.0.40
codegen_flags: <defaults>
</compile_context>

<pallas_src>
import functools
import math

import jax
import jax.numpy as jnp
from jax import lax
from jax.experimental import pallas as pl
from jax.experimental.pallas import tpu as pltpu


# Tap orderings (ky, kx) for the two 3x3 convs.
#   conv1: center tap FIRST so the residual = lanes [0, Cin) of the input.
#   conv2: plain row-major order (matches the in-kernel gather).
_TAPS_C1 = ((1, 1), (0, 0), (0, 1), (0, 2), (1, 0), (1, 2), (2, 0), (2, 1), (2, 2))
_TAPS_C2 = ((0, 0), (0, 1), (0, 2), (1, 0), (1, 1), (1, 2), (2, 0), (2, 1), (2, 2))


def _round_up(v, m):
    return (v + m - 1) // m * m


def _basic_block_kernel(x_ref, w1_ref, w2_ref, affine_ref, o_ref,
                        mf_ref, im2_ref, *,
                        wp, w_img, l_img, lf_mid, n_img, c_in):
    """Fused BasicBlock for one block of `n_img` images (one grid step).

    x_ref      : (B*L, K1p) bf16  wrapper-built conv1 im2col (center tap first;
                                  lanes [0, Cin) also serve as the residual)
    w1_ref     : (K1p, Cp)  bf16  K-packed conv1 weights
    w2_ref     : (9*Cp, Cp) bf16  conv2 weights, taps stacked along K
    affine_ref : (4, Cp)    f32   rows: bn1 scale, bn1 shift, bn2 scale, shift
    o_ref      : (B*L, Cp)  f32   "extended" output rows (h, w'), w' in [0, Wp)
    mf_ref     : (B*Lf, Cp) f32   scratch: per-image flattened padded mid
    im2_ref    : (B*L, 9*Cp) bf16 scratch: conv2 im2col
    """
    cp = o_ref.shape[-1]
    bl = n_img * l_img
    halo = wp + 1                         # rows of top halo in the padded mid

    aff = affine_ref[...]
    s1, t1 = aff[0:1, :], aff[1:2, :]
    s2, t2 = aff[2:3, :], aff[3:4, :]

    # Column validity (w' = r mod Wp < W), generated in-kernel (no fat input).
    # r mod Wp is computed in f32 with a +0.5 offset so floor() is exact even
    # with a rounded reciprocal constant (values are tiny integers).
    r = lax.broadcasted_iota(jnp.int32, (bl, cp), 0).astype(jnp.float32)
    q = jnp.floor((r + 0.5) * (1.0 / wp))
    col = r - q * float(wp)
    col_valid = col < (w_img - 0.5)

    # ---- conv1: ONE K-packed MXU matmul over all images in the block -------
    acc1 = jnp.dot(x_ref[...], w1_ref[...], preferred_element_type=jnp.float32)
    # bn1 (folded) + relu; pad columns are zeroed so they act as the
    # horizontal zero padding for conv2.
    mid = jnp.where(col_valid, jnp.maximum(acc1 * s1 + t1, 0.0), 0.0)

    # Scatter mid into the per-image flattened zero-padded buffer; only the
    # halo rows are zeroed (the interior is fully overwritten).
    for i in range(n_img):
        base = i * lf_mid
        mf_ref[base:base + halo, :] = jnp.zeros((halo, cp), jnp.float32)
        mf_ref[base + halo + l_img:base + lf_mid, :] = (
            jnp.zeros((lf_mid - halo - l_img, cp), jnp.float32))
        mf_ref[base + halo:base + halo + l_img, :] = (
            mid[i * l_img:(i + 1) * l_img, :])

    # ---- conv2 im2col: 9 lane-aligned, row-shifted copies per image --------
    # The sublane-unaligned tap reads and the bf16 cast happen exactly once
    # per tap, here (not inside the matmul loop).
    for i in range(n_img):
        base = i * lf_mid
        for j, (ky, kx) in enumerate(_TAPS_C2):
            off = ky * wp + kx
            im2_ref[i * l_img:(i + 1) * l_img, j * cp:(j + 1) * cp] = (
                mf_ref[base + off:base + off + l_img, :].astype(jnp.bfloat16))

    # ---- conv2: ONE matmul (K = 9*Cp, MXU-internal accumulation) -----------
    acc2 = jnp.dot(im2_ref[...], w2_ref[...], preferred_element_type=jnp.float32)

    # bn2 (folded) + identity shortcut + relu (lane-dense full-block store).
    # Residual = center-tap channels, i.e. lanes [0, Cin) of the conv1 input.
    lane = lax.broadcasted_iota(jnp.int32, (bl, cp), 1)
    resid = jnp.where(lane < c_in, x_ref[:, :cp].astype(jnp.float32), 0.0)
    o_ref[...] = jnp.maximum(acc2 * s2 + t2 + resid, 0.0).astype(o_ref.dtype)


def prepare_basic_block_params(w1, b1, bn1, w2, b2, bn2, *, eps=1e-5):
    """One-time parameter packing (done at init, not per forward call).

    w*: (Cout, Cin, 3, 3) PyTorch conv weights; b*: (Cout,) conv biases;
    bn*: (gamma, beta, running_mean, running_var) each (Cout,).
    """
    c_out, c_in, kh, kw = w1.shape
    assert (kh, kw) == (3, 3) and w2.shape == (c_out, c_out, 3, 3)
    assert c_in <= 128 and c_out <= 128
    c_pad = 128                                   # output-channel lane padding
    k1 = 9 * c_in
    k1_pad = max(128, _round_up(k1, 128))         # conv1 contraction padding

    # conv1: (Cout, Cin, 3, 3) -> (9*Cin, Cout), taps in _TAPS_C1 order.
    w1_t = jnp.transpose(w1.astype(jnp.float32), (2, 3, 1, 0))   # (ky,kx,Ci,Co)
    w1_rows = jnp.concatenate([w1_t[ky, kx] for ky, kx in _TAPS_C1], axis=0)
    w1_p = jnp.pad(w1_rows, ((0, k1_pad - k1), (0, c_pad - c_out)))
    w1_p = w1_p.astype(jnp.bfloat16)                             # (K1p, Cp)

    # conv2: (Cout, Cout, 3, 3) -> (9*Cp, Cp), taps in _TAPS_C2 order,
    # input channels zero-padded to the lane width per tap block.
    w2_t = jnp.transpose(w2.astype(jnp.float32), (2, 3, 1, 0))
    w2_blocks = [jnp.pad(w2_t[ky, kx], ((0, c_pad - c_out), (0, c_pad - c_out)))
                 for ky, kx in _TAPS_C2]
    w2_p = jnp.concatenate(w2_blocks, axis=0).astype(jnp.bfloat16)  # (9Cp, Cp)

    def fold_bn(b, bn):
        gamma, beta, mean, var = bn
        s = gamma / jnp.sqrt(var + eps)
        t = beta + (b - mean) * s
        return (jnp.pad(s, (0, c_pad - c_out)).astype(jnp.float32),
                jnp.pad(t, (0, c_pad - c_out)).astype(jnp.float32))

    s1, t1 = fold_bn(b1, bn1)
    s2, t2 = fold_bn(b2, bn2)
    affine = jnp.stack([s1, t1, s2, t2], axis=0)                 # (4, Cp) f32
    return dict(w1=w1_p, w2=w2_p, affine=affine,
                c_in=c_in, c_out=c_out, c_pad=c_pad, k1_pad=k1_pad)


def _pick_images_per_step(n):
    """Block several images per grid step, but keep >= 2 steps when n >= 2."""
    target = max(1, min(4, n // 4))
    for b in range(target, 0, -1):
        if n % b == 0:
            return b
    return 1


def basic_block_forward(x, params):
    """x: (N, C, H, W) float32 (PyTorch NCHW). Returns (N, C, H, W) float32."""
    N, C, H, W = x.shape
    assert C == params["c_in"] == params["c_out"], (
        "Pallas path implements the identity-shortcut BasicBlock only "
        "(stride=1, in_planes == planes).")
    Cp, K1p, Cin = params["c_pad"], params["k1_pad"], params["c_in"]

    # Padded width with (Wp + 1) % 8 == 0 so the in-kernel interior store of
    # the intermediate is sublane-aligned.
    Wp = W + 2 + ((7 - (W + 2)) % 8)
    Hp = H + 2
    L = H * Wp                                 # extended output rows / image
    Lf_mid = _round_up(L + 2 * Wp + 2, 8)      # padded-mid rows (+ tap slack)
    B = _pick_images_per_step(N)
    BL = B * L

    # NCHW -> NHWC, add the conv zero halo (right pad widened to Wp), flatten
    # rows, and build the K-packed conv1 im2col (cast once to bf16).
    x_nhwc = jnp.transpose(x, (0, 2, 3, 1)).astype(jnp.float32)
    xpad = jnp.pad(x_nhwc, ((0, 0), (1, 1), (1, Wp - W - 1), (0, 0)))
    xf = jnp.pad(xpad.reshape(N, Hp * Wp, C), ((0, 0), (0, 2), (0, 0)))
    cols = [xf[:, ky * Wp + kx: ky * Wp + kx + L, :] for ky, kx in _TAPS_C1]
    x_im = jnp.concatenate(cols, axis=-1)                       # (N, L, 9*Cin)
    x_im = jnp.pad(x_im, ((0, 0), (0, 0), (0, K1p - 9 * C)))
    x_im = x_im.astype(jnp.bfloat16).reshape(N // B, BL, K1p)

    flops = 2 * N * L * Cp * (K1p + 9 * Cp)
    bytes_accessed = (N * L * K1p * 2 + (K1p + 9 * Cp) * Cp * 2
                      + 4 * Cp * 4 + N * L * Cp * 4)

    kernel = functools.partial(
        _basic_block_kernel, wp=Wp, w_img=W, l_img=L, lf_mid=Lf_mid,
        n_img=B, c_in=Cin)

    # NOTE: the constant-index weight blocks (w1/w2) are small (<= ~300 KB)
    # so default double-buffering is immaterial for the VMEM budget here.
    out = pl.pallas_call(
        kernel,
        out_shape=jax.ShapeDtypeStruct((N // B, BL, Cp), jnp.float32),
        grid_spec=pltpu.PrefetchScalarGridSpec(
            num_scalar_prefetch=0,
            grid=(N // B,),
            in_specs=[
                pl.BlockSpec((None, BL, K1p), lambda n: (n, 0, 0)),  # im2col x
                pl.BlockSpec((K1p, Cp), lambda n: (0, 0)),           # conv1 W
                pl.BlockSpec((9 * Cp, Cp), lambda n: (0, 0)),        # conv2 W
                pl.BlockSpec((4, Cp), lambda n: (0, 0)),             # BN affine
            ],
            out_specs=pl.BlockSpec((None, BL, Cp), lambda n: (n, 0, 0)),
            scratch_shapes=[
                pltpu.VMEM((B * Lf_mid, Cp), jnp.float32),   # padded mid
                pltpu.VMEM((BL, 9 * Cp), jnp.bfloat16),      # conv2 im2col
            ]),
        compiler_params=pltpu.CompilerParams(
            dimension_semantics=("parallel",)),
        cost_estimate=pl.CostEstimate(flops=flops, transcendentals=0,
                                      bytes_accessed=bytes_accessed),
    )(x_im, params["w1"], params["w2"], params["affine"])

    # Drop pad columns / pad channels and go back to NCHW.
    out = out.reshape(N, H, Wp, Cp)[:, :, :W, :C]
    return jnp.transpose(out, (0, 3, 1, 2))


def _ref_basic_block(x, w1, b1, bn1, w2, b2, bn2, eps):
    """Pure-JAX f32 reference (PyTorch eval-mode BasicBlock semantics)."""
    def conv(x, w, b):
        y = lax.conv_general_dilated(
            x, w, window_strides=(1, 1), padding=((1, 1), (1, 1)),
            dimension_numbers=("NCHW", "OIHW", "NCHW"))
        return y + b[None, :, None, None]

    def bn(y, p):
        g, beta, mu, var = p
        inv = (g / jnp.sqrt(var + eps))[None, :, None, None]
        return (y - mu[None, :, None, None]) * inv + beta[None, :, None, None]

    out = jax.nn.relu(bn(conv(x, w1, b1), bn1))
    out = bn(conv(out, w2, b2), bn2)
    return jax.nn.relu(out + x)


if __name__ == "__main__":
    N, C, H, W = 2, 4, 16, 16      # in_planes == planes == 4, stride = 1
    eps = 1e-5

    key = jax.random.PRNGKey(0)
    ks = jax.random.split(key, 16)
    bound = 1.0 / math.sqrt(C * 3 * 3)

    x = jax.random.normal(ks[0], (N, C, H, W), jnp.float32)
    w1 = jax.random.uniform(ks[1], (C, C, 3, 3), jnp.float32, -bound, bound)
    b1 = jax.random.uniform(ks[2], (C,), jnp.float32, -bound, bound)
    w2 = jax.random.uniform(ks[3], (C, C, 3, 3), jnp.float32, -bound, bound)
    b2 = jax.random.uniform(ks[4], (C,), jnp.float32, -bound, bound)
    bn1 = (jax.random.uniform(ks[5], (C,), jnp.float32, 0.5, 1.5),    # gamma
           jax.random.uniform(ks[6], (C,), jnp.float32, -0.5, 0.5),   # beta
           0.1 * jax.random.normal(ks[7], (C,), jnp.float32),         # run mean
           jax.random.uniform(ks[8], (C,), jnp.float32, 0.5, 1.5))    # run var
    bn2 = (jax.random.uniform(ks[9], (C,), jnp.float32, 0.5, 1.5),
           jax.random.uniform(ks[10], (C,), jnp.float32, -0.5, 0.5),
           0.1 * jax.random.normal(ks[11], (C,), jnp.float32),
           jax.random.uniform(ks[12], (C,), jnp.float32, 0.5, 1.5))

    params = prepare_basic_block_params(w1, b1, bn1, w2, b2, bn2, eps=eps)

    y = basic_block_forward(x, params)
    y = jax.block_until_ready(y)

    y_ref = _ref_basic_block(x, w1, b1, bn1, w2, b2, bn2, eps)
    assert y.shape == y_ref.shape == (N, C, H, W)
    # bf16 MXU operands / bf16 residual with f32 accumulation -> ~1% budget.
    assert jnp.allclose(y, y_ref, atol=5e-2, rtol=5e-2), float(
        jnp.max(jnp.abs(y - y_ref)))

    print("KERNEL_OK")
</pallas_src>

<mosaic_0001>
module attributes {stable_mosaic.version = 11 : i64} {
  func.func @_basic_block_kernel(%arg0: i32, %arg1: memref<1x368x128xbf16, #tpu.memory_space<vmem>>, %arg2: memref<128x128xbf16, #tpu.memory_space<vmem>>, %arg3: memref<1152x128xbf16, #tpu.memory_space<vmem>>, %arg4: memref<4x128xf32, #tpu.memory_space<vmem>>, %arg5: memref<1x368x128xf32, #tpu.memory_space<vmem>>, %arg6: memref<416x128xf32, #tpu.memory_space<vmem>>, %arg7: memref<368x1152xbf16, #tpu.memory_space<vmem>>) attributes {dimension_semantics = [#tpu.dimension_semantics<parallel>], iteration_bounds = array<i64: 2>, scalar_prefetch = 0 : i64, scratch_operands = 2 : i64, tpu.core_type = #tpu.core_type<tc>, window_params = [{transform_indices = @transform_0, window_bounds = array<i64: 1, 368, 128>}, {pipeline_mode = #tpu.pipeline_mode<synchronous>, transform_indices = @transform_1, window_bounds = array<i64: 128, 128>}, {pipeline_mode = #tpu.pipeline_mode<synchronous>, transform_indices = @transform_2, window_bounds = array<i64: 1152, 128>}, {pipeline_mode = #tpu.pipeline_mode<synchronous>, transform_indices = @transform_3, window_bounds = array<i64: 4, 128>}, {transform_indices = @transform_4, window_bounds = array<i64: 1, 368, 128>}]} {
    %c0 = arith.constant 0 : index
    %c0_0 = arith.constant 0 : index
    %0 = vector.load %arg4[%c0, %c0_0] : memref<4x128xf32, #tpu.memory_space<vmem>>, vector<4x128xf32>
    %1 = vector.extract_strided_slice %0 {offsets = [0, 0], sizes = [1, 128], strides = [1, 1]} : vector<4x128xf32> to vector<1x128xf32>
    %2 = vector.extract_strided_slice %0 {offsets = [1, 0], sizes = [1, 128], strides = [1, 1]} : vector<4x128xf32> to vector<1x128xf32>
    %3 = vector.extract_strided_slice %0 {offsets = [2, 0], sizes = [1, 128], strides = [1, 1]} : vector<4x128xf32> to vector<1x128xf32>
    %4 = vector.extract_strided_slice %0 {offsets = [3, 0], sizes = [1, 128], strides = [1, 1]} : vector<4x128xf32> to vector<1x128xf32>
    %5 = tpu.iota {dimensions = array<i32: 0>} : vector<368x128xi32>
    %6 = arith.sitofp %5 : vector<368x128xi32> to vector<368x128xf32>
    %cst = arith.constant 5.000000e-01 : f32
    %7 = vector.broadcast %cst : f32 to vector<368x128xf32>
    %8 = arith.addf %6, %7 : vector<368x128xf32>
    %cst_1 = arith.constant 0.0434782617 : f32
    %9 = vector.broadcast %cst_1 : f32 to vector<368x128xf32>
    %10 = arith.mulf %8, %9 : vector<368x128xf32>
    %11 = math.floor %10 : vector<368x128xf32>
    %cst_2 = arith.constant 2.300000e+01 : f32
    %12 = vector.broadcast %cst_2 : f32 to vector<368x128xf32>
    %13 = arith.mulf %11, %12 : vector<368x128xf32>
    %14 = arith.subf %6, %13 : vector<368x128xf32>
    %cst_3 = arith.constant 1.550000e+01 : f32
    %15 = vector.broadcast %cst_3 : f32 to vector<368x128xf32>
    %16 = arith.cmpf olt, %14, %15 : vector<368x128xf32>
    %c0_4 = arith.constant 0 : index
    %c0_5 = arith.constant 0 : index
    %c0_6 = arith.constant 0 : index
    %17 = vector.load %arg1[%c0_4, %c0_5, %c0_6] : memref<1x368x128xbf16, #tpu.memory_space<vmem>>, vector<1x368x128xbf16>
    %18 = vector.shape_cast %17 : vector<1x368x128xbf16> to vector<368x128xbf16>
    %c0_7 = arith.constant 0 : index
    %c0_8 = arith.constant 0 : index
    %19 = vector.load %arg2[%c0_7, %c0_8] : memref<128x128xbf16, #tpu.memory_space<vmem>>, vector<128x128xbf16>
    %cst_9 = arith.constant dense<0.000000e+00> : vector<368x128xf32>
    %20 = tpu.matmul %18, %19, %cst_9 {dimension_numbers = #tpu.dot_dimension_numbers<[1], [0], [0], [1], [0, 0, 1, 1], [], []>} : vector<368x128xbf16>, vector<128x128xbf16>, vector<368x128xf32> -> vector<368x128xf32>
    %21 = vector.broadcast %1 : vector<1x128xf32> to vector<368x128xf32>
    %22 = arith.mulf %20, %21 : vector<368x128xf32>
    %23 = vector.broadcast %2 : vector<1x128xf32> to vector<368x128xf32>
    %24 = arith.addf %22, %23 : vector<368x128xf32>
    %cst_10 = arith.constant 0.000000e+00 : f32
    %25 = vector.broadcast %cst_10 : f32 to vector<368x128xf32>
    %26 = arith.maximumf %24, %25 : vector<368x128xf32>
    %cst_11 = arith.constant 0.000000e+00 : f32
    %27 = vector.broadcast %cst_11 : f32 to vector<368x128xf32>
    %28 = arith.select %16, %26, %27 : vector<368x128xi1>, vector<368x128xf32>
    %cst_12 = arith.constant 0.000000e+00 : f32
    %29 = vector.broadcast %cst_12 : f32 to vector<24x128xf32>
    %c0_13 = arith.constant 0 : index
    %c0_14 = arith.constant 0 : index
    %30 = vector.load %arg6[%c0_13, %c0_14] : memref<416x128xf32, #tpu.memory_space<vmem>>, vector<24x128xf32>
    tpu.vector_store %arg6[%c0_13, %c0_14], %29 {strides = array<i32>} : memref<416x128xf32, #tpu.memory_space<vmem>>, vector<24x128xf32>,
    %cst_15 = arith.constant 0.000000e+00 : f32
    %31 = vector.broadcast %cst_15 : f32 to vector<24x128xf32>
    %c392 = arith.constant 392 : index
    %c0_16 = arith.constant 0 : index
    %32 = vector.load %arg6[%c392, %c0_16] : memref<416x128xf32, #tpu.memory_space<vmem>>, vector<24x128xf32>
    tpu.vector_store %arg6[%c392, %c0_16], %31 {strides = array<i32>} : memref<416x128xf32, #tpu.memory_space<vmem>>, vector<24x128xf32>,
    %c24 = arith.constant 24 : index
    %c0_17 = arith.constant 0 : index
    %33 = vector.load %arg6[%c24, %c0_17] : memref<416x128xf32, #tpu.memory_space<vmem>>, vector<368x128xf32>
    tpu.vector_store %arg6[%c24, %c0_17], %28 {strides = array<i32>} : memref<416x128xf32, #tpu.memory_space<vmem>>, vector<368x128xf32>,
    %c0_18 = arith.constant 0 : index
    %c0_19 = arith.constant 0 : index
    %34 = vector.load %arg6[%c0_18, %c0_19] : memref<416x128xf32, #tpu.memory_space<vmem>>, vector<368x128xf32>
    %35 = arith.truncf %34 : vector<368x128xf32> to vector<368x128xbf16>
    %c0_20 = arith.constant 0 : index
    %c0_21 = arith.constant 0 : index
    %36 = vector.load %arg7[%c0_20, %c0_21] : memref<368x1152xbf16, #tpu.memory_space<vmem>>, vector<368x128xbf16>
    tpu.vector_store %arg7[%c0_20, %c0_21], %35 {strides = array<i32>} : memref<368x1152xbf16, #tpu.memory_space<vmem>>, vector<368x128xbf16>,
    %c1 = arith.constant 1 : index
    %c0_22 = arith.constant 0 : index
    %37 = vector.load %arg6[%c1, %c0_22] : memref<416x128xf32, #tpu.memory_space<vmem>>, vector<368x128xf32>
    %38 = arith.truncf %37 : vector<368x128xf32> to vector<368x128xbf16>
    %c0_23 = arith.constant 0 : index
    %c128 = arith.constant 128 : index
    %39 = vector.load %arg7[%c0_23, %c128] : memref<368x1152xbf16, #tpu.memory_space<vmem>>, vector<368x128xbf16>
    tpu.vector_store %arg7[%c0_23, %c128], %38 {strides = array<i32>} : memref<368x1152xbf16, #tpu.memory_space<vmem>>, vector<368x128xbf16>,
    %c2 = arith.constant 2 : index
    %c0_24 = arith.constant 0 : index
    %40 = vector.load %arg6[%c2, %c0_24] : memref<416x128xf32, #tpu.memory_space<vmem>>, vector<368x128xf32>
    %41 = arith.truncf %40 : vector<368x128xf32> to vector<368x128xbf16>
    %c0_25 = arith.constant 0 : index
    %c256 = arith.constant 256 : index
    %42 = vector.load %arg7[%c0_25, %c256] : memref<368x1152xbf16, #tpu.memory_space<vmem>>, vector<368x128xbf16>
    tpu.vector_store %arg7[%c0_25, %c256], %41 {strides = array<i32>} : memref<368x1152xbf16, #tpu.memory_space<vmem>>, vector<368x128xbf16>,
    %c23 = arith.constant 23 : index
    %c0_26 = arith.constant 0 : index
    %43 = vector.load %arg6[%c23, %c0_26] : memref<416x128xf32, #tpu.memory_space<vmem>>, vector<368x128xf32>
    %44 = arith.truncf %43 : vector<368x128xf32> to vector<368x128xbf16>
    %c0_27 = arith.constant 0 : index
    %c384 = arith.constant 384 : index
    %45 = vector.load %arg7[%c0_27, %c384] : memref<368x1152xbf16, #tpu.memory_space<vmem>>, vector<368x128xbf16>
    tpu.vector_store %arg7[%c0_27, %c384], %44 {strides = array<i32>} : memref<368x1152xbf16, #tpu.memory_space<vmem>>, vector<368x128xbf16>,
    %c24_28 = arith.constant 24 : index
    %c0_29 = arith.constant 0 : index
    %46 = vector.load %arg6[%c24_28, %c0_29] : memref<416x128xf32, #tpu.memory_space<vmem>>, vector<368x128xf32>
    %47 = arith.truncf %46 : vector<368x128xf32> to vector<368x128xbf16>
    %c0_30 = arith.constant 0 : index
    %c512 = arith.constant 512 : index
    %48 = vector.load %arg7[%c0_30, %c512] : memref<368x1152xbf16, #tpu.memory_space<vmem>>, vector<368x128xbf16>
    tpu.vector_store %arg7[%c0_30, %c512], %47 {strides = array<i32>} : memref<368x1152xbf16, #tpu.memory_space<vmem>>, vector<368x128xbf16>,
    %c25 = arith.constant 25 : index
    %c0_31 = arith.constant 0 : index
    %49 = vector.load %arg6[%c25, %c0_31] : memref<416x128xf32, #tpu.memory_space<vmem>>, vector<368x128xf32>
    %50 = arith.truncf %49 : vector<368x128xf32> to vector<368x128xbf16>
    %c0_32 = arith.constant 0 : index
    %c640 = arith.constant 640 : index
    %51 = vector.load %arg7[%c0_32, %c640] : memref<368x1152xbf16, #tpu.memory_space<vmem>>, vector<368x128xbf16>
    tpu.vector_store %arg7[%c0_32, %c640], %50 {strides = array<i32>} : memref<368x1152xbf16, #tpu.memory_space<vmem>>, vector<368x128xbf16>,
    %c46 = arith.constant 46 : index
    %c0_33 = arith.constant 0 : index
    %52 = vector.load %arg6[%c46, %c0_33] : memref<416x128xf32, #tpu.memory_space<vmem>>, vector<368x128xf32>
    %53 = arith.truncf %52 : vector<368x128xf32> to vector<368x128xbf16>
    %c0_34 = arith.constant 0 : index
    %c768 = arith.constant 768 : index
    %54 = vector.load %arg7[%c0_34, %c768] : memref<368x1152xbf16, #tpu.memory_space<vmem>>, vector<368x128xbf16>
    tpu.vector_store %arg7[%c0_34, %c768], %53 {strides = array<i32>} : memref<368x1152xbf16, #tpu.memory_space<vmem>>, vector<368x128xbf16>,
    %c47 = arith.constant 47 : index
    %c0_35 = arith.constant 0 : index
    %55 = vector.load %arg6[%c47, %c0_35] : memref<416x128xf32, #tpu.memory_space<vmem>>, vector<368x128xf32>
    %56 = arith.truncf %55 : vector<368x128xf32> to vector<368x128xbf16>
    %c0_36 = arith.constant 0 : index
    %c896 = arith.constant 896 : index
    %57 = vector.load %arg7[%c0_36, %c896] : memref<368x1152xbf16, #tpu.memory_space<vmem>>, vector<368x128xbf16>
    tpu.vector_store %arg7[%c0_36, %c896], %56 {strides = array<i32>} : memref<368x1152xbf16, #tpu.memory_space<vmem>>, vector<368x128xbf16>,
    %c48 = arith.constant 48 : index
    %c0_37 = arith.constant 0 : index
    %58 = vector.load %arg6[%c48, %c0_37] : memref<416x128xf32, #tpu.memory_space<vmem>>, vector<368x128xf32>
    %59 = arith.truncf %58 : vector<368x128xf32> to vector<368x128xbf16>
    %c0_38 = arith.constant 0 : index
    %c1024 = arith.constant 1024 : index
    %60 = vector.load %arg7[%c0_38, %c1024] : memref<368x1152xbf16, #tpu.memory_space<vmem>>, vector<368x128xbf16>
    tpu.vector_store %arg7[%c0_38, %c1024], %59 {strides = array<i32>} : memref<368x1152xbf16, #tpu.memory_space<vmem>>, vector<368x128xbf16>,
    %c0_39 = arith.constant 0 : index
    %c0_40 = arith.constant 0 : index
    %61 = vector.load %arg7[%c0_39, %c0_40] : memref<368x1152xbf16, #tpu.memory_space<vmem>>, vector<368x1152xbf16>
    %c0_41 = arith.constant 0 : index
    %c0_42 = arith.constant 0 : index
    %62 = vector.load %arg3[%c0_41, %c0_42] : memref<1152x128xbf16, #tpu.memory_space<vmem>>, vector<1152x128xbf16>
    %cst_43 = arith.constant dense<0.000000e+00> : vector<368x128xf32>
    %63 = tpu.matmul %61, %62, %cst_43 {dimension_numbers = #tpu.dot_dimension_numbers<[1], [0], [0], [1], [0, 0, 1, 1], [], []>} : vector<368x1152xbf16>, vector<1152x128xbf16>, vector<368x128xf32> -> vector<368x128xf32>
    %64 = tpu.iota {dimensions = array<i32: 1>} : vector<368x128xi32>
    %c4_i32 = arith.constant 4 : i32
    %65 = vector.broadcast %c4_i32 : i32 to vector<368x128xi32>
    %66 = arith.cmpi slt, %64, %65 : vector<368x128xi32>
    %c0_44 = arith.constant 0 : index
    %c0_45 = arith.constant 0 : index
    %c0_46 = arith.constant 0 : index
    %67 = vector.load %arg1[%c0_44, %c0_45, %c0_46] : memref<1x368x128xbf16, #tpu.memory_space<vmem>>, vector<1x368x128xbf16>
    %68 = vector.shape_cast %67 : vector<1x368x128xbf16> to vector<368x128xbf16>
    %69 = arith.extf %68 : vector<368x128xbf16> to vector<368x128xf32>
    %cst_47 = arith.constant 0.000000e+00 : f32
    %70 = vector.broadcast %cst_47 : f32 to vector<368x128xf32>
    %71 = arith.select %66, %69, %70 : vector<368x128xi1>, vector<368x128xf32>
    %72 = vector.broadcast %3 : vector<1x128xf32> to vector<368x128xf32>
    %73 = arith.mulf %63, %72 : vector<368x128xf32>
    %74 = vector.broadcast %4 : vector<1x128xf32> to vector<368x128xf32>
    %75 = arith.addf %73, %74 : vector<368x128xf32>
    %76 = arith.addf %75, %71 : vector<368x128xf32>
    %cst_48 = arith.constant 0.000000e+00 : f32
    %77 = vector.broadcast %cst_48 : f32 to vector<368x128xf32>
    %78 = arith.maximumf %76, %77 : vector<368x128xf32>
    %c0_49 = arith.constant 0 : index
    %c0_50 = arith.constant 0 : index
    %c0_51 = arith.constant 0 : index
    %79 = vector.load %arg5[%c0_49, %c0_50, %c0_51] : memref<1x368x128xf32, #tpu.memory_space<vmem>>, vector<1x368x128xf32>
    %80 = vector.shape_cast %79 : vector<1x368x128xf32> to vector<368x128xf32>
    %81 = vector.shape_cast %78 : vector<368x128xf32> to vector<1x368x128xf32>
    tpu.vector_store %arg5[%c0_49, %c0_50, %c0_51], %81 {strides = array<i32>} : memref<1x368x128xf32, #tpu.memory_space<vmem>>, vector<1x368x128xf32>,
    return
  }
  func.func @transform_0(%arg0: i32) -> (i32, i32, i32) {
    %c0_i32 = arith.constant 0 : i32
    %c0_i32_0 = arith.constant 0 : i32
    %c0_i32_1 = arith.constant 0 : i32
    return %arg0, %c0_i32, %c0_i32_0 : i32, i32, i32
  }
  func.func @transform_1(%arg0: i32) -> (i32, i32) {
    %c0_i32 = arith.constant 0 : i32
    %c0_i32_0 = arith.constant 0 : i32
    %c0_i32_1 = arith.constant 0 : i32
    return %c0_i32, %c0_i32_0 : i32, i32
  }
  func.func @transform_2(%arg0: i32) -> (i32, i32) {
    %c0_i32 = arith.constant 0 : i32
    %c0_i32_0 = arith.constant 0 : i32
    %c0_i32_1 = arith.constant 0 : i32
    return %c0_i32, %c0_i32_0 : i32, i32
  }
  func.func @transform_3(%arg0: i32) -> (i32, i32) {
    %c0_i32 = arith.constant 0 : i32
    %c0_i32_0 = arith.constant 0 : i32
    %c0_i32_1 = arith.constant 0 : i32
    return %c0_i32, %c0_i32_0 : i32, i32
  }
  func.func @transform_4(%arg0: i32) -> (i32, i32, i32) {
    %c0_i32 = arith.constant 0 : i32
    %c0_i32_0 = arith.constant 0 : i32
    %c0_i32_1 = arith.constant 0 : i32
    return %arg0, %c0_i32, %c0_i32_0 : i32, i32, i32
  }
}

</mosaic_0001>

<llo_original>
// kernel: tpu_custom_call.1
$region0: #{tpu_custom_call.1}
  #allocation0 [shape = 'u32[]', space=smem, size = 0x4, offset = 0x4, fixed_abs, tag = 'smem constant byte address 0x4 - core index']
  #allocation1 [shape = 'u32[144,128]{1,0:T(1,128)}', space=vmem, size = 0x12000, scoped, tag = 'internal scratch']
  #allocation2 [shape = 'f32[416,128]{1,0:T(8,128)}', space=vmem, size = 0x34000, scoped, tag = 'scratch operand']
  #allocation3 [shape = 'bf16[368,1152]{1,0:T(16,128)(2,1)}', space=vmem, size = 0xcf000, scoped, tag = 'scratch operand']
  %s0 = inlined_call_operand.hbm [shape: bf16[2,368,128], index: 0, kind: input, shape index: {}]
  %s1 = inlined_call_operand.hbm [shape: bf16[128,128], index: 1, kind: input, shape index: {}]
  %s2 = inlined_call_operand.hbm [shape: bf16[1152,128], index: 2, kind: input, shape index: {}]
  %s3 = inlined_call_operand.vmem [shape: f32[4,128], index: 3, kind: input, shape index: {}]
  %s4 = inlined_call_operand.hbm [shape: f32[2,368,128], index: 4, kind: output, shape index: {}]
  %s5 = sld [smem:[#allocation0]]
  $region61: #{tpu_custom_call.1} parent=0
    _
  %s7 = ssub.s32 1, %s5
  %s8 = scalar_select 0, %s7, %s5
  $region1: #{tpu_custom_call.1} parent=0
    #allocation4 [shape = 'u8[188416]{0}', space=vmem, size = 0x2e000, scoped, tag = 'input window, operand 0']
    #allocation5 [shape = 's32[2]{0}', space=sflag, size = 0x8, scoped, tag = 'scoped memory for tpu_custom_call.1']
    #allocation6 [shape = 's32[2]{0}', space=sflag, size = 0x8, scoped, tag = 'scoped memory for tpu_custom_call.1']
    #allocation7 [shape = 'u8[32768]{0}', space=vmem, size = 0x8000, scoped, tag = 'input window, operand 1, single buffered']
    #allocation8 [shape = 's32[1]{0}', space=sflag, size = 0x4, scoped, tag = 'scoped memory for tpu_custom_call.1']
    #allocation9 [shape = 'u8[294912]{0}', space=vmem, size = 0x48000, scoped, tag = 'input window, operand 2, single buffered']
    #allocation10 [shape = 'u8[376832]{0}', space=vmem, size = 0x5c000, scoped, tag = 'output window, operand 0']
    %9 = vsyncpa [#allocation5], 0
    %s10 = scalar_lea.sflag [#allocation5], 1
    %11 = vsyncpa %s10, 0
    %12 = vsyncpa [#allocation8], 0
    %13 = vsyncpa [#allocation6], 0
    %s14 = scalar_lea.sflag [#allocation6], 1
    %15 = vsyncpa %s14, 0
    loop: start=0, step=1, limit=4
    $region2: #{tpu_custom_call.1} parent=1 // loop_pre_header
      _
    $region3: #{tpu_custom_call.1} parent=1 // loop_header
      %s17 = sphi 0, %s21
      %p18 = scmp.ge.s32.totalorder %s17, 4
      %s27 = sphi 0, %s29
      %s30 = sphi 0, %s27
      %s31 = sphi 0, %s30
      %s47 = sphi 0, %s31
      %s51 = sphi 0, %s51
      %s53 = sphi 0, %s51
      %s54 = sphi 0, %s53
      %s68 = sphi 0, %s54
      %s72 = sphi 0, %s72
      %s74 = sphi 0, %s72
      %s75 = sphi 0, %s74
      %s89 = sphi 0, %s75
      %s93 = sphi 0, %s93
      %s95 = sphi 0, %s93
      %s96 = sphi 0, %s95
      %s110 = sphi 0, %s96
      %s116 = sphi 0, %s118
      %s119 = sphi 0, %s116
      %s120 = sphi 0, %s119
      %s136 = sphi 0, %s120
    $region4: #{tpu_custom_call.1} parent=1 // loop_header_branch
      %20 = sbr.rel (%p18) target = $region8
    $region5: #{tpu_custom_call.1} parent=1 // loop_body
      %s22 = ssub.s32 %s17, 1
      %s23 = ssub.s32 %s17, 2
      %s24 = sadd.s32 %s17, 1
      %s25 = ssub.s32 %s17, %s24
      %p26 = scmp.eq.s32.totalorder %s25, 0
      %s28 = sadd.s32 %s27, 1
      %s29 = scalar_select %p26, %s27, %s28
      %p32 = pneg %p26
      %p33 = scmp.eq.s32.totalorder %s17, 1
      %p34 = por %p32, %p33
      %p35 = scmp.ne.s32.totalorder %s27, %s30
      %p36 = scmp.eq.s32.totalorder %s17, 0
      %p37 = por %p35, %p36
      %p38 = scmp.ne.s32.totalorder %s27, %s30
      %p39 = scmp.eq.s32.totalorder %s22, 1
      %p40 = por %p38, %p39
      %p41 = scmp.ne.s32.totalorder %s30, %s31
      %p42 = scmp.eq.s32.totalorder %s22, 0
      %p43 = por %p41, %p42
      %p44 = scmp.ne.s32.totalorder %s30, %s31
      %p45 = scmp.eq.s32.totalorder %s23, 1
      %p46 = por %p44, %p45
      %p48 = scmp.ne.s32.totalorder %s31, %s47
      %p49 = scmp.eq.s32.totalorder %s23, 0
      %p50 = por %p48, %p49
      %s52 = sadd.s32 %s51, 1
      %p55 = scmp.eq.s32.totalorder %s17, 1
      %p56 = scmp.ne.s32.totalorder %s51, %s53
      %p57 = scmp.eq.s32.totalorder %s17, 0
      %p58 = por %p56, %p57
      %p59 = scmp.ne.s32.totalorder %s51, %s53
      %p60 = scmp.eq.s32.totalorder %s22, 1
      %p61 = por %p59, %p60
      %p62 = scmp.ne.s32.totalorder %s53, %s54
      %p63 = scmp.eq.s32.totalorder %s22, 0
      %p64 = por %p62, %p63
      %p65 = scmp.ne.s32.totalorder %s53, %s54
      %p66 = scmp.eq.s32.totalorder %s23, 1
      %p67 = por %p65, %p66
      %p69 = scmp.ne.s32.totalorder %s54, %s68
      %p70 = scmp.eq.s32.totalorder %s23, 0
      %p71 = por %p69, %p70
      %s73 = sadd.s32 %s72, 1
      %p76 = scmp.eq.s32.totalorder %s17, 1
      %p77 = scmp.ne.s32.totalorder %s72, %s74
      %p78 = scmp.eq.s32.totalorder %s17, 0
      %p79 = por %p77, %p78
      %p80 = scmp.ne.s32.totalorder %s72, %s74
      %p81 = scmp.eq.s32.totalorder %s22, 1
      %p82 = por %p80, %p81
      %p83 = scmp.ne.s32.totalorder %s74, %s75
      %p84 = scmp.eq.s32.totalorder %s22, 0
      %p85 = por %p83, %p84
      %p86 = scmp.ne.s32.totalorder %s74, %s75
      %p87 = scmp.eq.s32.totalorder %s23, 1
      %p88 = por %p86, %p87
      %p90 = scmp.ne.s32.totalorder %s75, %s89
      %p91 = scmp.eq.s32.totalorder %s23, 0
      %p92 = por %p90, %p91
      %s94 = sadd.s32 %s93, 1
      %p97 = scmp.eq.s32.totalorder %s17, 1
      %p98 = scmp.ne.s32.totalorder %s93, %s95
      %p99 = scmp.eq.s32.totalorder %s17, 0
      %p100 = por %p98, %p99
      %p101 = scmp.ne.s32.totalorder %s93, %s95
      %p102 = scmp.eq.s32.totalorder %s22, 1
      %p103 = por %p101, %p102
      %p104 = scmp.ne.s32.totalorder %s95, %s96
      %p105 = scmp.eq.s32.totalorder %s22, 0
      %p106 = por %p104, %p105
      %p107 = scmp.ne.s32.totalorder %s95, %s96
      %p108 = scmp.eq.s32.totalorder %s23, 1
      %p109 = por %p107, %p108
      %p111 = scmp.ne.s32.totalorder %s96, %s110
      %p112 = scmp.eq.s32.totalorder %s23, 0
      %p113 = por %p111, %p112
      %s114 = ssub.s32 %s17, %s24
      %p115 = scmp.eq.s32.totalorder %s114, 0
      %s117 = sadd.s32 %s116, 1
      %s118 = scalar_select %p115, %s116, %s117
      %p121 = pneg %p115
      %p122 = scmp.eq.s32.totalorder %s17, 1
      %p123 = por %p121, %p122
      %p124 = scmp.ne.s32.totalorder %s116, %s119
      %p125 = scmp.eq.s32.totalorder %s17, 0
      %p126 = por %p124, %p125
      %p127 = scmp.ne.s32.totalorder %s116, %s119
      %p128 = scmp.eq.s32.totalorder %s22, 1
      %p129 = por %p127, %p128
      %p130 = scmp.ne.s32.totalorder %s119, %s120
      %p131 = scmp.eq.s32.totalorder %s22, 0
      %p132 = por %p130, %p131
      %p133 = scmp.ne.s32.totalorder %s119, %s120
      %p134 = scmp.eq.s32.totalorder %s23, 1
      %p135 = por %p133, %p134
      %p137 = scmp.ne.s32.totalorder %s120, %s136
      %p138 = scmp.eq.s32.totalorder %s23, 0
      %p139 = por %p137, %p138
      %p140 = scmp.le.s32.totalorder 1, %s17
      %p141 = scmp.lt.s32.totalorder %s17, 3
      %p142 = pnand %p140, %p141
      %p143 = pneg %p142
      // Predicated region
      $region9: #{tpu_custom_call.1} parent=5 // pred_check
        _
      $region10: #{tpu_custom_call.1} parent=5 // pred_check_branch
        %145 = sbr.rel (%p142) target = $region12
      $region11: #{tpu_custom_call.1} parent=5 // pred_region
        %s146 = ssub.s32 %s17, 1
        // Predicated region
        $region13: #{tpu_custom_call.1} parent=11 // pred_check
          %p147 = pneg %p64
        $region14: #{tpu_custom_call.1} parent=11 // pred_check_branch
          %149 = sbr.rel (%p147) target = $region16
        $region15: #{tpu_custom_call.1} parent=11 // pred_region
          %s151 = ssub.s32 1024, 1024
          %152 = vsyncadd [#allocation8], %s151
          %s153 = sshll.u32 [#allocation7], 4
          %s154 = int_to_ptr.vmem [resolvable:$true] %s153
          %159 = dma.hbm_to_vmem [thread:$0]  %s1, 1024, %s154, [#allocation8], 64, 64, 4
        $region16: #{tpu_custom_call.1} parent=11 // pred_fallthru
          _
        // Predicated region
        $region17: #{tpu_custom_call.1} parent=11 // pred_check
          %p160 = pneg %p85
        $region18: #{tpu_custom_call.1} parent=11 // pred_check_branch
          %162 = sbr.rel (%p160) target = $region20
        $region19: #{tpu_custom_call.1} parent=11 // pred_region
          %s164 = ssub.s32 9216, 9216
          %165 = vsyncadd [#allocation8], %s164
          %s166 = sshll.u32 [#allocation9], 4
          %s167 = int_to_ptr.vmem [resolvable:$true] %s166
          %172 = dma.hbm_to_vmem [thread:$0]  %s2, 9216, %s167, [#allocation8], 64, 64, 4
        $region20: #{tpu_custom_call.1} parent=11 // pred_fallthru
          _
        // Predicated region
        $region21: #{tpu_custom_call.1} parent=11 // pred_check
          %p173 = pneg %p106
        $region22: #{tpu_custom_call.1} parent=11 // pred_check_branch
          %175 = sbr.rel (%p173) target = $region24
        $region23: #{tpu_custom_call.1} parent=11 // pred_region
          _
        $region24: #{tpu_custom_call.1} parent=11 // pred_fallthru
          _
      $region12: #{tpu_custom_call.1} parent=5 // pred_fallthru
        _
      %p176 = scmp.lt.s32.totalorder %s17, 2
      // Predicated region
      $region25: #{tpu_custom_call.1} parent=5 // pred_check
        %p177 = pneg %p176
      $region26: #{tpu_custom_call.1} parent=5 // pred_check_branch
        %179 = sbr.rel (%p177) target = $region28
      $region27: #{tpu_custom_call.1} parent=5 // pred_region
        // Predicated region
        $region29: #{tpu_custom_call.1} parent=27 // pred_check
          %p180 = pneg %p37
        $region30: #{tpu_custom_call.1} parent=27 // pred_check_branch
          %182 = sbr.rel (%p180) target = $region32
        $region31: #{tpu_custom_call.1} parent=27 // pred_region
          %s183 = sand.u32 %s27, 1
          %s184 = scalar_lea.sflag [#allocation5], %s183
          %s185 = sand.u32 %s27, 1
          %s186 = smul.addr %s185, 184
          %s187 = scalar_lea.vmem [#allocation4], %s186
          %s189 = ssub.s32 2944, 2944
          %190 = vsyncadd %s184, %s189
          %s191 = smul.addr %s17, 46
          %s192 = smul.addr %s191, 64
          %s193 = scalar_lea.hbm %s0, %s192
          %s194 = sshll.u32 %s187, 4
          %s195 = int_to_ptr.vmem [resolvable:$true] %s194
          %200 = dma.hbm_to_vmem [thread:$0]  %s193, 2944, %s195, %s184, 64, 64, 4
        $region32: #{tpu_custom_call.1} parent=27 // pred_fallthru
          _
      $region28: #{tpu_custom_call.1} parent=5 // pred_fallthru
        _
      %p201 = scmp.le.s32.totalorder 1, %s17
      %p202 = scmp.lt.s32.totalorder %s17, 3
      %p203 = pnand %p201, %p202
      %p204 = pneg %p203
      // Predicated region
      $region33: #{tpu_custom_call.1} parent=5 // pred_check
        _
      $region34: #{tpu_custom_call.1} parent=5 // pred_check_branch
        %206 = sbr.rel (%p203) target = $region36
      $region35: #{tpu_custom_call.1} parent=5 // pred_region
        %s207 = ssub.s32 %s17, 1
        %s208 = sand.u32 %s30, 1
        %s209 = scalar_lea.sflag [#allocation5], %s208
        %s210 = sand.u32 %s30, 1
        %s211 = smul.addr %s210, 184
        %s212 = scalar_lea.vmem [#allocation4], %s211
        // Predicated region
        $region37: #{tpu_custom_call.1} parent=35 // pred_check
          %p213 = pneg %p43
        $region38: #{tpu_custom_call.1} parent=35 // pred_check_branch
          %215 = sbr.rel (%p213) target = $region40
        $region39: #{tpu_custom_call.1} parent=35 // pred_region
          %216 = dma.done %s209, 2944
        $region40: #{tpu_custom_call.1} parent=35 // pred_fallthru
          _
        // Predicated region
        $region41: #{tpu_custom_call.1} parent=35 // pred_check
          %p217 = pneg %p64
        $region42: #{tpu_custom_call.1} parent=35 // pred_check_branch
          %219 = sbr.rel (%p217) target = $region44
        $region43: #{tpu_custom_call.1} parent=35 // pred_region
          %220 = dma.done [#allocation8], 1024
        $region44: #{tpu_custom_call.1} parent=35 // pred_fallthru
          _
        // Predicated region
        $region45: #{tpu_custom_call.1} parent=35 // pred_check
          %p221 = pneg %p85
        $region46: #{tpu_custom_call.1} parent=35 // pred_check_branch
          %223 = sbr.rel (%p221) target = $region48
        $region47: #{tpu_custom_call.1} parent=35 // pred_region
          %224 = dma.done [#allocation8], 9216
        $region48: #{tpu_custom_call.1} parent=35 // pred_fallthru
          _
        %s225 = sand.u32 %s30, 1
        %s226 = scalar_lea.sflag [#allocation5], %s225
        %s227 = sand.u32 %s30, 1
        %s228 = smul.addr %s227, 184
        %s229 = scalar_lea.vmem [#allocation4], %s228
        %p230 = pneg %p43
        %p231 = pneg %p40
        %p232 = pneg %p64
        %p233 = pneg %p61
        %p234 = pneg %p85
        %p235 = pneg %p82
        %p236 = pneg %p106
        %p237 = pneg %p103
        %p238 = pneg %p132
        %p239 = pneg %p129
        %s240 = sand.u32 %s119, 1
        %s241 = scalar_lea.sflag [#allocation6], %s240
        %s242 = sand.u32 %s119, 1
        %s243 = smul.addr %s242, 368
        %s244 = scalar_lea.vmem [#allocation10], %s243
        %v246 = vld [vmem:[%s3] sm:$0xf]
        %v247 = vlaneseq
        %v248 = vshrl.u32 %v247, 7
        %v249 = vadd.s32 %v248, 8
        %v250 = vadd.s32 %v248, 16
        %v251 = vadd.s32 %v248, 24
        %v252 = vadd.s32 %v248, 32
        %v253 = vadd.s32 %v248, 40
        %v254 = vadd.s32 %v248, 48
        %v255 = vadd.s32 %v248, 56
        %v256 = vadd.s32 %v248, 64
        %v257 = vadd.s32 %v248, 72
        %v258 = vadd.s32 %v248, 80
        %v259 = vadd.s32 %v248, 88
        %v260 = vadd.s32 %v248, 96
        %v261 = vadd.s32 %v248, 104
        %v262 = vadd.s32 %v248, 112
        %v263 = vadd.s32 %v248, 120
        %v264 = vadd.s32 %v248, 128
        %v265 = vadd.s32 %v248, 136
        %v266 = vadd.s32 %v248, 144
        %v267 = vadd.s32 %v248, 152
        %v268 = vadd.s32 %v248, 160
        %v269 = vadd.s32 %v248, 168
        %v270 = vadd.s32 %v248, 176
        %v271 = vadd.s32 %v248, 184
        %v272 = vadd.s32 %v248, 192
        %v273 = vadd.s32 %v248, 200
        %v274 = vadd.s32 %v248, 208
        %v275 = vadd.s32 %v248, 216
        %v276 = vadd.s32 %v248, 224
        %v277 = vadd.s32 %v248, 232
        %v278 = vadd.s32 %v248, 240
        %v279 = vadd.s32 %v248, 248
        %v280 = vadd.s32 %v248, 256
        %v281 = vadd.s32 %v248, 264
        %v282 = vadd.s32 %v248, 272
        %v283 = vadd.s32 %v248, 280
        %v284 = vadd.s32 %v248, 288
        %v285 = vadd.s32 %v248, 296
        %v286 = vadd.s32 %v248, 304
        %v287 = vadd.s32 %v248, 312
        %v288 = vadd.s32 %v248, 320
        %v289 = vadd.s32 %v248, 328
        %v290 = vadd.s32 %v248, 336
        %v291 = vadd.s32 %v248, 344
        %v292 = vadd.s32 %v248, 352
        %v293 = vadd.s32 %v248, 360
        %v294 = vcvt.s32.f32 %v248
        %v295 = vcvt.s32.f32 %v249
        %v296 = vcvt.s32.f32 %v250
        %v297 = vcvt.s32.f32 %v251
        %v298 = vcvt.s32.f32 %v252
        %v299 = vcvt.s32.f32 %v253
        %v300 = vcvt.s32.f32 %v254
        %v301 = vcvt.s32.f32 %v255
        %v302 = vcvt.s32.f32 %v256
        %v303 = vcvt.s32.f32 %v257
        %v304 = vcvt.s32.f32 %v258
        %v305 = vcvt.s32.f32 %v259
        %v306 = vcvt.s32.f32 %v260
        %v307 = vcvt.s32.f32 %v261
        %v308 = vcvt.s32.f32 %v262
        %v309 = vcvt.s32.f32 %v263
        %v310 = vcvt.s32.f32 %v264
        %v311 = vcvt.s32.f32 %v265
        %v312 = vcvt.s32.f32 %v266
        %v313 = vcvt.s32.f32 %v267
        %v314 = vcvt.s32.f32 %v268
        %v315 = vcvt.s32.f32 %v269
        %v316 = vcvt.s32.f32 %v270
        %v317 = vcvt.s32.f32 %v271
        %v318 = vcvt.s32.f32 %v272
        %v319 = vcvt.s32.f32 %v273
        %v320 = vcvt.s32.f32 %v274
        %v321 = vcvt.s32.f32 %v275
        %v322 = vcvt.s32.f32 %v276
        %v323 = vcvt.s32.f32 %v277
        %v324 = vcvt.s32.f32 %v278
        %v325 = vcvt.s32.f32 %v279
        %v326 = vcvt.s32.f32 %v280
        %v327 = vcvt.s32.f32 %v281
        %v328 = vcvt.s32.f32 %v282
        %v329 = vcvt.s32.f32 %v283
        %v330 = vcvt.s32.f32 %v284
        %v331 = vcvt.s32.f32 %v285
        %v332 = vcvt.s32.f32 %v286
        %v333 = vcvt.s32.f32 %v287
        %v334 = vcvt.s32.f32 %v288
        %v335 = vcvt.s32.f32 %v289
        %v336 = vcvt.s32.f32 %v290
        %v337 = vcvt.s32.f32 %v291
        %v338 = vcvt.s32.f32 %v292
        %v339 = vcvt.s32.f32 %v293
        %v340 = vadd.f32 %v294, 0.5
        %v341 = vadd.f32 %v295, 0.5
        %v342 = vadd.f32 %v296, 0.5
        %v343 = vadd.f32 %v297, 0.5
        %v344 = vadd.f32 %v298, 0.5
        %v345 = vadd.f32 %v299, 0.5
        %v346 = vadd.f32 %v300, 0.5
        %v347 = vadd.f32 %v301, 0.5
        %v348 = vadd.f32 %v302, 0.5
        %v349 = vadd.f32 %v303, 0.5
        %v350 = vadd.f32 %v304, 0.5
        %v351 = vadd.f32 %v305, 0.5
        %v352 = vadd.f32 %v306, 0.5
        %v353 = vadd.f32 %v307, 0.5
        %v354 = vadd.f32 %v308, 0.5
        %v355 = vadd.f32 %v309, 0.5
        %v356 = vadd.f32 %v310, 0.5
        %v357 = vadd.f32 %v311, 0.5
        %v358 = vadd.f32 %v312, 0.5
        %v359 = vadd.f32 %v313, 0.5
        %v360 = vadd.f32 %v314, 0.5
        %v361 = vadd.f32 %v315, 0.5
        %v362 = vadd.f32 %v316, 0.5
        %v363 = vadd.f32 %v317, 0.5
        %v364 = vadd.f32 %v318, 0.5
        %v365 = vadd.f32 %v319, 0.5
        %v366 = vadd.f32 %v320, 0.5
        %v367 = vadd.f32 %v321, 0.5
        %v368 = vadd.f32 %v322, 0.5
        %v369 = vadd.f32 %v323, 0.5
        %v370 = vadd.f32 %v324, 0.5
        %v371 = vadd.f32 %v325, 0.5
        %v372 = vadd.f32 %v326, 0.5
        %v373 = vadd.f32 %v327, 0.5
        %v374 = vadd.f32 %v328, 0.5
        %v375 = vadd.f32 %v329, 0.5
        %v376 = vadd.f32 %v330, 0.5
        %v377 = vadd.f32 %v331, 0.5
        %v378 = vadd.f32 %v332, 0.5
        %v379 = vadd.f32 %v333, 0.5
        %v380 = vadd.f32 %v334, 0.5
        %v381 = vadd.f32 %v335, 0.5
        %v382 = vadd.f32 %v336, 0.5
        %v383 = vadd.f32 %v337, 0.5
        %v384 = vadd.f32 %v338, 0.5
        %v385 = vadd.f32 %v339, 0.5
        %v386 = vmul.f32 %v340, 0.04347826
        %v387 = vmul.f32 %v341, 0.04347826
        %v388 = vmul.f32 %v342, 0.04347826
        %v389 = vmul.f32 %v343, 0.04347826
        %v390 = vmul.f32 %v344, 0.04347826
        %v391 = vmul.f32 %v345, 0.04347826
        %v392 = vmul.f32 %v346, 0.04347826
        %v393 = vmul.f32 %v347, 0.04347826
        %v394 = vmul.f32 %v348, 0.04347826
        %v395 = vmul.f32 %v349, 0.04347826
        %v396 = vmul.f32 %v350, 0.04347826
        %v397 = vmul.f32 %v351, 0.04347826
        %v398 = vmul.f32 %v352, 0.04347826
        %v399 = vmul.f32 %v353, 0.04347826
        %v400 = vmul.f32 %v354, 0.04347826
        %v401 = vmul.f32 %v355, 0.04347826
        %v402 = vmul.f32 %v356, 0.04347826
        %v403 = vmul.f32 %v357, 0.04347826
        %v404 = vmul.f32 %v358, 0.04347826
        %v405 = vmul.f32 %v359, 0.04347826
        %v406 = vmul.f32 %v360, 0.04347826
        %v407 = vmul.f32 %v361, 0.04347826
        %v408 = vmul.f32 %v362, 0.04347826
        %v409 = vmul.f32 %v363, 0.04347826
        %v410 = vmul.f32 %v364, 0.04347826
        %v411 = vmul.f32 %v365, 0.04347826
        %v412 = vmul.f32 %v366, 0.04347826
        %v413 = vmul.f32 %v367, 0.04347826
        %v414 = vmul.f32 %v368, 0.04347826
        %v415 = vmul.f32 %v369, 0.04347826
        %v416 = vmul.f32 %v370, 0.04347826
        %v417 = vmul.f32 %v371, 0.04347826
        %v418 = vmul.f32 %v372, 0.04347826
        %v419 = vmul.f32 %v373, 0.04347826
        %v420 = vmul.f32 %v374, 0.04347826
        %v421 = vmul.f32 %v375, 0.04347826
        %v422 = vmul.f32 %v376, 0.04347826
        %v423 = vmul.f32 %v377, 0.04347826
        %v424 = vmul.f32 %v378, 0.04347826
        %v425 = vmul.f32 %v379, 0.04347826
        %v426 = vmul.f32 %v380, 0.04347826
        %v427 = vmul.f32 %v381, 0.04347826
        %v428 = vmul.f32 %v382, 0.04347826
        %v429 = vmul.f32 %v383, 0.04347826
        %v430 = vmul.f32 %v384, 0.04347826
        %v431 = vmul.f32 %v385, 0.04347826
        %v432 = vfloor.f32 %v386
        %v433 = vfloor.f32 %v387
        %v434 = vfloor.f32 %v388
        %v435 = vfloor.f32 %v389
        %v436 = vfloor.f32 %v390
        %v437 = vfloor.f32 %v391
        %v438 = vfloor.f32 %v392
        %v439 = vfloor.f32 %v393
        %v440 = vfloor.f32 %v394
        %v441 = vfloor.f32 %v395
        %v442 = vfloor.f32 %v396
        %v443 = vfloor.f32 %v397
        %v444 = vfloor.f32 %v398
        %v445 = vfloor.f32 %v399
        %v446 = vfloor.f32 %v400
        %v447 = vfloor.f32 %v401
        %v448 = vfloor.f32 %v402
        %v449 = vfloor.f32 %v403
        %v450 = vfloor.f32 %v404
        %v451 = vfloor.f32 %v405
        %v452 = vfloor.f32 %v406
        %v453 = vfloor.f32 %v407
        %v454 = vfloor.f32 %v408
        %v455 = vfloor.f32 %v409
        %v456 = vfloor.f32 %v410
        %v457 = vfloor.f32 %v411
        %v458 = vfloor.f32 %v412
        %v459 = vfloor.f32 %v413
        %v460 = vfloor.f32 %v414
        %v461 = vfloor.f32 %v415
        %v462 = vfloor.f32 %v416
        %v463 = vfloor.f32 %v417
        %v464 = vfloor.f32 %v418
        %v465 = vfloor.f32 %v419
        %v466 = vfloor.f32 %v420
        %v467 = vfloor.f32 %v421
        %v468 = vfloor.f32 %v422
        %v469 = vfloor.f32 %v423
        %v470 = vfloor.f32 %v424
        %v471 = vfloor.f32 %v425
        %v472 = vfloor.f32 %v426
        %v473 = vfloor.f32 %v427
        %v474 = vfloor.f32 %v428
        %v475 = vfloor.f32 %v429
        %v476 = vfloor.f32 %v430
        %v477 = vfloor.f32 %v431
        %v478 = vmul.f32 %v432, 23.0
        %v479 = vmul.f32 %v433, 23.0
        %v480 = vmul.f32 %v434, 23.0
        %v481 = vmul.f32 %v435, 23.0
        %v482 = vmul.f32 %v436, 23.0
        %v483 = vmul.f32 %v437, 23.0
        %v484 = vmul.f32 %v438, 23.0
        %v485 = vmul.f32 %v439, 23.0
        %v486 = vmul.f32 %v440, 23.0
        %v487 = vmul.f32 %v441, 23.0
        %v488 = vmul.f32 %v442, 23.0
        %v489 = vmul.f32 %v443, 23.0
        %v490 = vmul.f32 %v444, 23.0
        %v491 = vmul.f32 %v445, 23.0
        %v492 = vmul.f32 %v446, 23.0
        %v493 = vmul.f32 %v447, 23.0
        %v494 = vmul.f32 %v448, 23.0
        %v495 = vmul.f32 %v449, 23.0
        %v496 = vmul.f32 %v450, 23.0
        %v497 = vmul.f32 %v451, 23.0
        %v498 = vmul.f32 %v452, 23.0
        %v499 = vmul.f32 %v453, 23.0
        %v500 = vmul.f32 %v454, 23.0
        %v501 = vmul.f32 %v455, 23.0
        %v502 = vmul.f32 %v456, 23.0
        %v503 = vmul.f32 %v457, 23.0
        %v504 = vmul.f32 %v458, 23.0
        %v505 = vmul.f32 %v459, 23.0
        %v506 = vmul.f32 %v460, 23.0
        %v507 = vmul.f32 %v461, 23.0
        %v508 = vmul.f32 %v462, 23.0
        %v509 = vmul.f32 %v463, 23.0
        %v510 = vmul.f32 %v464, 23.0
        %v511 = vmul.f32 %v465, 23.0
        %v512 = vmul.f32 %v466, 23.0
        %v513 = vmul.f32 %v467, 23.0
        %v514 = vmul.f32 %v468, 23.0
        %v515 = vmul.f32 %v469, 23.0
        %v516 = vmul.f32 %v470, 23.0
        %v517 = vmul.f32 %v471, 23.0
        %v518 = vmul.f32 %v472, 23.0
        %v519 = vmul.f32 %v473, 23.0
        %v520 = vmul.f32 %v474, 23.0
        %v521 = vmul.f32 %v475, 23.0
        %v522 = vmul.f32 %v476, 23.0
        %v523 = vmul.f32 %v477, 23.0
        %v524 = vsub.f32 %v294, %v478
        %v525 = vsub.f32 %v295, %v479
        %v526 = vsub.f32 %v296, %v480
        %v527 = vsub.f32 %v297, %v481
        %v528 = vsub.f32 %v298, %v482
        %v529 = vsub.f32 %v299, %v483
        %v530 = vsub.f32 %v300, %v484
        %v531 = vsub.f32 %v301, %v485
        %v532 = vsub.f32 %v302, %v486
        %v533 = vsub.f32 %v303, %v487
        %v534 = vsub.f32 %v304, %v488
        %v535 = vsub.f32 %v305, %v489
        %v536 = vsub.f32 %v306, %v490
        %v537 = vsub.f32 %v307, %v491
        %v538 = vsub.f32 %v308, %v492
        %v539 = vsub.f32 %v309, %v493
        %v540 = vsub.f32 %v310, %v494
        %v541 = vsub.f32 %v311, %v495
        %v542 = vsub.f32 %v312, %v496
        %v543 = vsub.f32 %v313, %v497
        %v544 = vsub.f32 %v314, %v498
        %v545 = vsub.f32 %v315, %v499
        %v546 = vsub.f32 %v316, %v500
        %v547 = vsub.f32 %v317, %v501
        %v548 = vsub.f32 %v318, %v502
        %v549 = vsub.f32 %v319, %v503
        %v550 = vsub.f32 %v320, %v504
        %v551 = vsub.f32 %v321, %v505
        %v552 = vsub.f32 %v322, %v506
        %v553 = vsub.f32 %v323, %v507
        %v554 = vsub.f32 %v324, %v508
        %v555 = vsub.f32 %v325, %v509
        %v556 = vsub.f32 %v326, %v510
        %v557 = vsub.f32 %v327, %v511
        %v558 = vsub.f32 %v328, %v512
        %v559 = vsub.f32 %v329, %v513
        %v560 = vsub.f32 %v330, %v514
        %v561 = vsub.f32 %v331, %v515
        %v562 = vsub.f32 %v332, %v516
        %v563 = vsub.f32 %v333, %v517
        %v564 = vsub.f32 %v334, %v518
        %v565 = vsub.f32 %v335, %v519
        %v566 = vsub.f32 %v336, %v520
        %v567 = vsub.f32 %v337, %v521
        %v568 = vsub.f32 %v338, %v522
        %v569 = vsub.f32 %v339, %v523
        %vm570 = vcmp.lt.f32.partialorder %v524, 15.5
        %vm571 = vcmp.lt.f32.partialorder %v525, 15.5
        %vm572 = vcmp.lt.f32.partialorder %v526, 15.5
        %vm573 = vcmp.lt.f32.partialorder %v527, 15.5
        %vm574 = vcmp.lt.f32.partialorder %v528, 15.5
        %vm575 = vcmp.lt.f32.partialorder %v529, 15.5
        %vm576 = vcmp.lt.f32.partialorder %v530, 15.5
        %vm577 = vcmp.lt.f32.partialorder %v531, 15.5
        %vm578 = vcmp.lt.f32.partialorder %v532, 15.5
        %vm579 = vcmp.lt.f32.partialorder %v533, 15.5
        %vm580 = vcmp.lt.f32.partialorder %v534, 15.5
        %vm581 = vcmp.lt.f32.partialorder %v535, 15.5
        %vm582 = vcmp.lt.f32.partialorder %v536, 15.5
        %vm583 = vcmp.lt.f32.partialorder %v537, 15.5
        %vm584 = vcmp.lt.f32.partialorder %v538, 15.5
        %vm585 = vcmp.lt.f32.partialorder %v539, 15.5
        %vm586 = vcmp.lt.f32.partialorder %v540, 15.5
        %vm587 = vcmp.lt.f32.partialorder %v541, 15.5
        %vm588 = vcmp.lt.f32.partialorder %v542, 15.5
        %vm589 = vcmp.lt.f32.partialorder %v543, 15.5
        %vm590 = vcmp.lt.f32.partialorder %v544, 15.5
        %vm591 = vcmp.lt.f32.partialorder %v545, 15.5
        %vm592 = vcmp.lt.f32.partialorder %v546, 15.5
        %vm593 = vcmp.lt.f32.partialorder %v547, 15.5
        %vm594 = vcmp.lt.f32.partialorder %v548, 15.5
        %vm595 = vcmp.lt.f32.partialorder %v549, 15.5
        %vm596 = vcmp.lt.f32.partialorder %v550, 15.5
        %vm597 = vcmp.lt.f32.partialorder %v551, 15.5
        %vm598 = vcmp.lt.f32.partialorder %v552, 15.5
        %vm599 = vcmp.lt.f32.partialorder %v553, 15.5
        %vm600 = vcmp.lt.f32.partialorder %v554, 15.5
        %vm601 = vcmp.lt.f32.partialorder %v555, 15.5
        %vm602 = vcmp.lt.f32.partialorder %v556, 15.5
        %vm603 = vcmp.lt.f32.partialorder %v557, 15.5
        %vm604 = vcmp.lt.f32.partialorder %v558, 15.5
        %vm605 = vcmp.lt.f32.partialorder %v559, 15.5
        %vm606 = vcmp.lt.f32.partialorder %v560, 15.5
        %vm607 = vcmp.lt.f32.partialorder %v561, 15.5
        %vm608 = vcmp.lt.f32.partialorder %v562, 15.5
        %vm609 = vcmp.lt.f32.partialorder %v563, 15.5
        %vm610 = vcmp.lt.f32.partialorder %v564, 15.5
        %vm611 = vcmp.lt.f32.partialorder %v565, 15.5
        %vm612 = vcmp.lt.f32.partialorder %v566, 15.5
        %vm613 = vcmp.lt.f32.partialorder %v567, 15.5
        %vm614 = vcmp.lt.f32.partialorder %v568, 15.5
        %vm615 = vcmp.lt.f32.partialorder %v569, 15.5
        %v616 = vld [vmem:[%s212] sm:$0xf]
        %v617 = vld [vmem:[%s212 + $0x4] sm:$0xf]
        %v618 = vld [vmem:[%s212 + $0x8] sm:$0xf]
        %v619 = vld [vmem:[%s212 + $0xc] sm:$0xf]
        %v620 = vld [vmem:[%s212 + $0x10] sm:$0xf]
        %v621 = vld [vmem:[%s212 + $0x14] sm:$0xf]
        %v622 = vld [vmem:[%s212 + $0x18] sm:$0xf]
        %v623 = vld [vmem:[%s212 + $0x1c] sm:$0xf]
        %v624 = vld [vmem:[%s212 + $0x20] sm:$0xf]
        %v625 = vld [vmem:[%s212 + $0x24] sm:$0xf]
        %v626 = vld [vmem:[%s212 + $0x28] sm:$0xf]
        %v627 = vld [vmem:[%s212 + $0x2c] sm:$0xf]
        %v628 = vld [vmem:[%s212 + $0x30] sm:$0xf]
        %v629 = vld [vmem:[%s212 + $0x34] sm:$0xf]
        %v630 = vld [vmem:[%s212 + $0x38] sm:$0xf]
        %v631 = vld [vmem:[%s212 + $0x3c] sm:$0xf]
        %v632 = vld [vmem:[%s212 + $0x40] sm:$0xf]
        %v633 = vld [vmem:[%s212 + $0x44] sm:$0xf]
        %v634 = vld [vmem:[%s212 + $0x48] sm:$0xf]
        %v635 = vld [vmem:[%s212 + $0x4c] sm:$0xf]
        %v636 = vld [vmem:[%s212 + $0x50] sm:$0xf]
        %v637 = vld [vmem:[%s212 + $0x54] sm:$0xf]
        %v638 = vld [vmem:[%s212 + $0x58] sm:$0xf]
        %v639 = vld [vmem:[%s212 + $0x5c] sm:$0xf]
        %v640 = vld [vmem:[%s212 + $0x60] sm:$0xf]
        %v641 = vld [vmem:[%s212 + $0x64] sm:$0xf]
        %v642 = vld [vmem:[%s212 + $0x68] sm:$0xf]
        %v643 = vld [vmem:[%s212 + $0x6c] sm:$0xf]
        %v644 = vld [vmem:[%s212 + $0x70] sm:$0xf]
        %v645 = vld [vmem:[%s212 + $0x74] sm:$0xf]
        %v646 = vld [vmem:[%s212 + $0x78] sm:$0xf]
        %v647 = vld [vmem:[%s212 + $0x7c] sm:$0xf]
        %v648 = vld [vmem:[%s212 + $0x80] sm:$0xf]
        %v649 = vld [vmem:[%s212 + $0x84] sm:$0xf]
        %v650 = vld [vmem:[%s212 + $0x88] sm:$0xf]
        %v651 = vld [vmem:[%s212 + $0x8c] sm:$0xf]
        %v652 = vld [vmem:[%s212 + $0x90] sm:$0xf]
        %v653 = vld [vmem:[%s212 + $0x94] sm:$0xf]
        %v654 = vld [vmem:[%s212 + $0x98] sm:$0xf]
        %v655 = vld [vmem:[%s212 + $0x9c] sm:$0xf]
        %v656 = vld [vmem:[%s212 + $0xa0] sm:$0xf]
        %v657 = vld [vmem:[%s212 + $0xa4] sm:$0xf]
        %v658 = vld [vmem:[%s212 + $0xa8] sm:$0xf]
        %v659 = vld [vmem:[%s212 + $0xac] sm:$0xf]
        %v660 = vld [vmem:[%s212 + $0xb0] sm:$0xf]
        %v661 = vld [vmem:[%s212 + $0xb4] sm:$0xf]
        %v662 = vld [vmem:[#allocation7] sm:$0xf]
        %v663 = vld [vmem:[#allocation7 + $0x4] sm:$0xf]
        %v664 = vld [vmem:[#allocation7 + $0x8] sm:$0xf]
        %v665 = vld [vmem:[#allocation7 + $0xc] sm:$0xf]
        %v666 = vld [vmem:[#allocation7 + $0x10] sm:$0xf]
        %v667 = vld [vmem:[#allocation7 + $0x14] sm:$0xf]
        %v668 = vld [vmem:[#allocation7 + $0x18] sm:$0xf]
        %v669 = vld [vmem:[#allocation7 + $0x1c] sm:$0xf]
        %v670 = vld [vmem:[#allocation7 + $0x20] sm:$0xf]
        %v671 = vld [vmem:[#allocation7 + $0x24] sm:$0xf]
        %v672 = vld [vmem:[#allocation7 + $0x28] sm:$0xf]
        %v673 = vld [vmem:[#allocation7 + $0x2c] sm:$0xf]
        %v674 = vld [vmem:[#allocation7 + $0x30] sm:$0xf]
        %v675 = vld [vmem:[#allocation7 + $0x34] sm:$0xf]
        %v676 = vld [vmem:[#allocation7 + $0x38] sm:$0xf]
        %v677 = vld [vmem:[#allocation7 + $0x3c] sm:$0xf]
        %v724 = vunpack.c.l.b16 %v616
        %v725 = vunpack.c.l.b16 %v617
        %v726 = vunpack.c.l.b16 %v618
        %v727 = vunpack.c.l.b16 %v619
        %v728 = vunpack.c.l.b16 %v620
        %v729 = vunpack.c.l.b16 %v621
        %v730 = vunpack.c.l.b16 %v622
        %v731 = vunpack.c.l.b16 %v623
        %v732 = vunpack.c.l.b16 %v624
        %v733 = vunpack.c.l.b16 %v625
        %v734 = vunpack.c.l.b16 %v626
        %v735 = vunpack.c.l.b16 %v627
        %v736 = vunpack.c.l.b16 %v628
        %v737 = vunpack.c.l.b16 %v629
        %v738 = vunpack.c.l.b16 %v630
        %v739 = vunpack.c.l.b16 %v631
        %v740 = vunpack.c.l.b16 %v632
        %v741 = vunpack.c.l.b16 %v633
        %v742 = vunpack.c.l.b16 %v634
        %v743 = vunpack.c.l.b16 %v635
        %v744 = vunpack.c.l.b16 %v636
        %v745 = vunpack.c.l.b16 %v637
        %v746 = vunpack.c.l.b16 %v638
        %v747 = vunpack.c.l.b16 %v639
        %v748 = vunpack.c.l.b16 %v640
        %v749 = vunpack.c.l.b16 %v641
        %v750 = vunpack.c.l.b16 %v642
        %v751 = vunpack.c.l.b16 %v643
        %v752 = vunpack.c.l.b16 %v644
        %v753 = vunpack.c.l.b16 %v645
        %v754 = vunpack.c.l.b16 %v646
        %v755 = vunpack.c.l.b16 %v647
        %v756 = vunpack.c.l.b16 %v648
        %v757 = vunpack.c.l.b16 %v649
        %v758 = vunpack.c.l.b16 %v650
        %v759 = vunpack.c.l.b16 %v651
        %v760 = vunpack.c.l.b16 %v652
        %v761 = vunpack.c.l.b16 %v653
        %v762 = vunpack.c.l.b16 %v654
        %v763 = vunpack.c.l.b16 %v655
        %v764 = vunpack.c.l.b16 %v656
        %v765 = vunpack.c.l.b16 %v657
        %v766 = vunpack.c.l.b16 %v658
        %v767 = vunpack.c.l.b16 %v659
        %v768 = vunpack.c.l.b16 %v660
        %v769 = vunpack.c.l.b16 %v661
        %v770 = vpack.c.b16 %v725, %v724
        %v771 = vpack.c.b16 %v727, %v726
        %v772 = vpack.c.b16 %v729, %v728
        %v773 = vpack.c.b16 %v731, %v730
        %v774 = vpack.c.b16 %v733, %v732
        %v775 = vpack.c.b16 %v735, %v734
        %v776 = vpack.c.b16 %v737, %v736
        %v777 = vpack.c.b16 %v739, %v738
        %v778 = vpack.c.b16 %v741, %v740
        %v779 = vpack.c.b16 %v743, %v742
        %v780 = vpack.c.b16 %v745, %v744
        %v781 = vpack.c.b16 %v747, %v746
        %v782 = vpack.c.b16 %v749, %v748
        %v783 = vpack.c.b16 %v751, %v750
        %v784 = vpack.c.b16 %v753, %v752
        %v785 = vpack.c.b16 %v755, %v754
        %v786 = vpack.c.b16 %v757, %v756
        %v787 = vpack.c.b16 %v759, %v758
        %v788 = vpack.c.b16 %v761, %v760
        %v789 = vpack.c.b16 %v763, %v762
        %v790 = vpack.c.b16 %v765, %v764
        %v791 = vpack.c.b16 %v767, %v766
        %v792 = vpack.c.b16 %v769, %v768
        %v832 = vunpack.c.l.b16 %v662
        %v833 = vunpack.c.l.b16 %v663
        %v834 = vunpack.c.l.b16 %v664
        %v835 = vunpack.c.l.b16 %v665
        %v836 = vunpack.c.l.b16 %v666
        %v837 = vunpack.c.l.b16 %v667
        %v838 = vunpack.c.l.b16 %v668
        %v839 = vunpack.c.l.b16 %v669
        %v840 = vunpack.c.l.b16 %v670
        %v841 = vunpack.c.l.b16 %v671
        %v842 = vunpack.c.l.b16 %v672
        %v843 = vunpack.c.l.b16 %v673
        %v844 = vunpack.c.l.b16 %v674
        %v845 = vunpack.c.l.b16 %v675
        %v846 = vunpack.c.l.b16 %v676
        %v847 = vunpack.c.l.b16 %v677
        %v848 = vpack.c.b16 %v833, %v832
        %v849 = vpack.c.b16 %v835, %v834
        %v850 = vpack.c.b16 %v837, %v836
        %v851 = vpack.c.b16 %v839, %v838
        %v852 = vpack.c.b16 %v841, %v840
        %v853 = vpack.c.b16 %v843, %v842
        %v854 = vpack.c.b16 %v845, %v844
        %v855 = vpack.c.b16 %v847, %v846
        %864 = vmatprep.subr.bf16.mxu0 0
        %865 = vmatpush1.bf16.msra.mxu0 %v848
        %866 = vmatprep.subr.bf16.mxu0 0
        %867 = vmatpush1.bf16.msra.mxu0 %v849
        %868 = vmatprep.subr.bf16.mxu0 0
        %869 = vmatpush1.bf16.msra.mxu0 %v850
        %870 = vmatprep.subr.bf16.mxu0 0
        %871 = vmatpush1.bf16.msra.mxu0 %v851
        %872 = vmatprep.subr.bf16.mxu0 0
        %873 = vmatpush1.bf16.msra.mxu0 %v852
        %874 = vmatprep.subr.bf16.mxu0 0
        %875 = vmatpush1.bf16.msra.mxu0 %v853
        %876 = vmatprep.subr.bf16.mxu0 0
        %877 = vmatpush1.bf16.msra.mxu0 %v854
        %878 = vmatprep.subr.bf16.mxu0 0
        %879 = vmatpush1.bf16.msra.mxu0 %v855
        %880 = vmatprep.subr.bf16.mxu0 0
        %881 = vmatpush1.bf16.msra.mxu0 0
        %882 = vmatprep.subr.bf16.mxu0 0
        %883 = vmatpush1.bf16.msra.mxu0 0
        %884 = vmatprep.subr.bf16.mxu0 0
        %885 = vmatpush1.bf16.msra.mxu0 0
        %886 = vmatprep.subr.bf16.mxu0 0
        %887 = vmatpush1.bf16.msra.mxu0 0
        %888 = vmatprep.subr.bf16.mxu0 0
        %889 = vmatpush1.bf16.msra.mxu0 0
        %890 = vmatprep.subr.bf16.mxu0 0
        %891 = vmatpush1.bf16.msra.mxu0 0
        %892 = vmatprep.subr.bf16.mxu0 0
        %893 = vmatpush1.bf16.msra.mxu0 0
        %894 = vmatprep.subr.bf16.mxu0 0
        %895 = vmatpush1.bf16.msra.mxu0 0
        %896 = vmatprep.mubr.bf16.mxu0 0
        %897 = vmatmul.mubr.bf16.gmra.mrb[0].mxu0 %v770
        %v898 = vpop.f32.mrb[0].mxu0
        %v899 = vadd.f32 0.0, %v898
        %v900 = vpop.f32.mrb[0].mxu0
        %v901 = vpop.f32.mrb[0].mxu0
        %v902 = vadd.f32 0.0, %v901
        %v903 = vpop.f32.mrb[0].mxu0
        %904 = vmatprep.mubr.bf16.mxu0 0
        %905 = vmatmul.mubr.bf16.gmra.mrb[0].mxu0 %v771
        %v906 = vpop.f32.mrb[0].mxu0
        %v907 = vadd.f32 0.0, %v906
        %v908 = vpop.f32.mrb[0].mxu0
        %v909 = vpop.f32.mrb[0].mxu0
        %v910 = vadd.f32 0.0, %v909
        %v911 = vpop.f32.mrb[0].mxu0
        %912 = vmatprep.mubr.bf16.mxu0 0
        %913 = vmatmul.mubr.bf16.gmra.mrb[0].mxu0 %v772
        %v914 = vpop.f32.mrb[0].mxu0
        %v915 = vadd.f32 0.0, %v914
        %v916 = vpop.f32.mrb[0].mxu0
        %v917 = vpop.f32.mrb[0].mxu0
        %v918 = vadd.f32 0.0, %v917
        %v919 = vpop.f32.mrb[0].mxu0
        %920 = vmatprep.mubr.bf16.mxu0 0
        %921 = vmatmul.mubr.bf16.gmra.mrb[0].mxu0 %v773
        %v922 = vpop.f32.mrb[0].mxu0
        %v923 = vadd.f32 0.0, %v922
        %v924 = vpop.f32.mrb[0].mxu0
        %v925 = vpop.f32.mrb[0].mxu0
        %v926 = vadd.f32 0.0, %v925
        %v927 = vpop.f32.mrb[0].mxu0
        %928 = vmatprep.mubr.bf16.mxu0 0
        %929 = vmatmul.mubr.bf16.gmra.mrb[0].mxu0 %v774
        %v930 = vpop.f32.mrb[0].mxu0
        %v931 = vadd.f32 0.0, %v930
        %v932 = vpop.f32.mrb[0].mxu0
        %v933 = vpop.f32.mrb[0].mxu0
        %v934 = vadd.f32 0.0, %v933
        %v935 = vpop.f32.mrb[0].mxu0
        %936 = vmatprep.mubr.bf16.mxu0 0
        %937 = vmatmul.mubr.bf16.gmra.mrb[0].mxu0 %v775
        %v938 = vpop.f32.mrb[0].mxu0
        %v939 = vadd.f32 0.0, %v938
        %v940 = vpop.f32.mrb[0].mxu0
        %v941 = vpop.f32.mrb[0].mxu0
        %v942 = vadd.f32 0.0, %v941
        %v943 = vpop.f32.mrb[0].mxu0
        %944 = vmatprep.mubr.bf16.mxu0 0
        %945 = vmatmul.mubr.bf16.gmra.mrb[0].mxu0 %v776
        %v946 = vpop.f32.mrb[0].mxu0
        %v947 = vadd.f32 0.0, %v946
        %v948 = vpop.f32.mrb[0].mxu0
        %v949 = vpop.f32.mrb[0].mxu0
        %v950 = vadd.f32 0.0, %v949
        %v951 = vpop.f32.mrb[0].mxu0
        %952 = vmatprep.mubr.bf16.mxu0 0
        %953 = vmatmul.mubr.bf16.gmra.mrb[0].mxu0 %v777
        %v954 = vpop.f32.mrb[0].mxu0
        %v955 = vadd.f32 0.0, %v954
        %v956 = vpop.f32.mrb[0].mxu0
        %v957 = vpop.f32.mrb[0].mxu0
        %v958 = vadd.f32 0.0, %v957
        %v959 = vpop.f32.mrb[0].mxu0
        %960 = vmatprep.mubr.bf16.mxu0 0
        %961 = vmatmul.mubr.bf16.gmra.mrb[0].mxu0 %v778
        %v962 = vpop.f32.mrb[0].mxu0
        %v963 = vadd.f32 0.0, %v962
        %v964 = vpop.f32.mrb[0].mxu0
        %v965 = vpop.f32.mrb[0].mxu0
        %v966 = vadd.f32 0.0, %v965
        %v967 = vpop.f32.mrb[0].mxu0
        %968 = vmatprep.mubr.bf16.mxu0 0
        %969 = vmatmul.mubr.bf16.gmra.mrb[0].mxu0 %v779
        %v970 = vpop.f32.mrb[0].mxu0
        %v971 = vadd.f32 0.0, %v970
        %v972 = vpop.f32.mrb[0].mxu0
        %v973 = vpop.f32.mrb[0].mxu0
        %v974 = vadd.f32 0.0, %v973
        %v975 = vpop.f32.mrb[0].mxu0
        %976 = vmatprep.mubr.bf16.mxu0 0
        %977 = vmatmul.mubr.bf16.gmra.mrb[0].mxu0 %v780
        %v978 = vpop.f32.mrb[0].mxu0
        %v979 = vadd.f32 0.0, %v978
        %v980 = vpop.f32.mrb[0].mxu0
        %v981 = vpop.f32.mrb[0].mxu0
        %v982 = vadd.f32 0.0, %v981
        %v983 = vpop.f32.mrb[0].mxu0
        %984 = vmatprep.mubr.bf16.mxu0 0
        %985 = vmatmul.mubr.bf16.gmra.mrb[0].mxu0 %v781
        %v986 = vpop.f32.mrb[0].mxu0
        %v987 = vadd.f32 0.0, %v986
        %v988 = vpop.f32.mrb[0].mxu0
        %v989 = vpop.f32.mrb[0].mxu0
        %v990 = vadd.f32 0.0, %v989
        %v991 = vpop.f32.mrb[0].mxu0
        %992 = vmatprep.mubr.bf16.mxu0 0
        %993 = vmatmul.mubr.bf16.gmra.mrb[0].mxu0 %v782
        %v994 = vpop.f32.mrb[0].mxu0
        %v995 = vadd.f32 0.0, %v994
        %v996 = vpop.f32.mrb[0].mxu0
        %v997 = vpop.f32.mrb[0].mxu0
        %v998 = vadd.f32 0.0, %v997
        %v999 = vpop.f32.mrb[0].mxu0
        %1000 = vmatprep.mubr.bf16.mxu0 0
        %1001 = vmatmul.mubr.bf16.gmra.mrb[0].mxu0 %v783
        %v1002 = vpop.f32.mrb[0].mxu0
        %v1003 = vadd.f32 0.0, %v1002
        %v1004 = vpop.f32.mrb[0].mxu0
        %v1005 = vpop.f32.mrb[0].mxu0
        %v1006 = vadd.f32 0.0, %v1005
        %v1007 = vpop.f32.mrb[0].mxu0
        %1008 = vmatprep.mubr.bf16.mxu0 0
        %1009 = vmatmul.mubr.bf16.gmra.mrb[0].mxu0 %v784
        %v1010 = vpop.f32.mrb[0].mxu0
        %v1011 = vadd.f32 0.0, %v1010
        %v1012 = vpop.f32.mrb[0].mxu0
        %v1013 = vpop.f32.mrb[0].mxu0
        %v1014 = vadd.f32 0.0, %v1013
        %v1015 = vpop.f32.mrb[0].mxu0
        %1016 = vmatprep.mubr.bf16.mxu0 0
        %1017 = vmatmul.mubr.bf16.gmra.mrb[0].mxu0 %v785
        %v1018 = vpop.f32.mrb[0].mxu0
        %v1019 = vadd.f32 0.0, %v1018
        %v1020 = vpop.f32.mrb[0].mxu0
        %v1021 = vpop.f32.mrb[0].mxu0
        %v1022 = vadd.f32 0.0, %v1021
        %v1023 = vpop.f32.mrb[0].mxu0
        %1024 = vmatprep.mubr.bf16.mxu0 0
        %1025 = vmatmul.mubr.bf16.gmra.mrb[0].mxu0 %v786
        %v1026 = vpop.f32.mrb[0].mxu0
        %v1027 = vadd.f32 0.0, %v1026
        %v1028 = vpop.f32.mrb[0].mxu0
        %v1029 = vpop.f32.mrb[0].mxu0
        %v1030 = vadd.f32 0.0, %v1029
        %v1031 = vpop.f32.mrb[0].mxu0
        %1032 = vmatprep.mubr.bf16.mxu0 0
        %1033 = vmatmul.mubr.bf16.gmra.mrb[0].mxu0 %v787
        %v1034 = vpop.f32.mrb[0].mxu0
        %v1035 = vadd.f32 0.0, %v1034
        %v1036 = vpop.f32.mrb[0].mxu0
        %v1037 = vpop.f32.mrb[0].mxu0
        %v1038 = vadd.f32 0.0, %v1037
        %v1039 = vpop.f32.mrb[0].mxu0
        %1040 = vmatprep.mubr.bf16.mxu0 0
        %1041 = vmatmul.mubr.bf16.gmra.mrb[0].mxu0 %v788
        %v1042 = vpop.f32.mrb[0].mxu0
        %v1043 = vadd.f32 0.0, %v1042
        %v1044 = vpop.f32.mrb[0].mxu0
        %v1045 = vpop.f32.mrb[0].mxu0
        %v1046 = vadd.f32 0.0, %v1045
        %v1047 = vpop.f32.mrb[0].mxu0
        %1048 = vmatprep.mubr.bf16.mxu0 0
        %1049 = vmatmul.mubr.bf16.gmra.mrb[0].mxu0 %v789
        %v1050 = vpop.f32.mrb[0].mxu0
        %v1051 = vadd.f32 0.0, %v1050
        %v1052 = vpop.f32.mrb[0].mxu0
        %v1053 = vpop.f32.mrb[0].mxu0
        %v1054 = vadd.f32 0.0, %v1053
        %v1055 = vpop.f32.mrb[0].mxu0
        %1056 = vmatprep.mubr.bf16.mxu0 0
        %1057 = vmatmul.mubr.bf16.gmra.mrb[0].mxu0 %v790
        %v1058 = vpop.f32.mrb[0].mxu0
        %v1059 = vadd.f32 0.0, %v1058
        %v1060 = vpop.f32.mrb[0].mxu0
        %v1061 = vpop.f32.mrb[0].mxu0
        %v1062 = vadd.f32 0.0, %v1061
        %v1063 = vpop.f32.mrb[0].mxu0
        %1064 = vmatprep.mubr.bf16.mxu0 0
        %1065 = vmatmul.mubr.bf16.gmra.mrb[0].mxu0 %v791
        %v1066 = vpop.f32.mrb[0].mxu0
        %v1067 = vadd.f32 0.0, %v1066
        %v1068 = vpop.f32.mrb[0].mxu0
        %v1069 = vpop.f32.mrb[0].mxu0
        %v1070 = vadd.f32 0.0, %v1069
        %v1071 = vpop.f32.mrb[0].mxu0
        %1072 = vmatprep.mubr.bf16.mxu0 0
        %1073 = vmatmul.mubr.bf16.gmra.mrb[0].mxu0 %v792
        %v1074 = vpop.f32.mrb[0].mxu0
        %v1075 = vadd.f32 0.0, %v1074
        %v1076 = vpop.f32.mrb[0].mxu0
        %v1077 = vpop.f32.mrb[0].mxu0
        %v1078 = vadd.f32 0.0, %v1077
        %v1079 = vpop.f32.mrb[0].mxu0
        %1080 = vdwg.mxu0
        %v1081 = vlaneseq
        %v1082 = vshrl.u32 %v1081, 7
        %v1083 = vsub.s32 0, %v1082
        %v1084 = vrot.slane %v246, %v1083
        %v1085 = vmul.f32 %v899, %v1084
        %v1086 = vmul.f32 %v902, %v1084
        %v1087 = vmul.f32 %v907, %v1084
        %v1088 = vmul.f32 %v910, %v1084
        %v1089 = vmul.f32 %v915, %v1084
        %v1090 = vmul.f32 %v918, %v1084
        %v1091 = vmul.f32 %v923, %v1084
        %v1092 = vmul.f32 %v926, %v1084
        %v1093 = vmul.f32 %v931, %v1084
        %v1094 = vmul.f32 %v934, %v1084
        %v1095 = vmul.f32 %v939, %v1084
        %v1096 = vmul.f32 %v942, %v1084
        %v1097 = vmul.f32 %v947, %v1084
        %v1098 = vmul.f32 %v950, %v1084
        %v1099 = vmul.f32 %v955, %v1084
        %v1100 = vmul.f32 %v958, %v1084
        %v1101 = vmul.f32 %v963, %v1084
        %v1102 = vmul.f32 %v966, %v1084
        %v1103 = vmul.f32 %v971, %v1084
        %v1104 = vmul.f32 %v974, %v1084
        %v1105 = vmul.f32 %v979, %v1084
        %v1106 = vmul.f32 %v982, %v1084
        %v1107 = vmul.f32 %v987, %v1084
        %v1108 = vmul.f32 %v990, %v1084
        %v1109 = vmul.f32 %v995, %v1084
        %v1110 = vmul.f32 %v998, %v1084
        %v1111 = vmul.f32 %v1003, %v1084
        %v1112 = vmul.f32 %v1006, %v1084
        %v1113 = vmul.f32 %v1011, %v1084
        %v1114 = vmul.f32 %v1014, %v1084
        %v1115 = vmul.f32 %v1019, %v1084
        %v1116 = vmul.f32 %v1022, %v1084
        %v1117 = vmul.f32 %v1027, %v1084
        %v1118 = vmul.f32 %v1030, %v1084
        %v1119 = vmul.f32 %v1035, %v1084
        %v1120 = vmul.f32 %v1038, %v1084
        %v1121 = vmul.f32 %v1043, %v1084
        %v1122 = vmul.f32 %v1046, %v1084
        %v1123 = vmul.f32 %v1051, %v1084
        %v1124 = vmul.f32 %v1054, %v1084
        %v1125 = vmul.f32 %v1059, %v1084
        %v1126 = vmul.f32 %v1062, %v1084
        %v1127 = vmul.f32 %v1067, %v1084
        %v1128 = vmul.f32 %v1070, %v1084
        %v1129 = vmul.f32 %v1075, %v1084
        %v1130 = vmul.f32 %v1078, %v1084
        %v1131 = vlaneseq
        %v1132 = vshrl.u32 %v1131, 7
        %v1133 = vsub.s32 1, %v1132
        %v1134 = vrot.slane %v246, %v1133
        %v1135 = vadd.f32 %v1085, %v1134
        %v1136 = vadd.f32 %v1086, %v1134
        %v1137 = vadd.f32 %v1087, %v1134
        %v1138 = vadd.f32 %v1088, %v1134
        %v1139 = vadd.f32 %v1089, %v1134
        %v1140 = vadd.f32 %v1090, %v1134
        %v1141 = vadd.f32 %v1091, %v1134
        %v1142 = vadd.f32 %v1092, %v1134
        %v1143 = vadd.f32 %v1093, %v1134
        %v1144 = vadd.f32 %v1094, %v1134
        %v1145 = vadd.f32 %v1095, %v1134
        %v1146 = vadd.f32 %v1096, %v1134
        %v1147 = vadd.f32 %v1097, %v1134
        %v1148 = vadd.f32 %v1098, %v1134
        %v1149 = vadd.f32 %v1099, %v1134
        %v1150 = vadd.f32 %v1100, %v1134
        %v1151 = vadd.f32 %v1101, %v1134
        %v1152 = vadd.f32 %v1102, %v1134
        %v1153 = vadd.f32 %v1103, %v1134
        %v1154 = vadd.f32 %v1104, %v1134
        %v1155 = vadd.f32 %v1105, %v1134
        %v1156 = vadd.f32 %v1106, %v1134
        %v1157 = vadd.f32 %v1107, %v1134
        %v1158 = vadd.f32 %v1108, %v1134
        %v1159 = vadd.f32 %v1109, %v1134
        %v1160 = vadd.f32 %v1110, %v1134
        %v1161 = vadd.f32 %v1111, %v1134
        %v1162 = vadd.f32 %v1112, %v1134
        %v1163 = vadd.f32 %v1113, %v1134
        %v1164 = vadd.f32 %v1114, %v1134
        %v1165 = vadd.f32 %v1115, %v1134
        %v1166 = vadd.f32 %v1116, %v1134
        %v1167 = vadd.f32 %v1117, %v1134
        %v1168 = vadd.f32 %v1118, %v1134
        %v1169 = vadd.f32 %v1119, %v1134
        %v1170 = vadd.f32 %v1120, %v1134
        %v1171 = vadd.f32 %v1121, %v1134
        %v1172 = vadd.f32 %v1122, %v1134
        %v1173 = vadd.f32 %v1123, %v1134
        %v1174 = vadd.f32 %v1124, %v1134
        %v1175 = vadd.f32 %v1125, %v1134
        %v1176 = vadd.f32 %v1126, %v1134
        %v1177 = vadd.f32 %v1127, %v1134
        %v1178 = vadd.f32 %v1128, %v1134
        %v1179 = vadd.f32 %v1129, %v1134
        %v1180 = vadd.f32 %v1130, %v1134
        %v1181 = vmax.f32 %v1135, 0.0
        %v1182 = vmax.f32 %v1136, 0.0
        %v1183 = vmax.f32 %v1137, 0.0
        %v1184 = vmax.f32 %v1138, 0.0
        %v1185 = vmax.f32 %v1139, 0.0
        %v1186 = vmax.f32 %v1140, 0.0
        %v1187 = vmax.f32 %v1141, 0.0
        %v1188 = vmax.f32 %v1142, 0.0
        %v1189 = vmax.f32 %v1143, 0.0
        %v1190 = vmax.f32 %v1144, 0.0
        %v1191 = vmax.f32 %v1145, 0.0
        %v1192 = vmax.f32 %v1146, 0.0
        %v1193 = vmax.f32 %v1147, 0.0
        %v1194 = vmax.f32 %v1148, 0.0
        %v1195 = vmax.f32 %v1149, 0.0
        %v1196 = vmax.f32 %v1150, 0.0
        %v1197 = vmax.f32 %v1151, 0.0
        %v1198 = vmax.f32 %v1152, 0.0
        %v1199 = vmax.f32 %v1153, 0.0
        %v1200 = vmax.f32 %v1154, 0.0
        %v1201 = vmax.f32 %v1155, 0.0
        %v1202 = vmax.f32 %v1156, 0.0
        %v1203 = vmax.f32 %v1157, 0.0
        %v1204 = vmax.f32 %v1158, 0.0
        %v1205 = vmax.f32 %v1159, 0.0
        %v1206 = vmax.f32 %v1160, 0.0
        %v1207 = vmax.f32 %v1161, 0.0
        %v1208 = vmax.f32 %v1162, 0.0
        %v1209 = vmax.f32 %v1163, 0.0
        %v1210 = vmax.f32 %v1164, 0.0
        %v1211 = vmax.f32 %v1165, 0.0
        %v1212 = vmax.f32 %v1166, 0.0
        %v1213 = vmax.f32 %v1167, 0.0
        %v1214 = vmax.f32 %v1168, 0.0
        %v1215 = vmax.f32 %v1169, 0.0
        %v1216 = vmax.f32 %v1170, 0.0
        %v1217 = vmax.f32 %v1171, 0.0
        %v1218 = vmax.f32 %v1172, 0.0
        %v1219 = vmax.f32 %v1173, 0.0
        %v1220 = vmax.f32 %v1174, 0.0
        %v1221 = vmax.f32 %v1175, 0.0
        %v1222 = vmax.f32 %v1176, 0.0
        %v1223 = vmax.f32 %v1177, 0.0
        %v1224 = vmax.f32 %v1178, 0.0
        %v1225 = vmax.f32 %v1179, 0.0
        %v1226 = vmax.f32 %v1180, 0.0
        %v1227 = vsel %vm570, %v1181, 0.0
        %v1228 = vsel %vm571, %v1182, 0.0
        %v1229 = vsel %vm572, %v1183, 0.0
        %v1230 = vsel %vm573, %v1184, 0.0
        %v1231 = vsel %vm574, %v1185, 0.0
        %v1232 = vsel %vm575, %v1186, 0.0
        %v1233 = vsel %vm576, %v1187, 0.0
        %v1234 = vsel %vm577, %v1188, 0.0
        %v1235 = vsel %vm578, %v1189, 0.0
        %v1236 = vsel %vm579, %v1190, 0.0
        %v1237 = vsel %vm580, %v1191, 0.0
        %v1238 = vsel %vm581, %v1192, 0.0
        %v1239 = vsel %vm582, %v1193, 0.0
        %v1240 = vsel %vm583, %v1194, 0.0
        %v1241 = vsel %vm584, %v1195, 0.0
        %v1242 = vsel %vm585, %v1196, 0.0
        %v1243 = vsel %vm586, %v1197, 0.0
        %v1244 = vsel %vm587, %v1198, 0.0
        %v1245 = vsel %vm588, %v1199, 0.0
        %v1246 = vsel %vm589, %v1200, 0.0
        %v1247 = vsel %vm590, %v1201, 0.0
        %v1248 = vsel %vm591, %v1202, 0.0
        %v1249 = vsel %vm592, %v1203, 0.0
        %v1250 = vsel %vm593, %v1204, 0.0
        %v1251 = vsel %vm594, %v1205, 0.0
        %v1252 = vsel %vm595, %v1206, 0.0
        %v1253 = vsel %vm596, %v1207, 0.0
        %v1254 = vsel %vm597, %v1208, 0.0
        %v1255 = vsel %vm598, %v1209, 0.0
        %v1256 = vsel %vm599, %v1210, 0.0
        %v1257 = vsel %vm600, %v1211, 0.0
        %v1258 = vsel %vm601, %v1212, 0.0
        %v1259 = vsel %vm602, %v1213, 0.0
        %v1260 = vsel %vm603, %v1214, 0.0
        %v1261 = vsel %vm604, %v1215, 0.0
        %v1262 = vsel %vm605, %v1216, 0.0
        %v1263 = vsel %vm606, %v1217, 0.0
        %v1264 = vsel %vm607, %v1218, 0.0
        %v1265 = vsel %vm608, %v1219, 0.0
        %v1266 = vsel %vm609, %v1220, 0.0
        %v1267 = vsel %vm610, %v1221, 0.0
        %v1268 = vsel %vm611, %v1222, 0.0
        %v1269 = vsel %vm612, %v1223, 0.0
        %v1270 = vsel %vm613, %v1224, 0.0
        %v1271 = vsel %vm614, %v1225, 0.0
        %v1272 = vsel %vm615, %v1226, 0.0
        %1273 = vst [vmem:[#allocation2] sm:$0xff] 0.0
        %1274 = vst [vmem:[#allocation2 + $0x8] sm:$0xff] 0.0
        %1275 = vst [vmem:[#allocation2 + $0x10] sm:$0xff] 0.0
        %1276 = vst [vmem:[#allocation2 + $0x188] sm:$0xff] 0.0
        %1277 = vst [vmem:[#allocation2 + $0x190] sm:$0xff] 0.0
        %1278 = vst [vmem:[#allocation2 + $0x198] sm:$0xff] 0.0
        %1279 = vst [vmem:[#allocation2 + $0x18] sm:$0xff] %v1227
        %1280 = vst [vmem:[#allocation2 + $0x20] sm:$0xff] %v1228
        %1281 = vst [vmem:[#allocation2 + $0x28] sm:$0xff] %v1229
        %1282 = vst [vmem:[#allocation2 + $0x30] sm:$0xff] %v1230
        %1283 = vst [vmem:[#allocation2 + $0x38] sm:$0xff] %v1231
        %1284 = vst [vmem:[#allocation2 + $0x40] sm:$0xff] %v1232
        %1285 = vst [vmem:[#allocation2 + $0x48] sm:$0xff] %v1233
        %1286 = vst [vmem:[#allocation2 + $0x50] sm:$0xff] %v1234
        %1287 = vst [vmem:[#allocation2 + $0x58] sm:$0xff] %v1235
        %1288 = vst [vmem:[#allocation2 + $0x60] sm:$0xff] %v1236
        %1289 = vst [vmem:[#allocation2 + $0x68] sm:$0xff] %v1237
        %1290 = vst [vmem:[#allocation2 + $0x70] sm:$0xff] %v1238
        %1291 = vst [vmem:[#allocation2 + $0x78] sm:$0xff] %v1239
        %1292 = vst [vmem:[#allocation2 + $0x80] sm:$0xff] %v1240
        %1293 = vst [vmem:[#allocation2 + $0x88] sm:$0xff] %v1241
        %1294 = vst [vmem:[#allocation2 + $0x90] sm:$0xff] %v1242
        %1295 = vst [vmem:[#allocation2 + $0x98] sm:$0xff] %v1243
        %1296 = vst [vmem:[#allocation2 + $0xa0] sm:$0xff] %v1244
        %1297 = vst [vmem:[#allocation2 + $0xa8] sm:$0xff] %v1245
        %1298 = vst [vmem:[#allocation2 + $0xb0] sm:$0xff] %v1246
        %1299 = vst [vmem:[#allocation2 + $0xb8] sm:$0xff] %v1247
        %1300 = vst [vmem:[#allocation2 + $0xc0] sm:$0xff] %v1248
        %1301 = vst [vmem:[#allocation2 + $0xc8] sm:$0xff] %v1249
        %1302 = vst [vmem:[#allocation2 + $0xd0] sm:$0xff] %v1250
        %1303 = vst [vmem:[#allocation2 + $0xd8] sm:$0xff] %v1251
        %1304 = vst [vmem:[#allocation2 + $0xe0] sm:$0xff] %v1252
        %1305 = vst [vmem:[#allocation2 + $0xe8] sm:$0xff] %v1253
        %1306 = vst [vmem:[#allocation2 + $0xf0] sm:$0xff] %v1254
        %1307 = vst [vmem:[#allocation2 + $0xf8] sm:$0xff] %v1255
        %1308 = vst [vmem:[#allocation2 + $0x100] sm:$0xff] %v1256
        %1309 = vst [vmem:[#allocation2 + $0x108] sm:$0xff] %v1257
        %1310 = vst [vmem:[#allocation2 + $0x110] sm:$0xff] %v1258
        %1311 = vst [vmem:[#allocation2 + $0x118] sm:$0xff] %v1259
        %1312 = vst [vmem:[#allocation2 + $0x120] sm:$0xff] %v1260
        %1313 = vst [vmem:[#allocation2 + $0x128] sm:$0xff] %v1261
        %1314 = vst [vmem:[#allocation2 + $0x130] sm:$0xff] %v1262
        %1315 = vst [vmem:[#allocation2 + $0x138] sm:$0xff] %v1263
        %1316 = vst [vmem:[#allocation2 + $0x140] sm:$0xff] %v1264
        %1317 = vst [vmem:[#allocation2 + $0x148] sm:$0xff] %v1265
        %1318 = vst [vmem:[#allocation2 + $0x150] sm:$0xff] %v1266
        %1319 = vst [vmem:[#allocation2 + $0x158] sm:$0xff] %v1267
        %1320 = vst [vmem:[#allocation2 + $0x160] sm:$0xff] %v1268
        %1321 = vst [vmem:[#allocation2 + $0x168] sm:$0xff] %v1269
        %1322 = vst [vmem:[#allocation2 + $0x170] sm:$0xff] %v1270
        %1323 = vst [vmem:[#allocation2 + $0x178] sm:$0xff] %v1271
        %1324 = vst [vmem:[#allocation2 + $0x180] sm:$0xff] %v1272
        %v1325 = vld [vmem:[#allocation2] sm:$0xff]
        %v1326 = vld [vmem:[#allocation2 + $0x8] sm:$0xff]
        %v1327 = vld [vmem:[#allocation2 + $0x10] sm:$0xff]
        %v1328 = vld [vmem:[#allocation2 + $0x18] sm:$0xff]
        %v1329 = vld [vmem:[#allocation2 + $0x20] sm:$0xff]
        %v1330 = vld [vmem:[#allocation2 + $0x28] sm:$0xff]
        %v1331 = vld [vmem:[#allocation2 + $0x30] sm:$0xff]
        %v1332 = vld [vmem:[#allocation2 + $0x38] sm:$0xff]
        %v1333 = vld [vmem:[#allocation2 + $0x40] sm:$0xff]
        %v1334 = vld [vmem:[#allocation2 + $0x48] sm:$0xff]
        %v1335 = vld [vmem:[#allocation2 + $0x50] sm:$0xff]
        %v1336 = vld [vmem:[#allocation2 + $0x58] sm:$0xff]
        %v1337 = vld [vmem:[#allocation2 + $0x60] sm:$0xff]
        %v1338 = vld [vmem:[#allocation2 + $0x68] sm:$0xff]
        %v1339 = vld [vmem:[#allocation2 + $0x70] sm:$0xff]
        %v1340 = vld [vmem:[#allocation2 + $0x78] sm:$0xff]
        %v1341 = vld [vmem:[#allocation2 + $0x80] sm:$0xff]
        %v1342 = vld [vmem:[#allocation2 + $0x88] sm:$0xff]
        %v1343 = vld [vmem:[#allocation2 + $0x90] sm:$0xff]
        %v1344 = vld [vmem:[#allocation2 + $0x98] sm:$0xff]
        %v1345 = vld [vmem:[#allocation2 + $0xa0] sm:$0xff]
        %v1346 = vld [vmem:[#allocation2 + $0xa8] sm:$0xff]
        %v1347 = vld [vmem:[#allocation2 + $0xb0] sm:$0xff]
        %v1348 = vld [vmem:[#allocation2 + $0xb8] sm:$0xff]
        %v1349 = vld [vmem:[#allocation2 + $0xc0] sm:$0xff]
        %v1350 = vld [vmem:[#allocation2 + $0xc8] sm:$0xff]
        %v1351 = vld [vmem:[#allocation2 + $0xd0] sm:$0xff]
        %v1352 = vld [vmem:[#allocation2 + $0xd8] sm:$0xff]
        %v1353 = vld [vmem:[#allocation2 + $0xe0] sm:$0xff]
        %v1354 = vld [vmem:[#allocation2 + $0xe8] sm:$0xff]
        %v1355 = vld [vmem:[#allocation2 + $0xf0] sm:$0xff]
        %v1356 = vld [vmem:[#allocation2 + $0xf8] sm:$0xff]
        %v1357 = vld [vmem:[#allocation2 + $0x100] sm:$0xff]
        %v1358 = vld [vmem:[#allocation2 + $0x108] sm:$0xff]
        %v1359 = vld [vmem:[#allocation2 + $0x110] sm:$0xff]
        %v1360 = vld [vmem:[#allocation2 + $0x118] sm:$0xff]
        %v1361 = vld [vmem:[#allocation2 + $0x120] sm:$0xff]
        %v1362 = vld [vmem:[#allocation2 + $0x128] sm:$0xff]
        %v1363 = vld [vmem:[#allocation2 + $0x130] sm:$0xff]
        %v1364 = vld [vmem:[#allocation2 + $0x138] sm:$0xff]
        %v1365 = vld [vmem:[#allocation2 + $0x140] sm:$0xff]
        %v1366 = vld [vmem:[#allocation2 + $0x148] sm:$0xff]
        %v1367 = vld [vmem:[#allocation2 + $0x150] sm:$0xff]
        %v1368 = vld [vmem:[#allocation2 + $0x158] sm:$0xff]
        %v1369 = vld [vmem:[#allocation2 + $0x160] sm:$0xff]
        %v1370 = vld [vmem:[#allocation2 + $0x168] sm:$0xff]
        %v1371 = vpack.c.bf16 %v1326, %v1325
        %v1372 = vpack.c.bf16 %v1328, %v1327
        %v1373 = vpack.c.bf16 %v1330, %v1329
        %v1374 = vpack.c.bf16 %v1332, %v1331
        %v1375 = vpack.c.bf16 %v1334, %v1333
        %v1376 = vpack.c.bf16 %v1336, %v1335
        %v1377 = vpack.c.bf16 %v1338, %v1337
        %v1378 = vpack.c.bf16 %v1340, %v1339
        %v1379 = vpack.c.bf16 %v1342, %v1341
        %v1380 = vpack.c.bf16 %v1344, %v1343
        %v1381 = vpack.c.bf16 %v1346, %v1345
        %v1382 = vpack.c.bf16 %v1348, %v1347
        %v1383 = vpack.c.bf16 %v1350, %v1349
        %v1384 = vpack.c.bf16 %v1352, %v1351
        %v1385 = vpack.c.bf16 %v1354, %v1353
        %v1386 = vpack.c.bf16 %v1356, %v1355
        %v1387 = vpack.c.bf16 %v1358, %v1357
        %v1388 = vpack.c.bf16 %v1360, %v1359
        %v1389 = vpack.c.bf16 %v1362, %v1361
        %v1390 = vpack.c.bf16 %v1364, %v1363
        %v1391 = vpack.c.bf16 %v1366, %v1365
        %v1392 = vpack.c.bf16 %v1368, %v1367
        %v1393 = vpack.c.bf16 %v1370, %v1369
        %1394 = vst [vmem:[#allocation3] sm:$0xff] %v1371
        %1395 = vst [vmem:[#allocation3 + $0x48] sm:$0xff] %v1372
        %1396 = vst [vmem:[#allocation3 + $0x90] sm:$0xff] %v1373
        %1397 = vst [vmem:[#allocation3 + $0xd8] sm:$0xff] %v1374
        %1398 = vst [vmem:[#allocation3 + $0x120] sm:$0xff] %v1375
        %1399 = vst [vmem:[#allocation3 + $0x168] sm:$0xff] %v1376
        %1400 = vst [vmem:[#allocation3 + $0x1b0] sm:$0xff] %v1377
        %1401 = vst [vmem:[#allocation3 + $0x1f8] sm:$0xff] %v1378
        %1402 = vst [vmem:[#allocation3 + $0x240] sm:$0xff] %v1379
        %1403 = vst [vmem:[#allocation3 + $0x288] sm:$0xff] %v1380
        %1404 = vst [vmem:[#allocation3 + $0x2d0] sm:$0xff] %v1381
        %1405 = vst [vmem:[#allocation3 + $0x318] sm:$0xff] %v1382
        %1406 = vst [vmem:[#allocation3 + $0x360] sm:$0xff] %v1383
        %1407 = vst [vmem:[#allocation3 + $0x3a8] sm:$0xff] %v1384
        %1408 = vst [vmem:[#allocation3 + $0x3f0] sm:$0xff] %v1385
        %1409 = vst [vmem:[#allocation3 + $0x438] sm:$0xff] %v1386
        %1410 = vst [vmem:[#allocation3 + $0x480] sm:$0xff] %v1387
        %1411 = vst [vmem:[#allocation3 + $0x4c8] sm:$0xff] %v1388
        %1412 = vst [vmem:[#allocation3 + $0x510] sm:$0xff] %v1389
        %1413 = vst [vmem:[#allocation3 + $0x558] sm:$0xff] %v1390
        %1414 = vst [vmem:[#allocation3 + $0x5a0] sm:$0xff] %v1391
        %1415 = vst [vmem:[#allocation3 + $0x5e8] sm:$0xff] %v1392
        %1416 = vst [vmem:[#allocation3 + $0x630] sm:$0xff] %v1393
        %v1417 = vld [vmem:[#allocation2 + $0x1] sm:$0xff]
        %v1418 = vld [vmem:[#allocation2 + $0x9] sm:$0xff]
        %v1419 = vld [vmem:[#allocation2 + $0x11] sm:$0xff]
        %v1420 = vld [vmem:[#allocation2 + $0x19] sm:$0xff]
        %v1421 = vld [vmem:[#allocation2 + $0x21] sm:$0xff]
        %v1422 = vld [vmem:[#allocation2 + $0x29] sm:$0xff]
        %v1423 = vld [vmem:[#allocation2 + $0x31] sm:$0xff]
        %v1424 = vld [vmem:[#allocation2 + $0x39] sm:$0xff]
        %v1425 = vld [vmem:[#allocation2 + $0x41] sm:$0xff]
        %v1426 = vld [vmem:[#allocation2 + $0x49] sm:$0xff]
        %v1427 = vld [vmem:[#allocation2 + $0x51] sm:$0xff]
        %v1428 = vld [vmem:[#allocation2 + $0x59] sm:$0xff]
        %v1429 = vld [vmem:[#allocation2 + $0x61] sm:$0xff]
        %v1430 = vld [vmem:[#allocation2 + $0x69] sm:$0xff]
        %v1431 = vld [vmem:[#allocation2 + $0x71] sm:$0xff]
        %v1432 = vld [vmem:[#allocation2 + $0x79] sm:$0xff]
        %v1433 = vld [vmem:[#allocation2 + $0x81] sm:$0xff]
        %v1434 = vld [vmem:[#allocation2 + $0x89] sm:$0xff]
        %v1435 = vld [vmem:[#allocation2 + $0x91] sm:$0xff]
        %v1436 = vld [vmem:[#allocation2 + $0x99] sm:$0xff]
        %v1437 = vld [vmem:[#allocation2 + $0xa1] sm:$0xff]
        %v1438 = vld [vmem:[#allocation2 + $0xa9] sm:$0xff]
        %v1439 = vld [vmem:[#allocation2 + $0xb1] sm:$0xff]
        %v1440 = vld [vmem:[#allocation2 + $0xb9] sm:$0xff]
        %v1441 = vld [vmem:[#allocation2 + $0xc1] sm:$0xff]
        %v1442 = vld [vmem:[#allocation2 + $0xc9] sm:$0xff]
        %v1443 = vld [vmem:[#allocation2 + $0xd1] sm:$0xff]
        %v1444 = vld [vmem:[#allocation2 + $0xd9] sm:$0xff]
        %v1445 = vld [vmem:[#allocation2 + $0xe1] sm:$0xff]
        %v1446 = vld [vmem:[#allocation2 + $0xe9] sm:$0xff]
        %v1447 = vld [vmem:[#allocation2 + $0xf1] sm:$0xff]
        %v1448 = vld [vmem:[#allocation2 + $0xf9] sm:$0xff]
        %v1449 = vld [vmem:[#allocation2 + $0x101] sm:$0xff]
        %v1450 = vld [vmem:[#allocation2 + $0x109] sm:$0xff]
        %v1451 = vld [vmem:[#allocation2 + $0x111] sm:$0xff]
        %v1452 = vld [vmem:[#allocation2 + $0x119] sm:$0xff]
        %v1453 = vld [vmem:[#allocation2 + $0x121] sm:$0xff]
        %v1454 = vld [vmem:[#allocation2 + $0x129] sm:$0xff]
        %v1455 = vld [vmem:[#allocation2 + $0x131] sm:$0xff]
        %v1456 = vld [vmem:[#allocation2 + $0x139] sm:$0xff]
        %v1457 = vld [vmem:[#allocation2 + $0x141] sm:$0xff]
        %v1458 = vld [vmem:[#allocation2 + $0x149] sm:$0xff]
        %v1459 = vld [vmem:[#allocation2 + $0x151] sm:$0xff]
        %v1460 = vld [vmem:[#allocation2 + $0x159] sm:$0xff]
        %v1461 = vld [vmem:[#allocation2 + $0x161] sm:$0xff]
        %v1462 = vld [vmem:[#allocation2 + $0x169] sm:$0xff]
        %v1463 = vpack.c.bf16 %v1418, %v1417
        %v1464 = vpack.c.bf16 %v1420, %v1419
        %v1465 = vpack.c.bf16 %v1422, %v1421
        %v1466 = vpack.c.bf16 %v1424, %v1423
        %v1467 = vpack.c.bf16 %v1426, %v1425
        %v1468 = vpack.c.bf16 %v1428, %v1427
        %v1469 = vpack.c.bf16 %v1430, %v1429
        %v1470 = vpack.c.bf16 %v1432, %v1431
        %v1471 = vpack.c.bf16 %v1434, %v1433
        %v1472 = vpack.c.bf16 %v1436, %v1435
        %v1473 = vpack.c.bf16 %v1438, %v1437
        %v1474 = vpack.c.bf16 %v1440, %v1439
        %v1475 = vpack.c.bf16 %v1442, %v1441
        %v1476 = vpack.c.bf16 %v1444, %v1443
        %v1477 = vpack.c.bf16 %v1446, %v1445
        %v1478 = vpack.c.bf16 %v1448, %v1447
        %v1479 = vpack.c.bf16 %v1450, %v1449
        %v1480 = vpack.c.bf16 %v1452, %v1451
        %v1481 = vpack.c.bf16 %v1454, %v1453
        %v1482 = vpack.c.bf16 %v1456, %v1455
        %v1483 = vpack.c.bf16 %v1458, %v1457
        %v1484 = vpack.c.bf16 %v1460, %v1459
        %v1485 = vpack.c.bf16 %v1462, %v1461
        %1486 = vst [vmem:[#allocation3 + $0x8] sm:$0xff] %v1463
        %1487 = vst [vmem:[#allocation3 + $0x50] sm:$0xff] %v1464
        %1488 = vst [vmem:[#allocation3 + $0x98] sm:$0xff] %v1465
        %1489 = vst [vmem:[#allocation3 + $0xe0] sm:$0xff] %v1466
        %1490 = vst [vmem:[#allocation3 + $0x128] sm:$0xff] %v1467
        %1491 = vst [vmem:[#allocation3 + $0x170] sm:$0xff] %v1468
        %1492 = vst [vmem:[#allocation3 + $0x1b8] sm:$0xff] %v1469
        %1493 = vst [vmem:[#allocation3 + $0x200] sm:$0xff] %v1470
        %1494 = vst [vmem:[#allocation3 + $0x248] sm:$0xff] %v1471
        %1495 = vst [vmem:[#allocation3 + $0x290] sm:$0xff] %v1472
        %1496 = vst [vmem:[#allocation3 + $0x2d8] sm:$0xff] %v1473
        %1497 = vst [vmem:[#allocation3 + $0x320] sm:$0xff] %v1474
        %1498 = vst [vmem:[#allocation3 + $0x368] sm:$0xff] %v1475
        %1499 = vst [vmem:[#allocation3 + $0x3b0] sm:$0xff] %v1476
        %1500 = vst [vmem:[#allocation3 + $0x3f8] sm:$0xff] %v1477
        %1501 = vst [vmem:[#allocation3 + $0x440] sm:$0xff] %v1478
        %1502 = vst [vmem:[#allocation3 + $0x488] sm:$0xff] %v1479
        %1503 = vst [vmem:[#allocation3 + $0x4d0] sm:$0xff] %v1480
        %1504 = vst [vmem:[#allocation3 + $0x518] sm:$0xff] %v1481
        %1505 = vst [vmem:[#allocation3 + $0x560] sm:$0xff] %v1482
        %1506 = vst [vmem:[#allocation3 + $0x5a8] sm:$0xff] %v1483
        %1507 = vst [vmem:[#allocation3 + $0x5f0] sm:$0xff] %v1484
        %1508 = vst [vmem:[#allocation3 + $0x638] sm:$0xff] %v1485
        %v1509 = vld [vmem:[#allocation2 + $0x2] sm:$0xff]
        %v1510 = vld [vmem:[#allocation2 + $0xa] sm:$0xff]
        %v1511 = vld [vmem:[#allocation2 + $0x12] sm:$0xff]
        %v1512 = vld [vmem:[#allocation2 + $0x1a] sm:$0xff]
        %v1513 = vld [vmem:[#allocation2 + $0x22] sm:$0xff]
        %v1514 = vld [vmem:[#allocation2 + $0x2a] sm:$0xff]
        %v1515 = vld [vmem:[#allocation2 + $0x32] sm:$0xff]
        %v1516 = vld [vmem:[#allocation2 + $0x3a] sm:$0xff]
        %v1517 = vld [vmem:[#allocation2 + $0x42] sm:$0xff]
        %v1518 = vld [vmem:[#allocation2 + $0x4a] sm:$0xff]
        %v1519 = vld [vmem:[#allocation2 + $0x52] sm:$0xff]
        %v1520 = vld [vmem:[#allocation2 + $0x5a] sm:$0xff]
        %v1521 = vld [vmem:[#allocation2 + $0x62] sm:$0xff]
        %v1522 = vld [vmem:[#allocation2 + $0x6a] sm:$0xff]
        %v1523 = vld [vmem:[#allocation2 + $0x72] sm:$0xff]
        %v1524 = vld [vmem:[#allocation2 + $0x7a] sm:$0xff]
        %v1525 = vld [vmem:[#allocation2 + $0x82] sm:$0xff]
        %v1526 = vld [vmem:[#allocation2 + $0x8a] sm:$0xff]
        %v1527 = vld [vmem:[#allocation2 + $0x92] sm:$0xff]
        %v1528 = vld [vmem:[#allocation2 + $0x9a] sm:$0xff]
        %v1529 = vld [vmem:[#allocation2 + $0xa2] sm:$0xff]
        %v1530 = vld [vmem:[#allocation2 + $0xaa] sm:$0xff]
        %v1531 = vld [vmem:[#allocation2 + $0xb2] sm:$0xff]
        %v1532 = vld [vmem:[#allocation2 + $0xba] sm:$0xff]
        %v1533 = vld [vmem:[#allocation2 + $0xc2] sm:$0xff]
        %v1534 = vld [vmem:[#allocation2 + $0xca] sm:$0xff]
        %v1535 = vld [vmem:[#allocation2 + $0xd2] sm:$0xff]
        %v1536 = vld [vmem:[#allocation2 + $0xda] sm:$0xff]
        %v1537 = vld [vmem:[#allocation2 + $0xe2] sm:$0xff]
        %v1538 = vld [vmem:[#allocation2 + $0xea] sm:$0xff]
        %v1539 = vld [vmem:[#allocation2 + $0xf2] sm:$0xff]
        %v1540 = vld [vmem:[#allocation2 + $0xfa] sm:$0xff]
        %v1541 = vld [vmem:[#allocation2 + $0x102] sm:$0xff]
        %v1542 = vld [vmem:[#allocation2 + $0x10a] sm:$0xff]
        %v1543 = vld [vmem:[#allocation2 + $0x112] sm:$0xff]
        %v1544 = vld [vmem:[#allocation2 + $0x11a] sm:$0xff]
        %v1545 = vld [vmem:[#allocation2 + $0x122] sm:$0xff]
        %v1546 = vld [vmem:[#allocation2 + $0x12a] sm:$0xff]
        %v1547 = vld [vmem:[#allocation2 + $0x132] sm:$0xff]
        %v1548 = vld [vmem:[#allocation2 + $0x13a] sm:$0xff]
        %v1549 = vld [vmem:[#allocation2 + $0x142] sm:$0xff]
        %v1550 = vld [vmem:[#allocation2 + $0x14a] sm:$0xff]
        %v1551 = vld [vmem:[#allocation2 + $0x152] sm:$0xff]
        %v1552 = vld [vmem:[#allocation2 + $0x15a] sm:$0xff]
        %v1553 = vld [vmem:[#allocation2 + $0x162] sm:$0xff]
        %v1554 = vld [vmem:[#allocation2 + $0x16a] sm:$0xff]
        %v1555 = vpack.c.bf16 %v1510, %v1509
        %v1556 = vpack.c.bf16 %v1512, %v1511
        %v1557 = vpack.c.bf16 %v1514, %v1513
        %v1558 = vpack.c.bf16 %v1516, %v1515
        %v1559 = vpack.c.bf16 %v1518, %v1517
        %v1560 = vpack.c.bf16 %v1520, %v1519
        %v1561 = vpack.c.bf16 %v1522, %v1521
        %v1562 = vpack.c.bf16 %v1524, %v1523
        %v1563 = vpack.c.bf16 %v1526, %v1525
        %v1564 = vpack.c.bf16 %v1528, %v1527
        %v1565 = vpack.c.bf16 %v1530, %v1529
        %v1566 = vpack.c.bf16 %v1532, %v1531
        %v1567 = vpack.c.bf16 %v1534, %v1533
        %v1568 = vpack.c.bf16 %v1536, %v1535
        %v1569 = vpack.c.bf16 %v1538, %v1537
        %v1570 = vpack.c.bf16 %v1540, %v1539
        %v1571 = vpack.c.bf16 %v1542, %v1541
        %v1572 = vpack.c.bf16 %v1544, %v1543
        %v1573 = vpack.c.bf16 %v1546, %v1545
        %v1574 = vpack.c.bf16 %v1548, %v1547
        %v1575 = vpack.c.bf16 %v1550, %v1549
        %v1576 = vpack.c.bf16 %v1552, %v1551
        %v1577 = vpack.c.bf16 %v1554, %v1553
        %1578 = vst [vmem:[#allocation3 + $0x10] sm:$0xff] %v1555
        %1579 = vst [vmem:[#allocation3 + $0x58] sm:$0xff] %v1556
        %1580 = vst [vmem:[#allocation3 + $0xa0] sm:$0xff] %v1557
        %1581 = vst [vmem:[#allocation3 + $0xe8] sm:$0xff] %v1558
        %1582 = vst [vmem:[#allocation3 + $0x130] sm:$0xff] %v1559
        %1583 = vst [vmem:[#allocation3 + $0x178] sm:$0xff] %v1560
        %1584 = vst [vmem:[#allocation3 + $0x1c0] sm:$0xff] %v1561
        %1585 = vst [vmem:[#allocation3 + $0x208] sm:$0xff] %v1562
        %1586 = vst [vmem:[#allocation3 + $0x250] sm:$0xff] %v1563
        %1587 = vst [vmem:[#allocation3 + $0x298] sm:$0xff] %v1564
        %1588 = vst [vmem:[#allocation3 + $0x2e0] sm:$0xff] %v1565
        %1589 = vst [vmem:[#allocation3 + $0x328] sm:$0xff] %v1566
        %1590 = vst [vmem:[#allocation3 + $0x370] sm:$0xff] %v1567
        %1591 = vst [vmem:[#allocation3 + $0x3b8] sm:$0xff] %v1568
        %1592 = vst [vmem:[#allocation3 + $0x400] sm:$0xff] %v1569
        %1593 = vst [vmem:[#allocation3 + $0x448] sm:$0xff] %v1570
        %1594 = vst [vmem:[#allocation3 + $0x490] sm:$0xff] %v1571
        %1595 = vst [vmem:[#allocation3 + $0x4d8] sm:$0xff] %v1572
        %1596 = vst [vmem:[#allocation3 + $0x520] sm:$0xff] %v1573
        %1597 = vst [vmem:[#allocation3 + $0x568] sm:$0xff] %v1574
        %1598 = vst [vmem:[#allocation3 + $0x5b0] sm:$0xff] %v1575
        %1599 = vst [vmem:[#allocation3 + $0x5f8] sm:$0xff] %v1576
        %1600 = vst [vmem:[#allocation3 + $0x640] sm:$0xff] %v1577
        %v1601 = vld [vmem:[#allocation2 + $0x17] sm:$0xff]
        %v1602 = vld [vmem:[#allocation2 + $0x1f] sm:$0xff]
        %v1603 = vld [vmem:[#allocation2 + $0x27] sm:$0xff]
        %v1604 = vld [vmem:[#allocation2 + $0x2f] sm:$0xff]
        %v1605 = vld [vmem:[#allocation2 + $0x37] sm:$0xff]
        %v1606 = vld [vmem:[#allocation2 + $0x3f] sm:$0xff]
        %v1607 = vld [vmem:[#allocation2 + $0x47] sm:$0xff]
        %v1608 = vld [vmem:[#allocation2 + $0x4f] sm:$0xff]
        %v1609 = vld [vmem:[#allocation2 + $0x57] sm:$0xff]
        %v1610 = vld [vmem:[#allocation2 + $0x5f] sm:$0xff]
        %v1611 = vld [vmem:[#allocation2 + $0x67] sm:$0xff]
        %v1612 = vld [vmem:[#allocation2 + $0x6f] sm:$0xff]
        %v1613 = vld [vmem:[#allocation2 + $0x77] sm:$0xff]
        %v1614 = vld [vmem:[#allocation2 + $0x7f] sm:$0xff]
        %v1615 = vld [vmem:[#allocation2 + $0x87] sm:$0xff]
        %v1616 = vld [vmem:[#allocation2 + $0x8f] sm:$0xff]
        %v1617 = vld [vmem:[#allocation2 + $0x97] sm:$0xff]
        %v1618 = vld [vmem:[#allocation2 + $0x9f] sm:$0xff]
        %v1619 = vld [vmem:[#allocation2 + $0xa7] sm:$0xff]
        %v1620 = vld [vmem:[#allocation2 + $0xaf] sm:$0xff]
        %v1621 = vld [vmem:[#allocation2 + $0xb7] sm:$0xff]
        %v1622 = vld [vmem:[#allocation2 + $0xbf] sm:$0xff]
        %v1623 = vld [vmem:[#allocation2 + $0xc7] sm:$0xff]
        %v1624 = vld [vmem:[#allocation2 + $0xcf] sm:$0xff]
        %v1625 = vld [vmem:[#allocation2 + $0xd7] sm:$0xff]
        %v1626 = vld [vmem:[#allocation2 + $0xdf] sm:$0xff]
        %v1627 = vld [vmem:[#allocation2 + $0xe7] sm:$0xff]
        %v1628 = vld [vmem:[#allocation2 + $0xef] sm:$0xff]
        %v1629 = vld [vmem:[#allocation2 + $0xf7] sm:$0xff]
        %v1630 = vld [vmem:[#allocation2 + $0xff] sm:$0xff]
        %v1631 = vld [vmem:[#allocation2 + $0x107] sm:$0xff]
        %v1632 = vld [vmem:[#allocation2 + $0x10f] sm:$0xff]
        %v1633 = vld [vmem:[#allocation2 + $0x117] sm:$0xff]
        %v1634 = vld [vmem:[#allocation2 + $0x11f] sm:$0xff]
        %v1635 = vld [vmem:[#allocation2 + $0x127] sm:$0xff]
        %v1636 = vld [vmem:[#allocation2 + $0x12f] sm:$0xff]
        %v1637 = vld [vmem:[#allocation2 + $0x137] sm:$0xff]
        %v1638 = vld [vmem:[#allocation2 + $0x13f] sm:$0xff]
        %v1639 = vld [vmem:[#allocation2 + $0x147] sm:$0xff]
        %v1640 = vld [vmem:[#allocation2 + $0x14f] sm:$0xff]
        %v1641 = vld [vmem:[#allocation2 + $0x157] sm:$0xff]
        %v1642 = vld [vmem:[#allocation2 + $0x15f] sm:$0xff]
        %v1643 = vld [vmem:[#allocation2 + $0x167] sm:$0xff]
        %v1644 = vld [vmem:[#allocation2 + $0x16f] sm:$0xff]
        %v1645 = vld [vmem:[#allocation2 + $0x177] sm:$0xff]
        %v1646 = vld [vmem:[#allocation2 + $0x17f] sm:$0xff]
        %v1647 = vpack.c.bf16 %v1602, %v1601
        %v1648 = vpack.c.bf16 %v1604, %v1603
        %v1649 = vpack.c.bf16 %v1606, %v1605
        %v1650 = vpack.c.bf16 %v1608, %v1607
        %v1651 = vpack.c.bf16 %v1610, %v1609
        %v1652 = vpack.c.bf16 %v1612, %v1611
        %v1653 = vpack.c.bf16 %v1614, %v1613
        %v1654 = vpack.c.bf16 %v1616, %v1615
        %v1655 = vpack.c.bf16 %v1618, %v1617
        %v1656 = vpack.c.bf16 %v1620, %v1619
        %v1657 = vpack.c.bf16 %v1622, %v1621
        %v1658 = vpack.c.bf16 %v1624, %v1623
        %v1659 = vpack.c.bf16 %v1626, %v1625
        %v1660 = vpack.c.bf16 %v1628, %v1627
        %v1661 = vpack.c.bf16 %v1630, %v1629
        %v1662 = vpack.c.bf16 %v1632, %v1631
        %v1663 = vpack.c.bf16 %v1634, %v1633
        %v1664 = vpack.c.bf16 %v1636, %v1635
        %v1665 = vpack.c.bf16 %v1638, %v1637
        %v1666 = vpack.c.bf16 %v1640, %v1639
        %v1667 = vpack.c.bf16 %v1642, %v1641
        %v1668 = vpack.c.bf16 %v1644, %v1643
        %v1669 = vpack.c.bf16 %v1646, %v1645
        %1670 = vst [vmem:[#allocation3 + $0x18] sm:$0xff] %v1647
        %1671 = vst [vmem:[#allocation3 + $0x60] sm:$0xff] %v1648
        %1672 = vst [vmem:[#allocation3 + $0xa8] sm:$0xff] %v1649
        %1673 = vst [vmem:[#allocation3 + $0xf0] sm:$0xff] %v1650
        %1674 = vst [vmem:[#allocation3 + $0x138] sm:$0xff] %v1651
        %1675 = vst [vmem:[#allocation3 + $0x180] sm:$0xff] %v1652
        %1676 = vst [vmem:[#allocation3 + $0x1c8] sm:$0xff] %v1653
        %1677 = vst [vmem:[#allocation3 + $0x210] sm:$0xff] %v1654
        %1678 = vst [vmem:[#allocation3 + $0x258] sm:$0xff] %v1655
        %1679 = vst [vmem:[#allocation3 + $0x2a0] sm:$0xff] %v1656
        %1680 = vst [vmem:[#allocation3 + $0x2e8] sm:$0xff] %v1657
        %1681 = vst [vmem:[#allocation3 + $0x330] sm:$0xff] %v1658
        %1682 = vst [vmem:[#allocation3 + $0x378] sm:$0xff] %v1659
        %1683 = vst [vmem:[#allocation3 + $0x3c0] sm:$0xff] %v1660
        %1684 = vst [vmem:[#allocation3 + $0x408] sm:$0xff] %v1661
        %1685 = vst [vmem:[#allocation3 + $0x450] sm:$0xff] %v1662
        %1686 = vst [vmem:[#allocation3 + $0x498] sm:$0xff] %v1663
        %1687 = vst [vmem:[#allocation3 + $0x4e0] sm:$0xff] %v1664
        %1688 = vst [vmem:[#allocation3 + $0x528] sm:$0xff] %v1665
        %1689 = vst [vmem:[#allocation3 + $0x570] sm:$0xff] %v1666
        %1690 = vst [vmem:[#allocation3 + $0x5b8] sm:$0xff] %v1667
        %1691 = vst [vmem:[#allocation3 + $0x600] sm:$0xff] %v1668
        %1692 = vst [vmem:[#allocation3 + $0x648] sm:$0xff] %v1669
        %v1693 = vld [vmem:[#allocation2 + $0x18] sm:$0xff]
        %v1694 = vld [vmem:[#allocation2 + $0x20] sm:$0xff]
        %v1695 = vld [vmem:[#allocation2 + $0x28] sm:$0xff]
        %v1696 = vld [vmem:[#allocation2 + $0x30] sm:$0xff]
        %v1697 = vld [vmem:[#allocation2 + $0x38] sm:$0xff]
        %v1698 = vld [vmem:[#allocation2 + $0x40] sm:$0xff]
        %v1699 = vld [vmem:[#allocation2 + $0x48] sm:$0xff]
        %v1700 = vld [vmem:[#allocation2 + $0x50] sm:$0xff]
        %v1701 = vld [vmem:[#allocation2 + $0x58] sm:$0xff]
        %v1702 = vld [vmem:[#allocation2 + $0x60] sm:$0xff]
        %v1703 = vld [vmem:[#allocation2 + $0x68] sm:$0xff]
        %v1704 = vld [vmem:[#allocation2 + $0x70] sm:$0xff]
        %v1705 = vld [vmem:[#allocation2 + $0x78] sm:$0xff]
        %v1706 = vld [vmem:[#allocation2 + $0x80] sm:$0xff]
        %v1707 = vld [vmem:[#allocation2 + $0x88] sm:$0xff]
        %v1708 = vld [vmem:[#allocation2 + $0x90] sm:$0xff]
        %v1709 = vld [vmem:[#allocation2 + $0x98] sm:$0xff]
        %v1710 = vld [vmem:[#allocation2 + $0xa0] sm:$0xff]
        %v1711 = vld [vmem:[#allocation2 + $0xa8] sm:$0xff]
        %v1712 = vld [vmem:[#allocation2 + $0xb0] sm:$0xff]
        %v1713 = vld [vmem:[#allocation2 + $0xb8] sm:$0xff]
        %v1714 = vld [vmem:[#allocation2 + $0xc0] sm:$0xff]
        %v1715 = vld [vmem:[#allocation2 + $0xc8] sm:$0xff]
        %v1716 = vld [vmem:[#allocation2 + $0xd0] sm:$0xff]
        %v1717 = vld [vmem:[#allocation2 + $0xd8] sm:$0xff]
        %v1718 = vld [vmem:[#allocation2 + $0xe0] sm:$0xff]
        %v1719 = vld [vmem:[#allocation2 + $0xe8] sm:$0xff]
        %v1720 = vld [vmem:[#allocation2 + $0xf0] sm:$0xff]
        %v1721 = vld [vmem:[#allocation2 + $0xf8] sm:$0xff]
        %v1722 = vld [vmem:[#allocation2 + $0x100] sm:$0xff]
        %v1723 = vld [vmem:[#allocation2 + $0x108] sm:$0xff]
        %v1724 = vld [vmem:[#allocation2 + $0x110] sm:$0xff]
        %v1725 = vld [vmem:[#allocation2 + $0x118] sm:$0xff]
        %v1726 = vld [vmem:[#allocation2 + $0x120] sm:$0xff]
        %v1727 = vld [vmem:[#allocation2 + $0x128] sm:$0xff]
        %v1728 = vld [vmem:[#allocation2 + $0x130] sm:$0xff]
        %v1729 = vld [vmem:[#allocation2 + $0x138] sm:$0xff]
        %v1730 = vld [vmem:[#allocation2 + $0x140] sm:$0xff]
        %v1731 = vld [vmem:[#allocation2 + $0x148] sm:$0xff]
        %v1732 = vld [vmem:[#allocation2 + $0x150] sm:$0xff]
        %v1733 = vld [vmem:[#allocation2 + $0x158] sm:$0xff]
        %v1734 = vld [vmem:[#allocation2 + $0x160] sm:$0xff]
        %v1735 = vld [vmem:[#allocation2 + $0x168] sm:$0xff]
        %v1736 = vld [vmem:[#allocation2 + $0x170] sm:$0xff]
        %v1737 = vld [vmem:[#allocation2 + $0x178] sm:$0xff]
        %v1738 = vld [vmem:[#allocation2 + $0x180] sm:$0xff]
        %v1739 = vpack.c.bf16 %v1694, %v1693
        %v1740 = vpack.c.bf16 %v1696, %v1695
        %v1741 = vpack.c.bf16 %v1698, %v1697
        %v1742 = vpack.c.bf16 %v1700, %v1699
        %v1743 = vpack.c.bf16 %v1702, %v1701
        %v1744 = vpack.c.bf16 %v1704, %v1703
        %v1745 = vpack.c.bf16 %v1706, %v1705
        %v1746 = vpack.c.bf16 %v1708, %v1707
        %v1747 = vpack.c.bf16 %v1710, %v1709
        %v1748 = vpack.c.bf16 %v1712, %v1711
        %v1749 = vpack.c.bf16 %v1714, %v1713
        %v1750 = vpack.c.bf16 %v1716, %v1715
        %v1751 = vpack.c.bf16 %v1718, %v1717
        %v1752 = vpack.c.bf16 %v1720, %v1719
        %v1753 = vpack.c.bf16 %v1722, %v1721
        %v1754 = vpack.c.bf16 %v1724, %v1723
        %v1755 = vpack.c.bf16 %v1726, %v1725
        %v1756 = vpack.c.bf16 %v1728, %v1727
        %v1757 = vpack.c.bf16 %v1730, %v1729
        %v1758 = vpack.c.bf16 %v1732, %v1731
        %v1759 = vpack.c.bf16 %v1734, %v1733
        %v1760 = vpack.c.bf16 %v1736, %v1735
        %v1761 = vpack.c.bf16 %v1738, %v1737
        %1762 = vst [vmem:[#allocation3 + $0x20] sm:$0xff] %v1739
        %1763 = vst [vmem:[#allocation3 + $0x68] sm:$0xff] %v1740
        %1764 = vst [vmem:[#allocation3 + $0xb0] sm:$0xff] %v1741
        %1765 = vst [vmem:[#allocation3 + $0xf8] sm:$0xff] %v1742
        %1766 = vst [vmem:[#allocation3 + $0x140] sm:$0xff] %v1743
        %1767 = vst [vmem:[#allocation3 + $0x188] sm:$0xff] %v1744
        %1768 = vst [vmem:[#allocation3 + $0x1d0] sm:$0xff] %v1745
        %1769 = vst [vmem:[#allocation3 + $0x218] sm:$0xff] %v1746
        %1770 = vst [vmem:[#allocation3 + $0x260] sm:$0xff] %v1747
        %1771 = vst [vmem:[#allocation3 + $0x2a8] sm:$0xff] %v1748
        %1772 = vst [vmem:[#allocation3 + $0x2f0] sm:$0xff] %v1749
        %1773 = vst [vmem:[#allocation3 + $0x338] sm:$0xff] %v1750
        %1774 = vst [vmem:[#allocation3 + $0x380] sm:$0xff] %v1751
        %1775 = vst [vmem:[#allocation3 + $0x3c8] sm:$0xff] %v1752
        %1776 = vst [vmem:[#allocation3 + $0x410] sm:$0xff] %v1753
        %1777 = vst [vmem:[#allocation3 + $0x458] sm:$0xff] %v1754
        %1778 = vst [vmem:[#allocation3 + $0x4a0] sm:$0xff] %v1755
        %1779 = vst [vmem:[#allocation3 + $0x4e8] sm:$0xff] %v1756
        %1780 = vst [vmem:[#allocation3 + $0x530] sm:$0xff] %v1757
        %1781 = vst [vmem:[#allocation3 + $0x578] sm:$0xff] %v1758
        %1782 = vst [vmem:[#allocation3 + $0x5c0] sm:$0xff] %v1759
        %1783 = vst [vmem:[#allocation3 + $0x608] sm:$0xff] %v1760
        %1784 = vst [vmem:[#allocation3 + $0x650] sm:$0xff] %v1761
        %v1785 = vld [vmem:[#allocation2 + $0x19] sm:$0xff]
        %v1786 = vld [vmem:[#allocation2 + $0x21] sm:$0xff]
        %v1787 = vld [vmem:[#allocation2 + $0x29] sm:$0xff]
        %v1788 = vld [vmem:[#allocation2 + $0x31] sm:$0xff]
        %v1789 = vld [vmem:[#allocation2 + $0x39] sm:$0xff]
        %v1790 = vld [vmem:[#allocation2 + $0x41] sm:$0xff]
        %v1791 = vld [vmem:[#allocation2 + $0x49] sm:$0xff]
        %v1792 = vld [vmem:[#allocation2 + $0x51] sm:$0xff]
        %v1793 = vld [vmem:[#allocation2 + $0x59] sm:$0xff]
        %v1794 = vld [vmem:[#allocation2 + $0x61] sm:$0xff]
        %v1795 = vld [vmem:[#allocation2 + $0x69] sm:$0xff]
        %v1796 = vld [vmem:[#allocation2 + $0x71] sm:$0xff]
        %v1797 = vld [vmem:[#allocation2 + $0x79] sm:$0xff]
        %v1798 = vld [vmem:[#allocation2 + $0x81] sm:$0xff]
        %v1799 = vld [vmem:[#allocation2 + $0x89] sm:$0xff]
        %v1800 = vld [vmem:[#allocation2 + $0x91] sm:$0xff]
        %v1801 = vld [vmem:[#allocation2 + $0x99] sm:$0xff]
        %v1802 = vld [vmem:[#allocation2 + $0xa1] sm:$0xff]
        %v1803 = vld [vmem:[#allocation2 + $0xa9] sm:$0xff]
        %v1804 = vld [vmem:[#allocation2 + $0xb1] sm:$0xff]
        %v1805 = vld [vmem:[#allocation2 + $0xb9] sm:$0xff]
        %v1806 = vld [vmem:[#allocation2 + $0xc1] sm:$0xff]
        %v1807 = vld [vmem:[#allocation2 + $0xc9] sm:$0xff]
        %v1808 = vld [vmem:[#allocation2 + $0xd1] sm:$0xff]
        %v1809 = vld [vmem:[#allocation2 + $0xd9] sm:$0xff]
        %v1810 = vld [vmem:[#allocation2 + $0xe1] sm:$0xff]
        %v1811 = vld [vmem:[#allocation2 + $0xe9] sm:$0xff]
        %v1812 = vld [vmem:[#allocation2 + $0xf1] sm:$0xff]
        %v1813 = vld [vmem:[#allocation2 + $0xf9] sm:$0xff]
        %v1814 = vld [vmem:[#allocation2 + $0x101] sm:$0xff]
        %v1815 = vld [vmem:[#allocation2 + $0x109] sm:$0xff]
        %v1816 = vld [vmem:[#allocation2 + $0x111] sm:$0xff]
        %v1817 = vld [vmem:[#allocation2 + $0x119] sm:$0xff]
        %v1818 = vld [vmem:[#allocation2 + $0x121] sm:$0xff]
        %v1819 = vld [vmem:[#allocation2 + $0x129] sm:$0xff]
        %v1820 = vld [vmem:[#allocation2 + $0x131] sm:$0xff]
        %v1821 = vld [vmem:[#allocation2 + $0x139] sm:$0xff]
        %v1822 = vld [vmem:[#allocation2 + $0x141] sm:$0xff]
        %v1823 = vld [vmem:[#allocation2 + $0x149] sm:$0xff]
        %v1824 = vld [vmem:[#allocation2 + $0x151] sm:$0xff]
        %v1825 = vld [vmem:[#allocation2 + $0x159] sm:$0xff]
        %v1826 = vld [vmem:[#allocation2 + $0x161] sm:$0xff]
        %v1827 = vld [vmem:[#allocation2 + $0x169] sm:$0xff]
        %v1828 = vld [vmem:[#allocation2 + $0x171] sm:$0xff]
        %v1829 = vld [vmem:[#allocation2 + $0x179] sm:$0xff]
        %v1830 = vld [vmem:[#allocation2 + $0x181] sm:$0xff]
        %v1831 = vpack.c.bf16 %v1786, %v1785
        %v1832 = vpack.c.bf16 %v1788, %v1787
        %v1833 = vpack.c.bf16 %v1790, %v1789
        %v1834 = vpack.c.bf16 %v1792, %v1791
        %v1835 = vpack.c.bf16 %v1794, %v1793
        %v1836 = vpack.c.bf16 %v1796, %v1795
        %v1837 = vpack.c.bf16 %v1798, %v1797
        %v1838 = vpack.c.bf16 %v1800, %v1799
        %v1839 = vpack.c.bf16 %v1802, %v1801
        %v1840 = vpack.c.bf16 %v1804, %v1803
        %v1841 = vpack.c.bf16 %v1806, %v1805
        %v1842 = vpack.c.bf16 %v1808, %v1807
        %v1843 = vpack.c.bf16 %v1810, %v1809
        %v1844 = vpack.c.bf16 %v1812, %v1811
        %v1845 = vpack.c.bf16 %v1814, %v1813
        %v1846 = vpack.c.bf16 %v1816, %v1815
        %v1847 = vpack.c.bf16 %v1818, %v1817
        %v1848 = vpack.c.bf16 %v1820, %v1819
        %v1849 = vpack.c.bf16 %v1822, %v1821
        %v1850 = vpack.c.bf16 %v1824, %v1823
        %v1851 = vpack.c.bf16 %v1826, %v1825
        %v1852 = vpack.c.bf16 %v1828, %v1827
        %v1853 = vpack.c.bf16 %v1830, %v1829
        %1854 = vst [vmem:[#allocation3 + $0x28] sm:$0xff] %v1831
        %1855 = vst [vmem:[#allocation3 + $0x70] sm:$0xff] %v1832
        %1856 = vst [vmem:[#allocation3 + $0xb8] sm:$0xff] %v1833
        %1857 = vst [vmem:[#allocation3 + $0x100] sm:$0xff] %v1834
        %1858 = vst [vmem:[#allocation3 + $0x148] sm:$0xff] %v1835
        %1859 = vst [vmem:[#allocation3 + $0x190] sm:$0xff] %v1836
        %1860 = vst [vmem:[#allocation3 + $0x1d8] sm:$0xff] %v1837
        %1861 = vst [vmem:[#allocation3 + $0x220] sm:$0xff] %v1838
        %1862 = vst [vmem:[#allocation3 + $0x268] sm:$0xff] %v1839
        %1863 = vst [vmem:[#allocation3 + $0x2b0] sm:$0xff] %v1840
        %1864 = vst [vmem:[#allocation3 + $0x2f8] sm:$0xff] %v1841
        %1865 = vst [vmem:[#allocation3 + $0x340] sm:$0xff] %v1842
        %1866 = vst [vmem:[#allocation3 + $0x388] sm:$0xff] %v1843
        %1867 = vst [vmem:[#allocation3 + $0x3d0] sm:$0xff] %v1844
        %1868 = vst [vmem:[#allocation3 + $0x418] sm:$0xff] %v1845
        %1869 = vst [vmem:[#allocation3 + $0x460] sm:$0xff] %v1846
        %1870 = vst [vmem:[#allocation3 + $0x4a8] sm:$0xff] %v1847
        %1871 = vst [vmem:[#allocation3 + $0x4f0] sm:$0xff] %v1848
        %1872 = vst [vmem:[#allocation3 + $0x538] sm:$0xff] %v1849
        %1873 = vst [vmem:[#allocation3 + $0x580] sm:$0xff] %v1850
        %1874 = vst [vmem:[#allocation3 + $0x5c8] sm:$0xff] %v1851
        %1875 = vst [vmem:[#allocation3 + $0x610] sm:$0xff] %v1852
        %1876 = vst [vmem:[#allocation3 + $0x658] sm:$0xff] %v1853
        %v1877 = vld [vmem:[#allocation2 + $0x2e] sm:$0xff]
        %v1878 = vld [vmem:[#allocation2 + $0x36] sm:$0xff]
        %v1879 = vld [vmem:[#allocation2 + $0x3e] sm:$0xff]
        %v1880 = vld [vmem:[#allocation2 + $0x46] sm:$0xff]
        %v1881 = vld [vmem:[#allocation2 + $0x4e] sm:$0xff]
        %v1882 = vld [vmem:[#allocation2 + $0x56] sm:$0xff]
        %v1883 = vld [vmem:[#allocation2 + $0x5e] sm:$0xff]
        %v1884 = vld [vmem:[#allocation2 + $0x66] sm:$0xff]
        %v1885 = vld [vmem:[#allocation2 + $0x6e] sm:$0xff]
        %v1886 = vld [vmem:[#allocation2 + $0x76] sm:$0xff]
        %v1887 = vld [vmem:[#allocation2 + $0x7e] sm:$0xff]
        %v1888 = vld [vmem:[#allocation2 + $0x86] sm:$0xff]
        %v1889 = vld [vmem:[#allocation2 + $0x8e] sm:$0xff]
        %v1890 = vld [vmem:[#allocation2 + $0x96] sm:$0xff]
        %v1891 = vld [vmem:[#allocation2 + $0x9e] sm:$0xff]
        %v1892 = vld [vmem:[#allocation2 + $0xa6] sm:$0xff]
        %v1893 = vld [vmem:[#allocation2 + $0xae] sm:$0xff]
        %v1894 = vld [vmem:[#allocation2 + $0xb6] sm:$0xff]
        %v1895 = vld [vmem:[#allocation2 + $0xbe] sm:$0xff]
        %v1896 = vld [vmem:[#allocation2 + $0xc6] sm:$0xff]
        %v1897 = vld [vmem:[#allocation2 + $0xce] sm:$0xff]
        %v1898 = vld [vmem:[#allocation2 + $0xd6] sm:$0xff]
        %v1899 = vld [vmem:[#allocation2 + $0xde] sm:$0xff]
        %v1900 = vld [vmem:[#allocation2 + $0xe6] sm:$0xff]
        %v1901 = vld [vmem:[#allocation2 + $0xee] sm:$0xff]
        %v1902 = vld [vmem:[#allocation2 + $0xf6] sm:$0xff]
        %v1903 = vld [vmem:[#allocation2 + $0xfe] sm:$0xff]
        %v1904 = vld [vmem:[#allocation2 + $0x106] sm:$0xff]
        %v1905 = vld [vmem:[#allocation2 + $0x10e] sm:$0xff]
        %v1906 = vld [vmem:[#allocation2 + $0x116] sm:$0xff]
        %v1907 = vld [vmem:[#allocation2 + $0x11e] sm:$0xff]
        %v1908 = vld [vmem:[#allocation2 + $0x126] sm:$0xff]
        %v1909 = vld [vmem:[#allocation2 + $0x12e] sm:$0xff]
        %v1910 = vld [vmem:[#allocation2 + $0x136] sm:$0xff]
        %v1911 = vld [vmem:[#allocation2 + $0x13e] sm:$0xff]
        %v1912 = vld [vmem:[#allocation2 + $0x146] sm:$0xff]
        %v1913 = vld [vmem:[#allocation2 + $0x14e] sm:$0xff]
        %v1914 = vld [vmem:[#allocation2 + $0x156] sm:$0xff]
        %v1915 = vld [vmem:[#allocation2 + $0x15e] sm:$0xff]
        %v1916 = vld [vmem:[#allocation2 + $0x166] sm:$0xff]
        %v1917 = vld [vmem:[#allocation2 + $0x16e] sm:$0xff]
        %v1918 = vld [vmem:[#allocation2 + $0x176] sm:$0xff]
        %v1919 = vld [vmem:[#allocation2 + $0x17e] sm:$0xff]
        %v1920 = vld [vmem:[#allocation2 + $0x186] sm:$0xff]
        %v1921 = vld [vmem:[#allocation2 + $0x18e] sm:$0xff]
        %v1922 = vld [vmem:[#allocation2 + $0x196] sm:$0xff]
        %v1923 = vpack.c.bf16 %v1878, %v1877
        %v1924 = vpack.c.bf16 %v1880, %v1879
        %v1925 = vpack.c.bf16 %v1882, %v1881
        %v1926 = vpack.c.bf16 %v1884, %v1883
        %v1927 = vpack.c.bf16 %v1886, %v1885
        %v1928 = vpack.c.bf16 %v1888, %v1887
        %v1929 = vpack.c.bf16 %v1890, %v1889
        %v1930 = vpack.c.bf16 %v1892, %v1891
        %v1931 = vpack.c.bf16 %v1894, %v1893
        %v1932 = vpack.c.bf16 %v1896, %v1895
        %v1933 = vpack.c.bf16 %v1898, %v1897
        %v1934 = vpack.c.bf16 %v1900, %v1899
        %v1935 = vpack.c.bf16 %v1902, %v1901
        %v1936 = vpack.c.bf16 %v1904, %v1903
        %v1937 = vpack.c.bf16 %v1906, %v1905
        %v1938 = vpack.c.bf16 %v1908, %v1907
        %v1939 = vpack.c.bf16 %v1910, %v1909
        %v1940 = vpack.c.bf16 %v1912, %v1911
        %v1941 = vpack.c.bf16 %v1914, %v1913
        %v1942 = vpack.c.bf16 %v1916, %v1915
        %v1943 = vpack.c.bf16 %v1918, %v1917
        %v1944 = vpack.c.bf16 %v1920, %v1919
        %v1945 = vpack.c.bf16 %v1922, %v1921
        %1946 = vst [vmem:[#allocation3 + $0x30] sm:$0xff] %v1923
        %1947 = vst [vmem:[#allocation3 + $0x78] sm:$0xff] %v1924
        %1948 = vst [vmem:[#allocation3 + $0xc0] sm:$0xff] %v1925
        %1949 = vst [vmem:[#allocation3 + $0x108] sm:$0xff] %v1926
        %1950 = vst [vmem:[#allocation3 + $0x150] sm:$0xff] %v1927
        %1951 = vst [vmem:[#allocation3 + $0x198] sm:$0xff] %v1928
        %1952 = vst [vmem:[#allocation3 + $0x1e0] sm:$0xff] %v1929
        %1953 = vst [vmem:[#allocation3 + $0x228] sm:$0xff] %v1930
        %1954 = vst [vmem:[#allocation3 + $0x270] sm:$0xff] %v1931
        %1955 = vst [vmem:[#allocation3 + $0x2b8] sm:$0xff] %v1932
        %1956 = vst [vmem:[#allocation3 + $0x300] sm:$0xff] %v1933
        %1957 = vst [vmem:[#allocation3 + $0x348] sm:$0xff] %v1934
        %1958 = vst [vmem:[#allocation3 + $0x390] sm:$0xff] %v1935
        %1959 = vst [vmem:[#allocation3 + $0x3d8] sm:$0xff] %v1936
        %1960 = vst [vmem:[#allocation3 + $0x420] sm:$0xff] %v1937
        %1961 = vst [vmem:[#allocation3 + $0x468] sm:$0xff] %v1938
        %1962 = vst [vmem:[#allocation3 + $0x4b0] sm:$0xff] %v1939
        %1963 = vst [vmem:[#allocation3 + $0x4f8] sm:$0xff] %v1940
        %1964 = vst [vmem:[#allocation3 + $0x540] sm:$0xff] %v1941
        %1965 = vst [vmem:[#allocation3 + $0x588] sm:$0xff] %v1942
        %1966 = vst [vmem:[#allocation3 + $0x5d0] sm:$0xff] %v1943
        %1967 = vst [vmem:[#allocation3 + $0x618] sm:$0xff] %v1944
        %1968 = vst [vmem:[#allocation3 + $0x660] sm:$0xff] %v1945
        %v1969 = vld [vmem:[#allocation2 + $0x2f] sm:$0xff]
        %v1970 = vld [vmem:[#allocation2 + $0x37] sm:$0xff]
        %v1971 = vld [vmem:[#allocation2 + $0x3f] sm:$0xff]
        %v1972 = vld [vmem:[#allocation2 + $0x47] sm:$0xff]
        %v1973 = vld [vmem:[#allocation2 + $0x4f] sm:$0xff]
        %v1974 = vld [vmem:[#allocation2 + $0x57] sm:$0xff]
        %v1975 = vld [vmem:[#allocation2 + $0x5f] sm:$0xff]
        %v1976 = vld [vmem:[#allocation2 + $0x67] sm:$0xff]
        %v1977 = vld [vmem:[#allocation2 + $0x6f] sm:$0xff]
        %v1978 = vld [vmem:[#allocation2 + $0x77] sm:$0xff]
        %v1979 = vld [vmem:[#allocation2 + $0x7f] sm:$0xff]
        %v1980 = vld [vmem:[#allocation2 + $0x87] sm:$0xff]
        %v1981 = vld [vmem:[#allocation2 + $0x8f] sm:$0xff]
        %v1982 = vld [vmem:[#allocation2 + $0x97] sm:$0xff]
        %v1983 = vld [vmem:[#allocation2 + $0x9f] sm:$0xff]
        %v1984 = vld [vmem:[#allocation2 + $0xa7] sm:$0xff]
        %v1985 = vld [vmem:[#allocation2 + $0xaf] sm:$0xff]
        %v1986 = vld [vmem:[#allocation2 + $0xb7] sm:$0xff]
        %v1987 = vld [vmem:[#allocation2 + $0xbf] sm:$0xff]
        %v1988 = vld [vmem:[#allocation2 + $0xc7] sm:$0xff]
        %v1989 = vld [vmem:[#allocation2 + $0xcf] sm:$0xff]
        %v1990 = vld [vmem:[#allocation2 + $0xd7] sm:$0xff]
        %v1991 = vld [vmem:[#allocation2 + $0xdf] sm:$0xff]
        %v1992 = vld [vmem:[#allocation2 + $0xe7] sm:$0xff]
        %v1993 = vld [vmem:[#allocation2 + $0xef] sm:$0xff]
        %v1994 = vld [vmem:[#allocation2 + $0xf7] sm:$0xff]
        %v1995 = vld [vmem:[#allocation2 + $0xff] sm:$0xff]
        %v1996 = vld [vmem:[#allocation2 + $0x107] sm:$0xff]
        %v1997 = vld [vmem:[#allocation2 + $0x10f] sm:$0xff]
        %v1998 = vld [vmem:[#allocation2 + $0x117] sm:$0xff]
        %v1999 = vld [vmem:[#allocation2 + $0x11f] sm:$0xff]
        %v2000 = vld [vmem:[#allocation2 + $0x127] sm:$0xff]
        %v2001 = vld [vmem:[#allocation2 + $0x12f] sm:$0xff]
        %v2002 = vld [vmem:[#allocation2 + $0x137] sm:$0xff]
        %v2003 = vld [vmem:[#allocation2 + $0x13f] sm:$0xff]
        %v2004 = vld [vmem:[#allocation2 + $0x147] sm:$0xff]
        %v2005 = vld [vmem:[#allocation2 + $0x14f] sm:$0xff]
        %v2006 = vld [vmem:[#allocation2 + $0x157] sm:$0xff]
        %v2007 = vld [vmem:[#allocation2 + $0x15f] sm:$0xff]
        %v2008 = vld [vmem:[#allocation2 + $0x167] sm:$0xff]
        %v2009 = vld [vmem:[#allocation2 + $0x16f] sm:$0xff]
        %v2010 = vld [vmem:[#allocation2 + $0x177] sm:$0xff]
        %v2011 = vld [vmem:[#allocation2 + $0x17f] sm:$0xff]
        %v2012 = vld [vmem:[#allocation2 + $0x187] sm:$0xff]
        %v2013 = vld [vmem:[#allocation2 + $0x18f] sm:$0xff]
        %v2014 = vld [vmem:[#allocation2 + $0x197] sm:$0xff]
        %v2015 = vpack.c.bf16 %v1970, %v1969
        %v2016 = vpack.c.bf16 %v1972, %v1971
        %v2017 = vpack.c.bf16 %v1974, %v1973
        %v2018 = vpack.c.bf16 %v1976, %v1975
        %v2019 = vpack.c.bf16 %v1978, %v1977
        %v2020 = vpack.c.bf16 %v1980, %v1979
        %v2021 = vpack.c.bf16 %v1982, %v1981
        %v2022 = vpack.c.bf16 %v1984, %v1983
        %v2023 = vpack.c.bf16 %v1986, %v1985
        %v2024 = vpack.c.bf16 %v1988, %v1987
        %v2025 = vpack.c.bf16 %v1990, %v1989
        %v2026 = vpack.c.bf16 %v1992, %v1991
        %v2027 = vpack.c.bf16 %v1994, %v1993
        %v2028 = vpack.c.bf16 %v1996, %v1995
        %v2029 = vpack.c.bf16 %v1998, %v1997
        %v2030 = vpack.c.bf16 %v2000, %v1999
        %v2031 = vpack.c.bf16 %v2002, %v2001
        %v2032 = vpack.c.bf16 %v2004, %v2003
        %v2033 = vpack.c.bf16 %v2006, %v2005
        %v2034 = vpack.c.bf16 %v2008, %v2007
        %v2035 = vpack.c.bf16 %v2010, %v2009
        %v2036 = vpack.c.bf16 %v2012, %v2011
        %v2037 = vpack.c.bf16 %v2014, %v2013
        %2038 = vst [vmem:[#allocation3 + $0x38] sm:$0xff] %v2015
        %2039 = vst [vmem:[#allocation3 + $0x80] sm:$0xff] %v2016
        %2040 = vst [vmem:[#allocation3 + $0xc8] sm:$0xff] %v2017
        %2041 = vst [vmem:[#allocation3 + $0x110] sm:$0xff] %v2018
        %2042 = vst [vmem:[#allocation3 + $0x158] sm:$0xff] %v2019
        %2043 = vst [vmem:[#allocation3 + $0x1a0] sm:$0xff] %v2020
        %2044 = vst [vmem:[#allocation3 + $0x1e8] sm:$0xff] %v2021
        %2045 = vst [vmem:[#allocation3 + $0x230] sm:$0xff] %v2022
        %2046 = vst [vmem:[#allocation3 + $0x278] sm:$0xff] %v2023
        %2047 = vst [vmem:[#allocation3 + $0x2c0] sm:$0xff] %v2024
        %2048 = vst [vmem:[#allocation3 + $0x308] sm:$0xff] %v2025
        %2049 = vst [vmem:[#allocation3 + $0x350] sm:$0xff] %v2026
        %2050 = vst [vmem:[#allocation3 + $0x398] sm:$0xff] %v2027
        %2051 = vst [vmem:[#allocation3 + $0x3e0] sm:$0xff] %v2028
        %2052 = vst [vmem:[#allocation3 + $0x428] sm:$0xff] %v2029
        %2053 = vst [vmem:[#allocation3 + $0x470] sm:$0xff] %v2030
        %2054 = vst [vmem:[#allocation3 + $0x4b8] sm:$0xff] %v2031
        %2055 = vst [vmem:[#allocation3 + $0x500] sm:$0xff] %v2032
        %2056 = vst [vmem:[#allocation3 + $0x548] sm:$0xff] %v2033
        %2057 = vst [vmem:[#allocation3 + $0x590] sm:$0xff] %v2034
        %2058 = vst [vmem:[#allocation3 + $0x5d8] sm:$0xff] %v2035
        %2059 = vst [vmem:[#allocation3 + $0x620] sm:$0xff] %v2036
        %2060 = vst [vmem:[#allocation3 + $0x668] sm:$0xff] %v2037
        %v2061 = vld [vmem:[#allocation2 + $0x30] sm:$0xff]
        %v2062 = vld [vmem:[#allocation2 + $0x38] sm:$0xff]
        %v2063 = vld [vmem:[#allocation2 + $0x40] sm:$0xff]
        %v2064 = vld [vmem:[#allocation2 + $0x48] sm:$0xff]
        %v2065 = vld [vmem:[#allocation2 + $0x50] sm:$0xff]
        %v2066 = vld [vmem:[#allocation2 + $0x58] sm:$0xff]
        %v2067 = vld [vmem:[#allocation2 + $0x60] sm:$0xff]
        %v2068 = vld [vmem:[#allocation2 + $0x68] sm:$0xff]
        %v2069 = vld [vmem:[#allocation2 + $0x70] sm:$0xff]
        %v2070 = vld [vmem:[#allocation2 + $0x78] sm:$0xff]
        %v2071 = vld [vmem:[#allocation2 + $0x80] sm:$0xff]
        %v2072 = vld [vmem:[#allocation2 + $0x88] sm:$0xff]
        %v2073 = vld [vmem:[#allocation2 + $0x90] sm:$0xff]
        %v2074 = vld [vmem:[#allocation2 + $0x98] sm:$0xff]
        %v2075 = vld [vmem:[#allocation2 + $0xa0] sm:$0xff]
        %v2076 = vld [vmem:[#allocation2 + $0xa8] sm:$0xff]
        %v2077 = vld [vmem:[#allocation2 + $0xb0] sm:$0xff]
        %v2078 = vld [vmem:[#allocation2 + $0xb8] sm:$0xff]
        %v2079 = vld [vmem:[#allocation2 + $0xc0] sm:$0xff]
        %v2080 = vld [vmem:[#allocation2 + $0xc8] sm:$0xff]
        %v2081 = vld [vmem:[#allocation2 + $0xd0] sm:$0xff]
        %v2082 = vld [vmem:[#allocation2 + $0xd8] sm:$0xff]
        %v2083 = vld [vmem:[#allocation2 + $0xe0] sm:$0xff]
        %v2084 = vld [vmem:[#allocation2 + $0xe8] sm:$0xff]
        %v2085 = vld [vmem:[#allocation2 + $0xf0] sm:$0xff]
        %v2086 = vld [vmem:[#allocation2 + $0xf8] sm:$0xff]
        %v2087 = vld [vmem:[#allocation2 + $0x100] sm:$0xff]
        %v2088 = vld [vmem:[#allocation2 + $0x108] sm:$0xff]
        %v2089 = vld [vmem:[#allocation2 + $0x110] sm:$0xff]
        %v2090 = vld [vmem:[#allocation2 + $0x118] sm:$0xff]
        %v2091 = vld [vmem:[#allocation2 + $0x120] sm:$0xff]
        %v2092 = vld [vmem:[#allocation2 + $0x128] sm:$0xff]
        %v2093 = vld [vmem:[#allocation2 + $0x130] sm:$0xff]
        %v2094 = vld [vmem:[#allocation2 + $0x138] sm:$0xff]
        %v2095 = vld [vmem:[#allocation2 + $0x140] sm:$0xff]
        %v2096 = vld [vmem:[#allocation2 + $0x148] sm:$0xff]
        %v2097 = vld [vmem:[#allocation2 + $0x150] sm:$0xff]
        %v2098 = vld [vmem:[#allocation2 + $0x158] sm:$0xff]
        %v2099 = vld [vmem:[#allocation2 + $0x160] sm:$0xff]
        %v2100 = vld [vmem:[#allocation2 + $0x168] sm:$0xff]
        %v2101 = vld [vmem:[#allocation2 + $0x170] sm:$0xff]
        %v2102 = vld [vmem:[#allocation2 + $0x178] sm:$0xff]
        %v2103 = vld [vmem:[#allocation2 + $0x180] sm:$0xff]
        %v2104 = vld [vmem:[#allocation2 + $0x188] sm:$0xff]
        %v2105 = vld [vmem:[#allocation2 + $0x190] sm:$0xff]
        %v2106 = vld [vmem:[#allocation2 + $0x198] sm:$0xff]
        %v2107 = vpack.c.bf16 %v2062, %v2061
        %v2108 = vpack.c.bf16 %v2064, %v2063
        %v2109 = vpack.c.bf16 %v2066, %v2065
        %v2110 = vpack.c.bf16 %v2068, %v2067
        %v2111 = vpack.c.bf16 %v2070, %v2069
        %v2112 = vpack.c.bf16 %v2072, %v2071
        %v2113 = vpack.c.bf16 %v2074, %v2073
        %v2114 = vpack.c.bf16 %v2076, %v2075
        %v2115 = vpack.c.bf16 %v2078, %v2077
        %v2116 = vpack.c.bf16 %v2080, %v2079
        %v2117 = vpack.c.bf16 %v2082, %v2081
        %v2118 = vpack.c.bf16 %v2084, %v2083
        %v2119 = vpack.c.bf16 %v2086, %v2085
        %v2120 = vpack.c.bf16 %v2088, %v2087
        %v2121 = vpack.c.bf16 %v2090, %v2089
        %v2122 = vpack.c.bf16 %v2092, %v2091
        %v2123 = vpack.c.bf16 %v2094, %v2093
        %v2124 = vpack.c.bf16 %v2096, %v2095
        %v2125 = vpack.c.bf16 %v2098, %v2097
        %v2126 = vpack.c.bf16 %v2100, %v2099
        %v2127 = vpack.c.bf16 %v2102, %v2101
        %v2128 = vpack.c.bf16 %v2104, %v2103
        %v2129 = vpack.c.bf16 %v2106, %v2105
        %2130 = vst [vmem:[#allocation3 + $0x40] sm:$0xff] %v2107
        %2131 = vst [vmem:[#allocation3 + $0x88] sm:$0xff] %v2108
        %2132 = vst [vmem:[#allocation3 + $0xd0] sm:$0xff] %v2109
        %2133 = vst [vmem:[#allocation3 + $0x118] sm:$0xff] %v2110
        %2134 = vst [vmem:[#allocation3 + $0x160] sm:$0xff] %v2111
        %2135 = vst [vmem:[#allocation3 + $0x1a8] sm:$0xff] %v2112
        %2136 = vst [vmem:[#allocation3 + $0x1f0] sm:$0xff] %v2113
        %2137 = vst [vmem:[#allocation3 + $0x238] sm:$0xff] %v2114
        %2138 = vst [vmem:[#allocation3 + $0x280] sm:$0xff] %v2115
        %2139 = vst [vmem:[#allocation3 + $0x2c8] sm:$0xff] %v2116
        %2140 = vst [vmem:[#allocation3 + $0x310] sm:$0xff] %v2117
        %2141 = vst [vmem:[#allocation3 + $0x358] sm:$0xff] %v2118
        %2142 = vst [vmem:[#allocation3 + $0x3a0] sm:$0xff] %v2119
        %2143 = vst [vmem:[#allocation3 + $0x3e8] sm:$0xff] %v2120
        %2144 = vst [vmem:[#allocation3 + $0x430] sm:$0xff] %v2121
        %2145 = vst [vmem:[#allocation3 + $0x478] sm:$0xff] %v2122
        %2146 = vst [vmem:[#allocation3 + $0x4c0] sm:$0xff] %v2123
        %2147 = vst [vmem:[#allocation3 + $0x508] sm:$0xff] %v2124
        %2148 = vst [vmem:[#allocation3 + $0x550] sm:$0xff] %v2125
        %2149 = vst [vmem:[#allocation3 + $0x598] sm:$0xff] %v2126
        %2150 = vst [vmem:[#allocation3 + $0x5e0] sm:$0xff] %v2127
        %2151 = vst [vmem:[#allocation3 + $0x628] sm:$0xff] %v2128
        %2152 = vst [vmem:[#allocation3 + $0x670] sm:$0xff] %v2129
        %v2153 = vld [vmem:[#allocation3] sm:$0xff]
        %v2154 = vld [vmem:[#allocation3 + $0x8] sm:$0xff]
        %v2155 = vld [vmem:[#allocation3 + $0x10] sm:$0xff]
        %v2156 = vld [vmem:[#allocation3 + $0x18] sm:$0xff]
        %v2157 = vld [vmem:[#allocation3 + $0x20] sm:$0xff]
        %v2158 = vld [vmem:[#allocation3 + $0x28] sm:$0xff]
        %v2159 = vld [vmem:[#allocation3 + $0x30] sm:$0xff]
        %v2160 = vld [vmem:[#allocation3 + $0x38] sm:$0xff]
        %v2161 = vld [vmem:[#allocation3 + $0x40] sm:$0xff]
        %v2162 = vld [vmem:[#allocation3 + $0x48] sm:$0xff]
        %v2163 = vld [vmem:[#allocation3 + $0x50] sm:$0xff]
        %v2164 = vld [vmem:[#allocation3 + $0x58] sm:$0xff]
        %v2165 = vld [vmem:[#allocation3 + $0x60] sm:$0xff]
        %v2166 = vld [vmem:[#allocation3 + $0x68] sm:$0xff]
        %v2167 = vld [vmem:[#allocation3 + $0x70] sm:$0xff]
        %v2168 = vld [vmem:[#allocation3 + $0x78] sm:$0xff]
        %v2169 = vld [vmem:[#allocation3 + $0x80] sm:$0xff]
        %v2170 = vld [vmem:[#allocation3 + $0x88] sm:$0xff]
        %v2171 = vld [vmem:[#allocation3 + $0x90] sm:$0xff]
        %v2172 = vld [vmem:[#allocation3 + $0x98] sm:$0xff]
        %v2173 = vld [vmem:[#allocation3 + $0xa0] sm:$0xff]
        %v2174 = vld [vmem:[#allocation3 + $0xa8] sm:$0xff]
        %v2175 = vld [vmem:[#allocation3 + $0xb0] sm:$0xff]
        %v2176 = vld [vmem:[#allocation3 + $0xb8] sm:$0xff]
        %v2177 = vld [vmem:[#allocation3 + $0xc0] sm:$0xff]
        %v2178 = vld [vmem:[#allocation3 + $0xc8] sm:$0xff]
        %v2179 = vld [vmem:[#allocation3 + $0xd0] sm:$0xff]
        %v2180 = vld [vmem:[#allocation3 + $0xd8] sm:$0xff]
        %v2181 = vld [vmem:[#allocation3 + $0xe0] sm:$0xff]
        %v2182 = vld [vmem:[#allocation3 + $0xe8] sm:$0xff]
        %v2183 = vld [vmem:[#allocation3 + $0xf0] sm:$0xff]
        %v2184 = vld [vmem:[#allocation3 + $0xf8] sm:$0xff]
        %v2185 = vld [vmem:[#allocation3 + $0x100] sm:$0xff]
        %v2186 = vld [vmem:[#allocation3 + $0x108] sm:$0xff]
        %v2187 = vld [vmem:[#allocation3 + $0x110] sm:$0xff]
        %v2188 = vld [vmem:[#allocation3 + $0x118] sm:$0xff]
        %v2189 = vld [vmem:[#allocation3 + $0x120] sm:$0xff]
        %v2190 = vld [vmem:[#allocation3 + $0x128] sm:$0xff]
        %v2191 = vld [vmem:[#allocation3 + $0x130] sm:$0xff]
        %v2192 = vld [vmem:[#allocation3 + $0x138] sm:$0xff]
        %v2193 = vld [vmem:[#allocation3 + $0x140] sm:$0xff]
        %v2194 = vld [vmem:[#allocation3 + $0x148] sm:$0xff]
        %v2195 = vld [vmem:[#allocation3 + $0x150] sm:$0xff]
        %v2196 = vld [vmem:[#allocation3 + $0x158] sm:$0xff]
        %v2197 = vld [vmem:[#allocation3 + $0x160] sm:$0xff]
        %v2198 = vld [vmem:[#allocation3 + $0x168] sm:$0xff]
        %v2199 = vld [vmem:[#allocation3 + $0x170] sm:$0xff]
        %v2200 = vld [vmem:[#allocation3 + $0x178] sm:$0xff]
        %v2201 = vld [vmem:[#allocation3 + $0x180] sm:$0xff]
        %v2202 = vld [vmem:[#allocation3 + $0x188] sm:$0xff]
        %v2203 = vld [vmem:[#allocation3 + $0x190] sm:$0xff]
        %v2204 = vld [vmem:[#allocation3 + $0x198] sm:$0xff]
        %v2205 = vld [vmem:[#allocation3 + $0x1a0] sm:$0xff]
        %v2206 = vld [vmem:[#allocation3 + $0x1a8] sm:$0xff]
        %v2207 = vld [vmem:[#allocation3 + $0x1b0] sm:$0xff]
        %v2208 = vld [vmem:[#allocation3 + $0x1b8] sm:$0xff]
        %v2209 = vld [vmem:[#allocation3 + $0x1c0] sm:$0xff]
        %v2210 = vld [vmem:[#allocation3 + $0x1c8] sm:$0xff]
        %v2211 = vld [vmem:[#allocation3 + $0x1d0] sm:$0xff]
        %v2212 = vld [vmem:[#allocation3 + $0x1d8] sm:$0xff]
        %v2213 = vld [vmem:[#allocation3 + $0x1e0] sm:$0xff]
        %v2214 = vld [vmem:[#allocation3 + $0x1e8] sm:$0xff]
        %v2215 = vld [vmem:[#allocation3 + $0x1f0] sm:$0xff]
        %v2216 = vld [vmem:[#allocation3 + $0x1f8] sm:$0xff]
        %v2217 = vld [vmem:[#allocation3 + $0x200] sm:$0xff]
        %v2218 = vld [vmem:[#allocation3 + $0x208] sm:$0xff]
        %v2219 = vld [vmem:[#allocation3 + $0x210] sm:$0xff]
        %v2220 = vld [vmem:[#allocation3 + $0x218] sm:$0xff]
        %v2221 = vld [vmem:[#allocation3 + $0x220] sm:$0xff]
        %v2222 = vld [vmem:[#allocation3 + $0x228] sm:$0xff]
        %v2223 = vld [vmem:[#allocation3 + $0x230] sm:$0xff]
        %v2224 = vld [vmem:[#allocation3 + $0x238] sm:$0xff]
        %v2225 = vld [vmem:[#allocation3 + $0x240] sm:$0xff]
        %v2226 = vld [vmem:[#allocation3 + $0x248] sm:$0xff]
        %v2227 = vld [vmem:[#allocation3 + $0x250] sm:$0xff]
        %v2228 = vld [vmem:[#allocation3 + $0x258] sm:$0xff]
        %v2229 = vld [vmem:[#allocation3 + $0x260] sm:$0xff]
        %v2230 = vld [vmem:[#allocation3 + $0x268] sm:$0xff]
        %v2231 = vld [vmem:[#allocation3 + $0x270] sm:$0xff]
        %v2232 = vld [vmem:[#allocation3 + $0x278] sm:$0xff]
        %v2233 = vld [vmem:[#allocation3 + $0x280] sm:$0xff]
        %v2234 = vld [vmem:[#allocation3 + $0x288] sm:$0xff]
        %v2235 = vld [vmem:[#allocation3 + $0x290] sm:$0xff]
        %v2236 = vld [vmem:[#allocation3 + $0x298] sm:$0xff]
        %v2237 = vld [vmem:[#allocation3 + $0x2a0] sm:$0xff]
        %v2238 = vld [vmem:[#allocation3 + $0x2a8] sm:$0xff]
        %v2239 = vld [vmem:[#allocation3 + $0x2b0] sm:$0xff]
        %v2240 = vld [vmem:[#allocation3 + $0x2b8] sm:$0xff]
        %v2241 = vld [vmem:[#allocation3 + $0x2c0] sm:$0xff]
        %v2242 = vld [vmem:[#allocation3 + $0x2c8] sm:$0xff]
        %v2243 = vld [vmem:[#allocation3 + $0x2d0] sm:$0xff]
        %v2244 = vld [vmem:[#allocation3 + $0x2d8] sm:$0xff]
        %v2245 = vld [vmem:[#allocation3 + $0x2e0] sm:$0xff]
        %v2246 = vld [vmem:[#allocation3 + $0x2e8] sm:$0xff]
        %v2247 = vld [vmem:[#allocation3 + $0x2f0] sm:$0xff]
        %v2248 = vld [vmem:[#allocation3 + $0x2f8] sm:$0xff]
        %v2249 = vld [vmem:[#allocation3 + $0x300] sm:$0xff]
        %v2250 = vld [vmem:[#allocation3 + $0x308] sm:$0xff]
        %v2251 = vld [vmem:[#allocation3 + $0x310] sm:$0xff]
        %v2252 = vld [vmem:[#allocation3 + $0x318] sm:$0xff]
        %v2253 = vld [vmem:[#allocation3 + $0x320] sm:$0xff]
        %v2254 = vld [vmem:[#allocation3 + $0x328] sm:$0xff]
        %v2255 = vld [vmem:[#allocation3 + $0x330] sm:$0xff]
        %v2256 = vld [vmem:[#allocation3 + $0x338] sm:$0xff]
        %v2257 = vld [vmem:[#allocation3 + $0x340] sm:$0xff]
        %v2258 = vld [vmem:[#allocation3 + $0x348] sm:$0xff]
        %v2259 = vld [vmem:[#allocation3 + $0x350] sm:$0xff]
        %v2260 = vld [vmem:[#allocation3 + $0x358] sm:$0xff]
        %v2261 = vld [vmem:[#allocation3 + $0x360] sm:$0xff]
        %v2262 = vld [vmem:[#allocation3 + $0x368] sm:$0xff]
        %v2263 = vld [vmem:[#allocation3 + $0x370] sm:$0xff]
        %v2264 = vld [vmem:[#allocation3 + $0x378] sm:$0xff]
        %v2265 = vld [vmem:[#allocation3 + $0x380] sm:$0xff]
        %v2266 = vld [vmem:[#allocation3 + $0x388] sm:$0xff]
        %v2267 = vld [vmem:[#allocation3 + $0x390] sm:$0xff]
        %v2268 = vld [vmem:[#allocation3 + $0x398] sm:$0xff]
        %v2269 = vld [vmem:[#allocation3 + $0x3a0] sm:$0xff]
        %v2270 = vld [vmem:[#allocation3 + $0x3a8] sm:$0xff]
        %v2271 = vld [vmem:[#allocation3 + $0x3b0] sm:$0xff]
        %v2272 = vld [vmem:[#allocation3 + $0x3b8] sm:$0xff]
        %v2273 = vld [vmem:[#allocation3 + $0x3c0] sm:$0xff]
        %v2274 = vld [vmem:[#allocation3 + $0x3c8] sm:$0xff]
        %v2275 = vld [vmem:[#allocation3 + $0x3d0] sm:$0xff]
        %v2276 = vld [vmem:[#allocation3 + $0x3d8] sm:$0xff]
        %v2277 = vld [vmem:[#allocation3 + $0x3e0] sm:$0xff]
        %v2278 = vld [vmem:[#allocation3 + $0x3e8] sm:$0xff]
        %v2279 = vld [vmem:[#allocation3 + $0x3f0] sm:$0xff]
        %v2280 = vld [vmem:[#allocation3 + $0x3f8] sm:$0xff]
        %v2281 = vld [vmem:[#allocation3 + $0x400] sm:$0xff]
        %v2282 = vld [vmem:[#allocation3 + $0x408] sm:$0xff]
        %v2283 = vld [vmem:[#allocation3 + $0x410] sm:$0xff]
        %v2284 = vld [vmem:[#allocation3 + $0x418] sm:$0xff]
        %v2285 = vld [vmem:[#allocation3 + $0x420] sm:$0xff]
        %v2286 = vld [vmem:[#allocation3 + $0x428] sm:$0xff]
        %v2287 = vld [vmem:[#allocation3 + $0x430] sm:$0xff]
        %v2288 = vld [vmem:[#allocation3 + $0x438] sm:$0xff]
        %v2289 = vld [vmem:[#allocation3 + $0x440] sm:$0xff]
        %v2290 = vld [vmem:[#allocation3 + $0x448] sm:$0xff]
        %v2291 = vld [vmem:[#allocation3 + $0x450] sm:$0xff]
        %v2292 = vld [vmem:[#allocation3 + $0x458] sm:$0xff]
        %v2293 = vld [vmem:[#allocation3 + $0x460] sm:$0xff]
        %v2294 = vld [vmem:[#allocation3 + $0x468] sm:$0xff]
        %v2295 = vld [vmem:[#allocation3 + $0x470] sm:$0xff]
        %v2296 = vld [vmem:[#allocation3 + $0x478] sm:$0xff]
        %v2297 = vld [vmem:[#allocation3 + $0x480] sm:$0xff]
        %v2298 = vld [vmem:[#allocation3 + $0x488] sm:$0xff]
        %v2299 = vld [vmem:[#allocation3 + $0x490] sm:$0xff]
        %v2300 = vld [vmem:[#allocation3 + $0x498] sm:$0xff]
        %v2301 = vld [vmem:[#allocation3 + $0x4a0] sm:$0xff]
        %v2302 = vld [vmem:[#allocation3 + $0x4a8] sm:$0xff]
        %v2303 = vld [vmem:[#allocation3 + $0x4b0] sm:$0xff]
        %v2304 = vld [vmem:[#allocation3 + $0x4b8] sm:$0xff]
        %v2305 = vld [vmem:[#allocation3 + $0x4c0] sm:$0xff]
        %v2306 = vld [vmem:[#allocation3 + $0x4c8] sm:$0xff]
        %v2307 = vld [vmem:[#allocation3 + $0x4d0] sm:$0xff]
        %v2308 = vld [vmem:[#allocation3 + $0x4d8] sm:$0xff]
        %v2309 = vld [vmem:[#allocation3 + $0x4e0] sm:$0xff]
        %v2310 = vld [vmem:[#allocation3 + $0x4e8] sm:$0xff]
        %v2311 = vld [vmem:[#allocation3 + $0x4f0] sm:$0xff]
        %v2312 = vld [vmem:[#allocation3 + $0x4f8] sm:$0xff]
        %v2313 = vld [vmem:[#allocation3 + $0x500] sm:$0xff]
        %v2314 = vld [vmem:[#allocation3 + $0x508] sm:$0xff]
        %v2315 = vld [vmem:[#allocation3 + $0x510] sm:$0xff]
        %v2316 = vld [vmem:[#allocation3 + $0x518] sm:$0xff]
        %v2317 = vld [vmem:[#allocation3 + $0x520] sm:$0xff]
        %v2318 = vld [vmem:[#allocation3 + $0x528] sm:$0xff]
        %v2319 = vld [vmem:[#allocation3 + $0x530] sm:$0xff]
        %v2320 = vld [vmem:[#allocation3 + $0x538] sm:$0xff]
        %v2321 = vld [vmem:[#allocation3 + $0x540] sm:$0xff]
        %v2322 = vld [vmem:[#allocation3 + $0x548] sm:$0xff]
        %v2323 = vld [vmem:[#allocation3 + $0x550] sm:$0xff]
        %v2324 = vld [vmem:[#allocation3 + $0x558] sm:$0xff]
        %v2325 = vld [vmem:[#allocation3 + $0x560] sm:$0xff]
        %v2326 = vld [vmem:[#allocation3 + $0x568] sm:$0xff]
        %v2327 = vld [vmem:[#allocation3 + $0x570] sm:$0xff]
        %v2328 = vld [vmem:[#allocation3 + $0x578] sm:$0xff]
        %v2329 = vld [vmem:[#allocation3 + $0x580] sm:$0xff]
        %v2330 = vld [vmem:[#allocation3 + $0x588] sm:$0xff]
        %v2331 = vld [vmem:[#allocation3 + $0x590] sm:$0xff]
        %v2332 = vld [vmem:[#allocation3 + $0x598] sm:$0xff]
        %v2333 = vld [vmem:[#allocation3 + $0x5a0] sm:$0xff]
        %v2334 = vld [vmem:[#allocation3 + $0x5a8] sm:$0xff]
        %v2335 = vld [vmem:[#allocation3 + $0x5b0] sm:$0xff]
        %v2336 = vld [vmem:[#allocation3 + $0x5b8] sm:$0xff]
        %v2337 = vld [vmem:[#allocation3 + $0x5c0] sm:$0xff]
        %v2338 = vld [vmem:[#allocation3 + $0x5c8] sm:$0xff]
        %v2339 = vld [vmem:[#allocation3 + $0x5d0] sm:$0xff]
        %v2340 = vld [vmem:[#allocation3 + $0x5d8] sm:$0xff]
        %v2341 = vld [vmem:[#allocation3 + $0x5e0] sm:$0xff]
        %v2342 = vld [vmem:[#allocation3 + $0x5e8] sm:$0xff]
        %v2343 = vld [vmem:[#allocation3 + $0x5f0] sm:$0xff]
        %v2344 = vld [vmem:[#allocation3 + $0x5f8] sm:$0xff]
        %v2345 = vld [vmem:[#allocation3 + $0x600] sm:$0xff]
        %v2346 = vld [vmem:[#allocation3 + $0x608] sm:$0xff]
        %v2347 = vld [vmem:[#allocation3 + $0x610] sm:$0xff]
        %v2348 = vld [vmem:[#allocation3 + $0x618] sm:$0xff]
        %v2349 = vld [vmem:[#allocation3 + $0x620] sm:$0xff]
        %v2350 = vld [vmem:[#allocation3 + $0x628] sm:$0xff]
        %v2351 = vld [vmem:[#allocation3 + $0x630] sm:$0xff]
        %v2352 = vld [vmem:[#allocation3 + $0x638] sm:$0xff]
        %v2353 = vld [vmem:[#allocation3 + $0x640] sm:$0xff]
        %v2354 = vld [vmem:[#allocation3 + $0x648] sm:$0xff]
        %v2355 = vld [vmem:[#allocation3 + $0x650] sm:$0xff]
        %v2356 = vld [vmem:[#allocation3 + $0x658] sm:$0xff]
        %v2357 = vld [vmem:[#allocation3 + $0x660] sm:$0xff]
        %v2358 = vld [vmem:[#allocation3 + $0x668] sm:$0xff]
        %v2359 = vld [vmem:[#allocation3 + $0x670] sm:$0xff]
        %v2360 = vld [vmem:[#allocation9] sm:$0xf]
        %v2361 = vld [vmem:[#allocation9 + $0x4] sm:$0xf]
        %v2362 = vld [vmem:[#allocation9 + $0x8] sm:$0xf]
        %v2363 = vld [vmem:[#allocation9 + $0xc] sm:$0xf]
        %v2364 = vld [vmem:[#allocation9 + $0x10] sm:$0xf]
        %v2365 = vld [vmem:[#allocation9 + $0x14] sm:$0xf]
        %v2366 = vld [vmem:[#allocation9 + $0x18] sm:$0xf]
        %v2367 = vld [vmem:[#allocation9 + $0x1c] sm:$0xf]
        %v2368 = vld [vmem:[#allocation9 + $0x20] sm:$0xf]
        %v2369 = vld [vmem:[#allocation9 + $0x24] sm:$0xf]
        %v2370 = vld [vmem:[#allocation9 + $0x28] sm:$0xf]
        %v2371 = vld [vmem:[#allocation9 + $0x2c] sm:$0xf]
        %v2372 = vld [vmem:[#allocation9 + $0x30] sm:$0xf]
        %v2373 = vld [vmem:[#allocation9 + $0x34] sm:$0xf]
        %v2374 = vld [vmem:[#allocation9 + $0x38] sm:$0xf]
        %v2375 = vld [vmem:[#allocation9 + $0x3c] sm:$0xf]
        %v2376 = vld [vmem:[#allocation9 + $0x40] sm:$0xf]
        %v2377 = vld [vmem:[#allocation9 + $0x44] sm:$0xf]
        %v2378 = vld [vmem:[#allocation9 + $0x48] sm:$0xf]
        %v2379 = vld [vmem:[#allocation9 + $0x4c] sm:$0xf]
        %v2380 = vld [vmem:[#allocation9 + $0x50] sm:$0xf]
        %v2381 = vld [vmem:[#allocation9 + $0x54] sm:$0xf]
        %v2382 = vld [vmem:[#allocation9 + $0x58] sm:$0xf]
        %v2383 = vld [vmem:[#allocation9 + $0x5c] sm:$0xf]
        %v2384 = vld [vmem:[#allocation9 + $0x60] sm:$0xf]
        %v2385 = vld [vmem:[#allocation9 + $0x64] sm:$0xf]
        %v2386 = vld [vmem:[#allocation9 + $0x68] sm:$0xf]
        %v2387 = vld [vmem:[#allocation9 + $0x6c] sm:$0xf]
        %v2388 = vld [vmem:[#allocation9 + $0x70] sm:$0xf]
        %v2389 = vld [vmem:[#allocation9 + $0x74] sm:$0xf]
        %v2390 = vld [vmem:[#allocation9 + $0x78] sm:$0xf]
        %v2391 = vld [vmem:[#allocation9 + $0x7c] sm:$0xf]
        %v2392 = vld [vmem:[#allocation9 + $0x80] sm:$0xf]
        %v2393 = vld [vmem:[#allocation9 + $0x84] sm:$0xf]
        %v2394 = vld [vmem:[#allocation9 + $0x88] sm:$0xf]
        %v2395 = vld [vmem:[#allocation9 + $0x8c] sm:$0xf]
        %v2396 = vld [vmem:[#allocation9 + $0x90] sm:$0xf]
        %v2397 = vld [vmem:[#allocation9 + $0x94] sm:$0xf]
        %v2398 = vld [vmem:[#allocation9 + $0x98] sm:$0xf]
        %v2399 = vld [vmem:[#allocation9 + $0x9c] sm:$0xf]
        %v2400 = vld [vmem:[#allocation9 + $0xa0] sm:$0xf]
        %v2401 = vld [vmem:[#allocation9 + $0xa4] sm:$0xf]
        %v2402 = vld [vmem:[#allocation9 + $0xa8] sm:$0xf]
        %v2403 = vld [vmem:[#allocation9 + $0xac] sm:$0xf]
        %v2404 = vld [vmem:[#allocation9 + $0xb0] sm:$0xf]
        %v2405 = vld [vmem:[#allocation9 + $0xb4] sm:$0xf]
        %v2406 = vld [vmem:[#allocation9 + $0xb8] sm:$0xf]
        %v2407 = vld [vmem:[#allocation9 + $0xbc] sm:$0xf]
        %v2408 = vld [vmem:[#allocation9 + $0xc0] sm:$0xf]
        %v2409 = vld [vmem:[#allocation9 + $0xc4] sm:$0xf]
        %v2410 = vld [vmem:[#allocation9 + $0xc8] sm:$0xf]
        %v2411 = vld [vmem:[#allocation9 + $0xcc] sm:$0xf]
        %v2412 = vld [vmem:[#allocation9 + $0xd0] sm:$0xf]
        %v2413 = vld [vmem:[#allocation9 + $0xd4] sm:$0xf]
        %v2414 = vld [vmem:[#allocation9 + $0xd8] sm:$0xf]
        %v2415 = vld [vmem:[#allocation9 + $0xdc] sm:$0xf]
        %v2416 = vld [vmem:[#allocation9 + $0xe0] sm:$0xf]
        %v2417 = vld [vmem:[#allocation9 + $0xe4] sm:$0xf]
        %v2418 = vld [vmem:[#allocation9 + $0xe8] sm:$0xf]
        %v2419 = vld [vmem:[#allocation9 + $0xec] sm:$0xf]
        %v2420 = vld [vmem:[#allocation9 + $0xf0] sm:$0xf]
        %v2421 = vld [vmem:[#allocation9 + $0xf4] sm:$0xf]
        %v2422 = vld [vmem:[#allocation9 + $0xf8] sm:$0xf]
        %v2423 = vld [vmem:[#allocation9 + $0xfc] sm:$0xf]
        %v2424 = vld [vmem:[#allocation9 + $0x100] sm:$0xf]
        %v2425 = vld [vmem:[#allocation9 + $0x104] sm:$0xf]
        %v2426 = vld [vmem:[#allocation9 + $0x108] sm:$0xf]
        %v2427 = vld [vmem:[#allocation9 + $0x10c] sm:$0xf]
        %v2428 = vld [vmem:[#allocation9 + $0x110] sm:$0xf]
        %v2429 = vld [vmem:[#allocation9 + $0x114] sm:$0xf]
        %v2430 = vld [vmem:[#allocation9 + $0x118] sm:$0xf]
        %v2431 = vld [vmem:[#allocation9 + $0x11c] sm:$0xf]
        %v2432 = vld [vmem:[#allocation9 + $0x120] sm:$0xf]
        %v2433 = vld [vmem:[#allocation9 + $0x124] sm:$0xf]
        %v2434 = vld [vmem:[#allocation9 + $0x128] sm:$0xf]
        %v2435 = vld [vmem:[#allocation9 + $0x12c] sm:$0xf]
        %v2436 = vld [vmem:[#allocation9 + $0x130] sm:$0xf]
        %v2437 = vld [vmem:[#allocation9 + $0x134] sm:$0xf]
        %v2438 = vld [vmem:[#allocation9 + $0x138] sm:$0xf]
        %v2439 = vld [vmem:[#allocation9 + $0x13c] sm:$0xf]
        %v2440 = vld [vmem:[#allocation9 + $0x140] sm:$0xf]
        %v2441 = vld [vmem:[#allocation9 + $0x144] sm:$0xf]
        %v2442 = vld [vmem:[#allocation9 + $0x148] sm:$0xf]
        %v2443 = vld [vmem:[#allocation9 + $0x14c] sm:$0xf]
        %v2444 = vld [vmem:[#allocation9 + $0x150] sm:$0xf]
        %v2445 = vld [vmem:[#allocation9 + $0x154] sm:$0xf]
        %v2446 = vld [vmem:[#allocation9 + $0x158] sm:$0xf]
        %v2447 = vld [vmem:[#allocation9 + $0x15c] sm:$0xf]
        %v2448 = vld [vmem:[#allocation9 + $0x160] sm:$0xf]
        %v2449 = vld [vmem:[#allocation9 + $0x164] sm:$0xf]
        %v2450 = vld [vmem:[#allocation9 + $0x168] sm:$0xf]
        %v2451 = vld [vmem:[#allocation9 + $0x16c] sm:$0xf]
        %v2452 = vld [vmem:[#allocation9 + $0x170] sm:$0xf]
        %v2453 = vld [vmem:[#allocation9 + $0x174] sm:$0xf]
        %v2454 = vld [vmem:[#allocation9 + $0x178] sm:$0xf]
        %v2455 = vld [vmem:[#allocation9 + $0x17c] sm:$0xf]
        %v2456 = vld [vmem:[#allocation9 + $0x180] sm:$0xf]
        %v2457 = vld [vmem:[#allocation9 + $0x184] sm:$0xf]
        %v2458 = vld [vmem:[#allocation9 + $0x188] sm:$0xf]
        %v2459 = vld [vmem:[#allocation9 + $0x18c] sm:$0xf]
        %v2460 = vld [vmem:[#allocation9 + $0x190] sm:$0xf]
        %v2461 = vld [vmem:[#allocation9 + $0x194] sm:$0xf]
        %v2462 = vld [vmem:[#allocation9 + $0x198] sm:$0xf]
        %v2463 = vld [vmem:[#allocation9 + $0x19c] sm:$0xf]
        %v2464 = vld [vmem:[#allocation9 + $0x1a0] sm:$0xf]
        %v2465 = vld [vmem:[#allocation9 + $0x1a4] sm:$0xf]
        %v2466 = vld [vmem:[#allocation9 + $0x1a8] sm:$0xf]
        %v2467 = vld [vmem:[#allocation9 + $0x1ac] sm:$0xf]
        %v2468 = vld [vmem:[#allocation9 + $0x1b0] sm:$0xf]
        %v2469 = vld [vmem:[#allocation9 + $0x1b4] sm:$0xf]
        %v2470 = vld [vmem:[#allocation9 + $0x1b8] sm:$0xf]
        %v2471 = vld [vmem:[#allocation9 + $0x1bc] sm:$0xf]
        %v2472 = vld [vmem:[#allocation9 + $0x1c0] sm:$0xf]
        %v2473 = vld [vmem:[#allocation9 + $0x1c4] sm:$0xf]
        %v2474 = vld [vmem:[#allocation9 + $0x1c8] sm:$0xf]
        %v2475 = vld [vmem:[#allocation9 + $0x1cc] sm:$0xf]
        %v2476 = vld [vmem:[#allocation9 + $0x1d0] sm:$0xf]
        %v2477 = vld [vmem:[#allocation9 + $0x1d4] sm:$0xf]
        %v2478 = vld [vmem:[#allocation9 + $0x1d8] sm:$0xf]
        %v2479 = vld [vmem:[#allocation9 + $0x1dc] sm:$0xf]
        %v2480 = vld [vmem:[#allocation9 + $0x1e0] sm:$0xf]
        %v2481 = vld [vmem:[#allocation9 + $0x1e4] sm:$0xf]
        %v2482 = vld [vmem:[#allocation9 + $0x1e8] sm:$0xf]
        %v2483 = vld [vmem:[#allocation9 + $0x1ec] sm:$0xf]
        %v2484 = vld [vmem:[#allocation9 + $0x1f0] sm:$0xf]
        %v2485 = vld [vmem:[#allocation9 + $0x1f4] sm:$0xf]
        %v2486 = vld [vmem:[#allocation9 + $0x1f8] sm:$0xf]
        %v2487 = vld [vmem:[#allocation9 + $0x1fc] sm:$0xf]
        %v2488 = vld [vmem:[#allocation9 + $0x200] sm:$0xf]
        %v2489 = vld [vmem:[#allocation9 + $0x204] sm:$0xf]
        %v2490 = vld [vmem:[#allocation9 + $0x208] sm:$0xf]
        %v2491 = vld [vmem:[#allocation9 + $0x20c] sm:$0xf]
        %v2492 = vld [vmem:[#allocation9 + $0x210] sm:$0xf]
        %v2493 = vld [vmem:[#allocation9 + $0x214] sm:$0xf]
        %v2494 = vld [vmem:[#allocation9 + $0x218] sm:$0xf]
        %v2495 = vld [vmem:[#allocation9 + $0x21c] sm:$0xf]
        %v2496 = vld [vmem:[#allocation9 + $0x220] sm:$0xf]
        %v2497 = vld [vmem:[#allocation9 + $0x224] sm:$0xf]
        %v2498 = vld [vmem:[#allocation9 + $0x228] sm:$0xf]
        %v2499 = vld [vmem:[#allocation9 + $0x22c] sm:$0xf]
        %v2500 = vld [vmem:[#allocation9 + $0x230] sm:$0xf]
        %v2501 = vld [vmem:[#allocation9 + $0x234] sm:$0xf]
        %v2502 = vld [vmem:[#allocation9 + $0x238] sm:$0xf]
        %v2503 = vld [vmem:[#allocation9 + $0x23c] sm:$0xf]
        %v2648 = vunpack.c.l.b16 %v2360
        %v2649 = vunpack.c.l.b16 %v2361
        %v2650 = vunpack.c.l.b16 %v2362
        %v2651 = vunpack.c.l.b16 %v2363
        %v2652 = vunpack.c.l.b16 %v2364
        %v2653 = vunpack.c.l.b16 %v2365
        %v2654 = vunpack.c.l.b16 %v2366
        %v2655 = vunpack.c.l.b16 %v2367
        %v2656 = vunpack.c.l.b16 %v2368
        %v2657 = vunpack.c.l.b16 %v2369
        %v2658 = vunpack.c.l.b16 %v2370
        %v2659 = vunpack.c.l.b16 %v2371
        %v2660 = vunpack.c.l.b16 %v2372
        %v2661 = vunpack.c.l.b16 %v2373
        %v2662 = vunpack.c.l.b16 %v2374
        %v2663 = vunpack.c.l.b16 %v2375
        %v2664 = vunpack.c.l.b16 %v2376
        %v2665 = vunpack.c.l.b16 %v2377
        %v2666 = vunpack.c.l.b16 %v2378
        %v2667 = vunpack.c.l.b16 %v2379
        %v2668 = vunpack.c.l.b16 %v2380
        %v2669 = vunpack.c.l.b16 %v2381
        %v2670 = vunpack.c.l.b16 %v2382
        %v2671 = vunpack.c.l.b16 %v2383
        %v2672 = vunpack.c.l.b16 %v2384
        %v2673 = vunpack.c.l.b16 %v2385
        %v2674 = vunpack.c.l.b16 %v2386
        %v2675 = vunpack.c.l.b16 %v2387
        %v2676 = vunpack.c.l.b16 %v2388
        %v2677 = vunpack.c.l.b16 %v2389
        %v2678 = vunpack.c.l.b16 %v2390
        %v2679 = vunpack.c.l.b16 %v2391
        %v2680 = vunpack.c.l.b16 %v2392
        %v2681 = vunpack.c.l.b16 %v2393
        %v2682 = vunpack.c.l.b16 %v2394
        %v2683 = vunpack.c.l.b16 %v2395
        %v2684 = vunpack.c.l.b16 %v2396
        %v2685 = vunpack.c.l.b16 %v2397
        %v2686 = vunpack.c.l.b16 %v2398
        %v2687 = vunpack.c.l.b16 %v2399
        %v2688 = vunpack.c.l.b16 %v2400
        %v2689 = vunpack.c.l.b16 %v2401
        %v2690 = vunpack.c.l.b16 %v2402
        %v2691 = vunpack.c.l.b16 %v2403
        %v2692 = vunpack.c.l.b16 %v2404
        %v2693 = vunpack.c.l.b16 %v2405
        %v2694 = vunpack.c.l.b16 %v2406
        %v2695 = vunpack.c.l.b16 %v2407
        %v2696 = vunpack.c.l.b16 %v2408
        %v2697 = vunpack.c.l.b16 %v2409
        %v2698 = vunpack.c.l.b16 %v2410
        %v2699 = vunpack.c.l.b16 %v2411
        %v2700 = vunpack.c.l.b16 %v2412
        %v2701 = vunpack.c.l.b16 %v2413
        %v2702 = vunpack.c.l.b16 %v2414
        %v2703 = vunpack.c.l.b16 %v2415
        %v2704 = vunpack.c.l.b16 %v2416
        %v2705 = vunpack.c.l.b16 %v2417
        %v2706 = vunpack.c.l.b16 %v2418
        %v2707 = vunpack.c.l.b16 %v2419
        %v2708 = vunpack.c.l.b16 %v2420
        %v2709 = vunpack.c.l.b16 %v2421
        %v2710 = vunpack.c.l.b16 %v2422
        %v2711 = vunpack.c.l.b16 %v2423
        %v2712 = vunpack.c.l.b16 %v2424
        %v2713 = vunpack.c.l.b16 %v2425
        %v2714 = vunpack.c.l.b16 %v2426
        %v2715 = vunpack.c.l.b16 %v2427
        %v2716 = vunpack.c.l.b16 %v2428
        %v2717 = vunpack.c.l.b16 %v2429
        %v2718 = vunpack.c.l.b16 %v2430
        %v2719 = vunpack.c.l.b16 %v2431
        %v2720 = vunpack.c.l.b16 %v2432
        %v2721 = vunpack.c.l.b16 %v2433
        %v2722 = vunpack.c.l.b16 %v2434
        %v2723 = vunpack.c.l.b16 %v2435
        %v2724 = vunpack.c.l.b16 %v2436
        %v2725 = vunpack.c.l.b16 %v2437
        %v2726 = vunpack.c.l.b16 %v2438
        %v2727 = vunpack.c.l.b16 %v2439
        %v2728 = vunpack.c.l.b16 %v2440
        %v2729 = vunpack.c.l.b16 %v2441
        %v2730 = vunpack.c.l.b16 %v2442
        %v2731 = vunpack.c.l.b16 %v2443
        %v2732 = vunpack.c.l.b16 %v2444
        %v2733 = vunpack.c.l.b16 %v2445
        %v2734 = vunpack.c.l.b16 %v2446
        %v2735 = vunpack.c.l.b16 %v2447
        %v2736 = vunpack.c.l.b16 %v2448
        %v2737 = vunpack.c.l.b16 %v2449
        %v2738 = vunpack.c.l.b16 %v2450
        %v2739 = vunpack.c.l.b16 %v2451
        %v2740 = vunpack.c.l.b16 %v2452
        %v2741 = vunpack.c.l.b16 %v2453
        %v2742 = vunpack.c.l.b16 %v2454
        %v2743 = vunpack.c.l.b16 %v2455
        %v2744 = vunpack.c.l.b16 %v2456
        %v2745 = vunpack.c.l.b16 %v2457
        %v2746 = vunpack.c.l.b16 %v2458
        %v2747 = vunpack.c.l.b16 %v2459
        %v2748 = vunpack.c.l.b16 %v2460
        %v2749 = vunpack.c.l.b16 %v2461
        %v2750 = vunpack.c.l.b16 %v2462
        %v2751 = vunpack.c.l.b16 %v2463
        %v2752 = vunpack.c.l.b16 %v2464
        %v2753 = vunpack.c.l.b16 %v2465
        %v2754 = vunpack.c.l.b16 %v2466
        %v2755 = vunpack.c.l.b16 %v2467
        %v2756 = vunpack.c.l.b16 %v2468
        %v2757 = vunpack.c.l.b16 %v2469
        %v2758 = vunpack.c.l.b16 %v2470
        %v2759 = vunpack.c.l.b16 %v2471
        %v2760 = vunpack.c.l.b16 %v2472
        %v2761 = vunpack.c.l.b16 %v2473
        %v2762 = vunpack.c.l.b16 %v2474
        %v2763 = vunpack.c.l.b16 %v2475
        %v2764 = vunpack.c.l.b16 %v2476
        %v2765 = vunpack.c.l.b16 %v2477
        %v2766 = vunpack.c.l.b16 %v2478
        %v2767 = vunpack.c.l.b16 %v2479
        %v2768 = vunpack.c.l.b16 %v2480
        %v2769 = vunpack.c.l.b16 %v2481
        %v2770 = vunpack.c.l.b16 %v2482
        %v2771 = vunpack.c.l.b16 %v2483
        %v2772 = vunpack.c.l.b16 %v2484
        %v2773 = vunpack.c.l.b16 %v2485
        %v2774 = vunpack.c.l.b16 %v2486
        %v2775 = vunpack.c.l.b16 %v2487
        %v2776 = vunpack.c.l.b16 %v2488
        %v2777 = vunpack.c.l.b16 %v2489
        %v2778 = vunpack.c.l.b16 %v2490
        %v2779 = vunpack.c.l.b16 %v2491
        %v2780 = vunpack.c.l.b16 %v2492
        %v2781 = vunpack.c.l.b16 %v2493
        %v2782 = vunpack.c.l.b16 %v2494
        %v2783 = vunpack.c.l.b16 %v2495
        %v2784 = vunpack.c.l.b16 %v2496
        %v2785 = vunpack.c.l.b16 %v2497
        %v2786 = vunpack.c.l.b16 %v2498
        %v2787 = vunpack.c.l.b16 %v2499
        %v2788 = vunpack.c.l.b16 %v2500
        %v2789 = vunpack.c.l.b16 %v2501
        %v2790 = vunpack.c.l.b16 %v2502
        %v2791 = vunpack.c.l.b16 %v2503
        %v2792 = vpack.c.b16 %v2649, %v2648
        %v2793 = vpack.c.b16 %v2651, %v2650
        %v2794 = vpack.c.b16 %v2653, %v2652
        %v2795 = vpack.c.b16 %v2655, %v2654
        %v2796 = vpack.c.b16 %v2657, %v2656
        %v2797 = vpack.c.b16 %v2659, %v2658
        %v2798 = vpack.c.b16 %v2661, %v2660
        %v2799 = vpack.c.b16 %v2663, %v2662
        %v2800 = vpack.c.b16 %v2665, %v2664
        %v2801 = vpack.c.b16 %v2667, %v2666
        %v2802 = vpack.c.b16 %v2669, %v2668
        %v2803 = vpack.c.b16 %v2671, %v2670
        %v2804 = vpack.c.b16 %v2673, %v2672
        %v2805 = vpack.c.b16 %v2675, %v2674
        %v2806 = vpack.c.b16 %v2677, %v2676
        %v2807 = vpack.c.b16 %v2679, %v2678
        %v2808 = vpack.c.b16 %v2681, %v2680
        %v2809 = vpack.c.b16 %v2683, %v2682
        %v2810 = vpack.c.b16 %v2685, %v2684
        %v2811 = vpack.c.b16 %v2687, %v2686
        %v2812 = vpack.c.b16 %v2689, %v2688
        %v2813 = vpack.c.b16 %v2691, %v2690
        %v2814 = vpack.c.b16 %v2693, %v2692
        %v2815 = vpack.c.b16 %v2695, %v2694
        %v2816 = vpack.c.b16 %v2697, %v2696
        %v2817 = vpack.c.b16 %v2699, %v2698
        %v2818 = vpack.c.b16 %v2701, %v2700
        %v2819 = vpack.c.b16 %v2703, %v2702
        %v2820 = vpack.c.b16 %v2705, %v2704
        %v2821 = vpack.c.b16 %v2707, %v2706
        %v2822 = vpack.c.b16 %v2709, %v2708
        %v2823 = vpack.c.b16 %v2711, %v2710
        %v2824 = vpack.c.b16 %v2713, %v2712
        %v2825 = vpack.c.b16 %v2715, %v2714
        %v2826 = vpack.c.b16 %v2717, %v2716
        %v2827 = vpack.c.b16 %v2719, %v2718
        %v2828 = vpack.c.b16 %v2721, %v2720
        %v2829 = vpack.c.b16 %v2723, %v2722
        %v2830 = vpack.c.b16 %v2725, %v2724
        %v2831 = vpack.c.b16 %v2727, %v2726
        %v2832 = vpack.c.b16 %v2729, %v2728
        %v2833 = vpack.c.b16 %v2731, %v2730
        %v2834 = vpack.c.b16 %v2733, %v2732
        %v2835 = vpack.c.b16 %v2735, %v2734
        %v2836 = vpack.c.b16 %v2737, %v2736
        %v2837 = vpack.c.b16 %v2739, %v2738
        %v2838 = vpack.c.b16 %v2741, %v2740
        %v2839 = vpack.c.b16 %v2743, %v2742
        %v2840 = vpack.c.b16 %v2745, %v2744
        %v2841 = vpack.c.b16 %v2747, %v2746
        %v2842 = vpack.c.b16 %v2749, %v2748
        %v2843 = vpack.c.b16 %v2751, %v2750
        %v2844 = vpack.c.b16 %v2753, %v2752
        %v2845 = vpack.c.b16 %v2755, %v2754
        %v2846 = vpack.c.b16 %v2757, %v2756
        %v2847 = vpack.c.b16 %v2759, %v2758
        %v2848 = vpack.c.b16 %v2761, %v2760
        %v2849 = vpack.c.b16 %v2763, %v2762
        %v2850 = vpack.c.b16 %v2765, %v2764
        %v2851 = vpack.c.b16 %v2767, %v2766
        %v2852 = vpack.c.b16 %v2769, %v2768
        %v2853 = vpack.c.b16 %v2771, %v2770
        %v2854 = vpack.c.b16 %v2773, %v2772
        %v2855 = vpack.c.b16 %v2775, %v2774
        %v2856 = vpack.c.b16 %v2777, %v2776
        %v2857 = vpack.c.b16 %v2779, %v2778
        %v2858 = vpack.c.b16 %v2781, %v2780
        %v2859 = vpack.c.b16 %v2783, %v2782
        %v2860 = vpack.c.b16 %v2785, %v2784
        %v2861 = vpack.c.b16 %v2787, %v2786
        %v2862 = vpack.c.b16 %v2789, %v2788
        %v2863 = vpack.c.b16 %v2791, %v2790
        %2936 = vmatprep.subr.bf16.mxu0 0
        %2937 = vmatpush1.bf16.msra.mxu0 %v2792
        %2938 = vmatprep.subr.bf16.mxu0 0
        %2939 = vmatpush1.bf16.msra.mxu0 %v2793
        %2940 = vmatprep.subr.bf16.mxu0 0
        %2941 = vmatpush1.bf16.msra.mxu0 %v2794
        %2942 = vmatprep.subr.bf16.mxu0 0
        %2943 = vmatpush1.bf16.msra.mxu0 %v2795
        %2944 = vmatprep.subr.bf16.mxu0 0
        %2945 = vmatpush1.bf16.msra.mxu0 %v2796
        %2946 = vmatprep.subr.bf16.mxu0 0
        %2947 = vmatpush1.bf16.msra.mxu0 %v2797
        %2948 = vmatprep.subr.bf16.mxu0 0
        %2949 = vmatpush1.bf16.msra.mxu0 %v2798
        %2950 = vmatprep.subr.bf16.mxu0 0
        %2951 = vmatpush1.bf16.msra.mxu0 %v2799
        %2952 = vmatprep.subr.bf16.mxu0 0
        %2953 = vmatpush1.bf16.msra.mxu0 %v2800
        %2954 = vmatprep.subr.bf16.mxu0 0
        %2955 = vmatpush1.bf16.msra.mxu0 %v2801
        %2956 = vmatprep.subr.bf16.mxu0 0
        %2957 = vmatpush1.bf16.msra.mxu0 %v2802
        %2958 = vmatprep.subr.bf16.mxu0 0
        %2959 = vmatpush1.bf16.msra.mxu0 %v2803
        %2960 = vmatprep.subr.bf16.mxu0 0
        %2961 = vmatpush1.bf16.msra.mxu0 %v2804
        %2962 = vmatprep.subr.bf16.mxu0 0
        %2963 = vmatpush1.bf16.msra.mxu0 %v2805
        %2964 = vmatprep.subr.bf16.mxu0 0
        %2965 = vmatpush1.bf16.msra.mxu0 %v2806
        %2966 = vmatprep.subr.bf16.mxu0 0
        %2967 = vmatpush1.bf16.msra.mxu0 %v2807
        %2968 = vmatprep.mubr.bf16.mxu0 %v2154
        %2969 = vmatmul.mubr.bf16.gmra.mrb[0].mxu0 %v2153
        %v2970 = vpop.f32.mrb[0].mxu0
        %v2971 = vadd.f32 0.0, %v2970
        %v2972 = vpop.f32.mrb[0].mxu0
        %v2973 = vpop.f32.mrb[0].mxu0
        %v2974 = vadd.f32 0.0, %v2973
        %v2975 = vpop.f32.mrb[0].mxu0
        %2976 = vmatprep.mubr.bf16.mxu0 %v2163
        %2977 = vmatmul.mubr.bf16.gmra.mrb[0].mxu0 %v2162
        %v2978 = vpop.f32.mrb[0].mxu0
        %v2979 = vadd.f32 0.0, %v2978
        %v2980 = vpop.f32.mrb[0].mxu0
        %v2981 = vpop.f32.mrb[0].mxu0
        %v2982 = vadd.f32 0.0, %v2981
        %v2983 = vpop.f32.mrb[0].mxu0
        %2984 = vmatprep.mubr.bf16.mxu0 %v2172
        %2985 = vmatmul.mubr.bf16.gmra.mrb[0].mxu0 %v2171
        %v2986 = vpop.f32.mrb[0].mxu0
        %v2987 = vadd.f32 0.0, %v2986
        %v2988 = vpop.f32.mrb[0].mxu0
        %v2989 = vpop.f32.mrb[0].mxu0
        %v2990 = vadd.f32 0.0, %v2989
        %v2991 = vpop.f32.mrb[0].mxu0
        %2992 = vmatprep.mubr.bf16.mxu0 %v2181
        %2993 = vmatmul.mubr.bf16.gmra.mrb[0].mxu0 %v2180
        %v2994 = vpop.f32.mrb[0].mxu0
        %v2995 = vadd.f32 0.0, %v2994
        %v2996 = vpop.f32.mrb[0].mxu0
        %v2997 = vpop.f32.mrb[0].mxu0
        %v2998 = vadd.f32 0.0, %v2997
        %v2999 = vpop.f32.mrb[0].mxu0
        %3000 = vmatprep.mubr.bf16.mxu0 %v2190
        %3001 = vmatmul.mubr.bf16.gmra.mrb[0].mxu0 %v2189
        %v3002 = vpop.f32.mrb[0].mxu0
        %v3003 = vadd.f32 0.0, %v3002
        %v3004 = vpop.f32.mrb[0].mxu0
        %v3005 = vpop.f32.mrb[0].mxu0
        %v3006 = vadd.f32 0.0, %v3005
        %v3007 = vpop.f32.mrb[0].mxu0
        %3008 = vmatprep.mubr.bf16.mxu0 %v2199
        %3009 = vmatmul.mubr.bf16.gmra.mrb[0].mxu0 %v2198
        %v3010 = vpop.f32.mrb[0].mxu0
        %v3011 = vadd.f32 0.0, %v3010
        %v3012 = vpop.f32.mrb[0].mxu0
        %v3013 = vpop.f32.mrb[0].mxu0
        %v3014 = vadd.f32 0.0, %v3013
        %v3015 = vpop.f32.mrb[0].mxu0
        %3016 = vmatprep.mubr.bf16.mxu0 %v2208
        %3017 = vmatmul.mubr.bf16.gmra.mrb[0].mxu0 %v2207
        %v3018 = vpop.f32.mrb[0].mxu0
        %v3019 = vadd.f32 0.0, %v3018
        %v3020 = vpop.f32.mrb[0].mxu0
        %v3021 = vpop.f32.mrb[0].mxu0
        %v3022 = vadd.f32 0.0, %v3021
        %v3023 = vpop.f32.mrb[0].mxu0
        %3024 = vmatprep.mubr.bf16.mxu0 %v2217
        %3025 = vmatmul.mubr.bf16.gmra.mrb[0].mxu0 %v2216
        %v3026 = vpop.f32.mrb[0].mxu0
        %v3027 = vadd.f32 0.0, %v3026
        %v3028 = vpop.f32.mrb[0].mxu0
        %v3029 = vpop.f32.mrb[0].mxu0
        %v3030 = vadd.f32 0.0, %v3029
        %v3031 = vpop.f32.mrb[0].mxu0
        %3032 = vmatprep.mubr.bf16.mxu0 %v2226
        %3033 = vmatmul.mubr.bf16.gmra.mrb[0].mxu0 %v2225
        %v3034 = vpop.f32.mrb[0].mxu0
        %v3035 = vadd.f32 0.0, %v3034
        %v3036 = vpop.f32.mrb[0].mxu0
        %v3037 = vpop.f32.mrb[0].mxu0
        %v3038 = vadd.f32 0.0, %v3037
        %v3039 = vpop.f32.mrb[0].mxu0
        %3040 = vmatprep.mubr.bf16.mxu0 %v2235
        %3041 = vmatmul.mubr.bf16.gmra.mrb[0].mxu0 %v2234
        %v3042 = vpop.f32.mrb[0].mxu0
        %v3043 = vadd.f32 0.0, %v3042
        %v3044 = vpop.f32.mrb[0].mxu0
        %v3045 = vpop.f32.mrb[0].mxu0
        %v3046 = vadd.f32 0.0, %v3045
        %v3047 = vpop.f32.mrb[0].mxu0
        %3048 = vmatprep.mubr.bf16.mxu0 %v2244
        %3049 = vmatmul.mubr.bf16.gmra.mrb[0].mxu0 %v2243
        %v3050 = vpop.f32.mrb[0].mxu0
        %v3051 = vadd.f32 0.0, %v3050
        %v3052 = vpop.f32.mrb[0].mxu0
        %v3053 = vpop.f32.mrb[0].mxu0
        %v3054 = vadd.f32 0.0, %v3053
        %v3055 = vpop.f32.mrb[0].mxu0
        %3056 = vmatprep.mubr.bf16.mxu0 %v2253
        %3057 = vmatmul.mubr.bf16.gmra.mrb[0].mxu0 %v2252
        %v3058 = vpop.f32.mrb[0].mxu0
        %v3059 = vadd.f32 0.0, %v3058
        %v3060 = vpop.f32.mrb[0].mxu0
        %v3061 = vpop.f32.mrb[0].mxu0
        %v3062 = vadd.f32 0.0, %v3061
        %v3063 = vpop.f32.mrb[0].mxu0
        %3064 = vmatprep.mubr.bf16.mxu0 %v2262
        %3065 = vmatmul.mubr.bf16.gmra.mrb[0].mxu0 %v2261
        %v3066 = vpop.f32.mrb[0].mxu0
        %v3067 = vadd.f32 0.0, %v3066
        %v3068 = vpop.f32.mrb[0].mxu0
        %v3069 = vpop.f32.mrb[0].mxu0
        %v3070 = vadd.f32 0.0, %v3069
        %v3071 = vpop.f32.mrb[0].mxu0
        %3072 = vmatprep.mubr.bf16.mxu0 %v2271
        %3073 = vmatmul.mubr.bf16.gmra.mrb[0].mxu0 %v2270
        %v3074 = vpop.f32.mrb[0].mxu0
        %v3075 = vadd.f32 0.0, %v3074
        %v3076 = vpop.f32.mrb[0].mxu0
        %v3077 = vpop.f32.mrb[0].mxu0
        %v3078 = vadd.f32 0.0, %v3077
        %v3079 = vpop.f32.mrb[0].mxu0
        %3080 = vmatprep.mubr.bf16.mxu0 %v2280
        %3081 = vmatmul.mubr.bf16.gmra.mrb[0].mxu0 %v2279
        %v3082 = vpop.f32.mrb[0].mxu0
        %v3083 = vadd.f32 0.0, %v3082
        %v3084 = vpop.f32.mrb[0].mxu0
        %v3085 = vpop.f32.mrb[0].mxu0
        %v3086 = vadd.f32 0.0, %v3085
        %v3087 = vpop.f32.mrb[0].mxu0
        %3088 = vmatprep.mubr.bf16.mxu0 %v2289
        %3089 = vmatmul.mubr.bf16.gmra.mrb[0].mxu0 %v2288
        %v3090 = vpop.f32.mrb[0].mxu0
        %v3091 = vadd.f32 0.0, %v3090
        %v3092 = vpop.f32.mrb[0].mxu0
        %v3093 = vpop.f32.mrb[0].mxu0
        %v3094 = vadd.f32 0.0, %v3093
        %v3095 = vpop.f32.mrb[0].mxu0
        %3096 = vmatprep.mubr.bf16.mxu0 %v2298
        %3097 = vmatmul.mubr.bf16.gmra.mrb[0].mxu0 %v2297
        %v3098 = vpop.f32.mrb[0].mxu0
        %v3099 = vadd.f32 0.0, %v3098
        %v3100 = vpop.f32.mrb[0].mxu0
        %v3101 = vpop.f32.mrb[0].mxu0
        %v3102 = vadd.f32 0.0, %v3101
        %v3103 = vpop.f32.mrb[0].mxu0
        %3104 = vmatprep.mubr.bf16.mxu0 %v2307
        %3105 = vmatmul.mubr.bf16.gmra.mrb[0].mxu0 %v2306
        %v3106 = vpop.f32.mrb[0].mxu0
        %v3107 = vadd.f32 0.0, %v3106
        %v3108 = vpop.f32.mrb[0].mxu0
        %v3109 = vpop.f32.mrb[0].mxu0
        %v3110 = vadd.f32 0.0, %v3109
        %v3111 = vpop.f32.mrb[0].mxu0
        %3112 = vmatprep.mubr.bf16.mxu0 %v2316
        %3113 = vmatmul.mubr.bf16.gmra.mrb[0].mxu0 %v2315
        %v3114 = vpop.f32.mrb[0].mxu0
        %v3115 = vadd.f32 0.0, %v3114
        %v3116 = vpop.f32.mrb[0].mxu0
        %v3117 = vpop.f32.mrb[0].mxu0
        %v3118 = vadd.f32 0.0, %v3117
        %v3119 = vpop.f32.mrb[0].mxu0
        %3120 = vmatprep.mubr.bf16.mxu0 %v2325
        %3121 = vmatmul.mubr.bf16.gmra.mrb[0].mxu0 %v2324
        %v3122 = vpop.f32.mrb[0].mxu0
        %v3123 = vadd.f32 0.0, %v3122
        %v3124 = vpop.f32.mrb[0].mxu0
        %v3125 = vpop.f32.mrb[0].mxu0
        %v3126 = vadd.f32 0.0, %v3125
        %v3127 = vpop.f32.mrb[0].mxu0
        %3128 = vmatprep.mubr.bf16.mxu0 %v2334
        %3129 = vmatmul.mubr.bf16.gmra.mrb[0].mxu0 %v2333
        %v3130 = vpop.f32.mrb[0].mxu0
        %v3131 = vadd.f32 0.0, %v3130
        %v3132 = vpop.f32.mrb[0].mxu0
        %v3133 = vpop.f32.mrb[0].mxu0
        %v3134 = vadd.f32 0.0, %v3133
        %v3135 = vpop.f32.mrb[0].mxu0
        %3136 = vmatprep.mubr.bf16.mxu0 %v2343
        %3137 = vmatmul.mubr.bf16.gmra.mrb[0].mxu0 %v2342
        %v3138 = vpop.f32.mrb[0].mxu0
        %v3139 = vadd.f32 0.0, %v3138
        %v3140 = vpop.f32.mrb[0].mxu0
        %v3141 = vpop.f32.mrb[0].mxu0
        %v3142 = vadd.f32 0.0, %v3141
        %v3143 = vpop.f32.mrb[0].mxu0
        %3144 = vmatprep.mubr.bf16.mxu0 %v2352
        %3145 = vmatmul.mubr.bf16.gmra.mrb[0].mxu0 %v2351
        %v3146 = vpop.f32.mrb[0].mxu0
        %v3147 = vadd.f32 0.0, %v3146
        %v3148 = vpop.f32.mrb[0].mxu0
        %v3149 = vpop.f32.mrb[0].mxu0
        %v3150 = vadd.f32 0.0, %v3149
        %v3151 = vpop.f32.mrb[0].mxu0
        %3152 = vdwg.mxu0
        %3153 = vmatprep.subr.bf16.mxu0 0
        %3154 = vmatpush1.bf16.msra.mxu0 %v2808
        %3155 = vmatprep.subr.bf16.mxu0 0
        %3156 = vmatpush1.bf16.msra.mxu0 %v2809
        %3157 = vmatprep.subr.bf16.mxu0 0
        %3158 = vmatpush1.bf16.msra.mxu0 %v2810
        %3159 = vmatprep.subr.bf16.mxu0 0
        %3160 = vmatpush1.bf16.msra.mxu0 %v2811
        %3161 = vmatprep.subr.bf16.mxu0 0
        %3162 = vmatpush1.bf16.msra.mxu0 %v2812
        %3163 = vmatprep.subr.bf16.mxu0 0
        %3164 = vmatpush1.bf16.msra.mxu0 %v2813
        %3165 = vmatprep.subr.bf16.mxu0 0
        %3166 = vmatpush1.bf16.msra.mxu0 %v2814
        %3167 = vmatprep.subr.bf16.mxu0 0
        %3168 = vmatpush1.bf16.msra.mxu0 %v2815
        %3169 = vmatprep.subr.bf16.mxu0 0
        %3170 = vmatpush1.bf16.msra.mxu0 %v2816
        %3171 = vmatprep.subr.bf16.mxu0 0
        %3172 = vmatpush1.bf16.msra.mxu0 %v2817
        %3173 = vmatprep.subr.bf16.mxu0 0
        %3174 = vmatpush1.bf16.msra.mxu0 %v2818
        %3175 = vmatprep.subr.bf16.mxu0 0
        %3176 = vmatpush1.bf16.msra.mxu0 %v2819
        %3177 = vmatprep.subr.bf16.mxu0 0
        %3178 = vmatpush1.bf16.msra.mxu0 %v2820
        %3179 = vmatprep.subr.bf16.mxu0 0
        %3180 = vmatpush1.bf16.msra.mxu0 %v2821
        %3181 = vmatprep.subr.bf16.mxu0 0
        %3182 = vmatpush1.bf16.msra.mxu0 %v2822
        %3183 = vmatprep.subr.bf16.mxu0 0
        %3184 = vmatpush1.bf16.msra.mxu0 %v2823
        %3185 = vmatprep.mubr.bf16.mxu0 %v2156
        %3186 = vmatmul.mubr.bf16.gmra.mrb[0].mxu0 %v2155
        %v3187 = vpop.f32.mrb[0].mxu0
        %v3188 = vadd.f32 %v2971, %v3187
        %v3189 = vpop.f32.mrb[0].mxu0
        %v3190 = vpop.f32.mrb[0].mxu0
        %v3191 = vadd.f32 %v2974, %v3190
        %v3192 = vpop.f32.mrb[0].mxu0
        %3193 = vmatprep.mubr.bf16.mxu0 %v2165
        %3194 = vmatmul.mubr.bf16.gmra.mrb[0].mxu0 %v2164
        %v3195 = vpop.f32.mrb[0].mxu0
        %v3196 = vadd.f32 %v2979, %v3195
        %v3197 = vpop.f32.mrb[0].mxu0
        %v3198 = vpop.f32.mrb[0].mxu0
        %v3199 = vadd.f32 %v2982, %v3198
        %v3200 = vpop.f32.mrb[0].mxu0
        %3201 = vmatprep.mubr.bf16.mxu0 %v2174
        %3202 = vmatmul.mubr.bf16.gmra.mrb[0].mxu0 %v2173
        %v3203 = vpop.f32.mrb[0].mxu0
        %v3204 = vadd.f32 %v2987, %v3203
        %v3205 = vpop.f32.mrb[0].mxu0
        %v3206 = vpop.f32.mrb[0].mxu0
        %v3207 = vadd.f32 %v2990, %v3206
        %v3208 = vpop.f32.mrb[0].mxu0
        %3209 = vmatprep.mubr.bf16.mxu0 %v2183
        %3210 = vmatmul.mubr.bf16.gmra.mrb[0].mxu0 %v2182
        %v3211 = vpop.f32.mrb[0].mxu0
        %v3212 = vadd.f32 %v2995, %v3211
        %v3213 = vpop.f32.mrb[0].mxu0
        %v3214 = vpop.f32.mrb[0].mxu0
        %v3215 = vadd.f32 %v2998, %v3214
        %v3216 = vpop.f32.mrb[0].mxu0
        %3217 = vmatprep.mubr.bf16.mxu0 %v2192
        %3218 = vmatmul.mubr.bf16.gmra.mrb[0].mxu0 %v2191
        %v3219 = vpop.f32.mrb[0].mxu0
        %v3220 = vadd.f32 %v3003, %v3219
        %v3221 = vpop.f32.mrb[0].mxu0
        %v3222 = vpop.f32.mrb[0].mxu0
        %v3223 = vadd.f32 %v3006, %v3222
        %v3224 = vpop.f32.mrb[0].mxu0
        %3225 = vmatprep.mubr.bf16.mxu0 %v2201
        %3226 = vmatmul.mubr.bf16.gmra.mrb[0].mxu0 %v2200
        %v3227 = vpop.f32.mrb[0].mxu0
        %v3228 = vadd.f32 %v3011, %v3227
        %v3229 = vpop.f32.mrb[0].mxu0
        %v3230 = vpop.f32.mrb[0].mxu0
        %v3231 = vadd.f32 %v3014, %v3230
        %v3232 = vpop.f32.mrb[0].mxu0
        %3233 = vmatprep.mubr.bf16.mxu0 %v2210
        %3234 = vmatmul.mubr.bf16.gmra.mrb[0].mxu0 %v2209
        %v3235 = vpop.f32.mrb[0].mxu0
        %v3236 = vadd.f32 %v3019, %v3235
        %v3237 = vpop.f32.mrb[0].mxu0
        %v3238 = vpop.f32.mrb[0].mxu0
        %v3239 = vadd.f32 %v3022, %v3238
        %v3240 = vpop.f32.mrb[0].mxu0
        %3241 = vmatprep.mubr.bf16.mxu0 %v2219
        %3242 = vmatmul.mubr.bf16.gmra.mrb[0].mxu0 %v2218
        %v3243 = vpop.f32.mrb[0].mxu0
        %v3244 = vadd.f32 %v3027, %v3243
        %v3245 = vpop.f32.mrb[0].mxu0
        %v3246 = vpop.f32.mrb[0].mxu0
        %v3247 = vadd.f32 %v3030, %v3246
        %v3248 = vpop.f32.mrb[0].mxu0
        %3249 = vmatprep.mubr.bf16.mxu0 %v2228
        %3250 = vmatmul.mubr.bf16.gmra.mrb[0].mxu0 %v2227
        %v3251 = vpop.f32.mrb[0].mxu0
        %v3252 = vadd.f32 %v3035, %v3251
        %v3253 = vpop.f32.mrb[0].mxu0
        %v3254 = vpop.f32.mrb[0].mxu0
        %v3255 = vadd.f32 %v3038, %v3254
        %v3256 = vpop.f32.mrb[0].mxu0
        %3257 = vmatprep.mubr.bf16.mxu0 %v2237
        %3258 = vmatmul.mubr.bf16.gmra.mrb[0].mxu0 %v2236
        %v3259 = vpop.f32.mrb[0].mxu0
        %v3260 = vadd.f32 %v3043, %v3259
        %v3261 = vpop.f32.mrb[0].mxu0
        %v3262 = vpop.f32.mrb[0].mxu0
        %v3263 = vadd.f32 %v3046, %v3262
        %v3264 = vpop.f32.mrb[0].mxu0
        %3265 = vmatprep.mubr.bf16.mxu0 %v2246
        %3266 = vmatmul.mubr.bf16.gmra.mrb[0].mxu0 %v2245
        %v3267 = vpop.f32.mrb[0].mxu0
        %v3268 = vadd.f32 %v3051, %v3267
        %v3269 = vpop.f32.mrb[0].mxu0
        %v3270 = vpop.f32.mrb[0].mxu0
        %v3271 = vadd.f32 %v3054, %v3270
        %v3272 = vpop.f32.mrb[0].mxu0
        %3273 = vmatprep.mubr.bf16.mxu0 %v2255
        %3274 = vmatmul.mubr.bf16.gmra.mrb[0].mxu0 %v2254
        %v3275 = vpop.f32.mrb[0].mxu0
        %v3276 = vadd.f32 %v3059, %v3275
        %v3277 = vpop.f32.mrb[0].mxu0
        %v3278 = vpop.f32.mrb[0].mxu0
        %v3279 = vadd.f32 %v3062, %v3278
        %v3280 = vpop.f32.mrb[0].mxu0
        %3281 = vmatprep.mubr.bf16.mxu0 %v2264
        %3282 = vmatmul.mubr.bf16.gmra.mrb[0].mxu0 %v2263
        %v3283 = vpop.f32.mrb[0].mxu0
        %v3284 = vadd.f32 %v3067, %v3283
        %v3285 = vpop.f32.mrb[0].mxu0
        %v3286 = vpop.f32.mrb[0].mxu0
        %v3287 = vadd.f32 %v3070, %v3286
        %v3288 = vpop.f32.mrb[0].mxu0
        %3289 = vmatprep.mubr.bf16.mxu0 %v2273
        %3290 = vmatmul.mubr.bf16.gmra.mrb[0].mxu0 %v2272
        %v3291 = vpop.f32.mrb[0].mxu0
        %v3292 = vadd.f32 %v3075, %v3291
        %v3293 = vpop.f32.mrb[0].mxu0
        %v3294 = vpop.f32.mrb[0].mxu0
        %v3295 = vadd.f32 %v3078, %v3294
        %v3296 = vpop.f32.mrb[0].mxu0
        %3297 = vmatprep.mubr.bf16.mxu0 %v2282
        %3298 = vmatmul.mubr.bf16.gmra.mrb[0].mxu0 %v2281
        %v3299 = vpop.f32.mrb[0].mxu0
        %v3300 = vadd.f32 %v3083, %v3299
        %v3301 = vpop.f32.mrb[0].mxu0
        %v3302 = vpop.f32.mrb[0].mxu0
        %v3303 = vadd.f32 %v3086, %v3302
        %v3304 = vpop.f32.mrb[0].mxu0
        %3305 = vmatprep.mubr.bf16.mxu0 %v2291
        %3306 = vmatmul.mubr.bf16.gmra.mrb[0].mxu0 %v2290
        %v3307 = vpop.f32.mrb[0].mxu0
        %v3308 = vadd.f32 %v3091, %v3307
        %v3309 = vpop.f32.mrb[0].mxu0
        %v3310 = vpop.f32.mrb[0].mxu0
        %v3311 = vadd.f32 %v3094, %v3310
        %v3312 = vpop.f32.mrb[0].mxu0
        %3313 = vmatprep.mubr.bf16.mxu0 %v2300
        %3314 = vmatmul.mubr.bf16.gmra.mrb[0].mxu0 %v2299
        %v3315 = vpop.f32.mrb[0].mxu0
        %v3316 = vadd.f32 %v3099, %v3315
        %v3317 = vpop.f32.mrb[0].mxu0
        %v3318 = vpop.f32.mrb[0].mxu0
        %v3319 = vadd.f32 %v3102, %v3318
        %v3320 = vpop.f32.mrb[0].mxu0
        %3321 = vmatprep.mubr.bf16.mxu0 %v2309
        %3322 = vmatmul.mubr.bf16.gmra.mrb[0].mxu0 %v2308
        %v3323 = vpop.f32.mrb[0].mxu0
        %v3324 = vadd.f32 %v3107, %v3323
        %v3325 = vpop.f32.mrb[0].mxu0
        %v3326 = vpop.f32.mrb[0].mxu0
        %v3327 = vadd.f32 %v3110, %v3326
        %v3328 = vpop.f32.mrb[0].mxu0
        %3329 = vmatprep.mubr.bf16.mxu0 %v2318
        %3330 = vmatmul.mubr.bf16.gmra.mrb[0].mxu0 %v2317
        %v3331 = vpop.f32.mrb[0].mxu0
        %v3332 = vadd.f32 %v3115, %v3331
        %v3333 = vpop.f32.mrb[0].mxu0
        %v3334 = vpop.f32.mrb[0].mxu0
        %v3335 = vadd.f32 %v3118, %v3334
        %v3336 = vpop.f32.mrb[0].mxu0
        %3337 = vmatprep.mubr.bf16.mxu0 %v2327
        %3338 = vmatmul.mubr.bf16.gmra.mrb[0].mxu0 %v2326
        %v3339 = vpop.f32.mrb[0].mxu0
        %v3340 = vadd.f32 %v3123, %v3339
        %v3341 = vpop.f32.mrb[0].mxu0
        %v3342 = vpop.f32.mrb[0].mxu0
        %v3343 = vadd.f32 %v3126, %v3342
        %v3344 = vpop.f32.mrb[0].mxu0
        %3345 = vmatprep.mubr.bf16.mxu0 %v2336
        %3346 = vmatmul.mubr.bf16.gmra.mrb[0].mxu0 %v2335
        %v3347 = vpop.f32.mrb[0].mxu0
        %v3348 = vadd.f32 %v3131, %v3347
        %v3349 = vpop.f32.mrb[0].mxu0
        %v3350 = vpop.f32.mrb[0].mxu0
        %v3351 = vadd.f32 %v3134, %v3350
        %v3352 = vpop.f32.mrb[0].mxu0
        %3353 = vmatprep.mubr.bf16.mxu0 %v2345
        %3354 = vmatmul.mubr.bf16.gmra.mrb[0].mxu0 %v2344
        %v3355 = vpop.f32.mrb[0].mxu0
        %v3356 = vadd.f32 %v3139, %v3355
        %v3357 = vpop.f32.mrb[0].mxu0
        %v3358 = vpop.f32.mrb[0].mxu0
        %v3359 = vadd.f32 %v3142, %v3358
        %v3360 = vpop.f32.mrb[0].mxu0
        %3361 = vmatprep.mubr.bf16.mxu0 %v2354
        %3362 = vmatmul.mubr.bf16.gmra.mrb[0].mxu0 %v2353
        %v3363 = vpop.f32.mrb[0].mxu0
        %v3364 = vadd.f32 %v3147, %v3363
        %v3365 = vpop.f32.mrb[0].mxu0
        %v3366 = vpop.f32.mrb[0].mxu0
        %v3367 = vadd.f32 %v3150, %v3366
        %v3368 = vpop.f32.mrb[0].mxu0
        %3369 = vdwg.mxu0
        %3370 = vmatprep.subr.bf16.mxu0 0
        %3371 = vmatpush1.bf16.msra.mxu0 %v2824
        %3372 = vmatprep.subr.bf16.mxu0 0
        %3373 = vmatpush1.bf16.msra.mxu0 %v2825
        %3374 = vmatprep.subr.bf16.mxu0 0
        %3375 = vmatpush1.bf16.msra.mxu0 %v2826
        %3376 = vmatprep.subr.bf16.mxu0 0
        %3377 = vmatpush1.bf16.msra.mxu0 %v2827
        %3378 = vmatprep.subr.bf16.mxu0 0
        %3379 = vmatpush1.bf16.msra.mxu0 %v2828
        %3380 = vmatprep.subr.bf16.mxu0 0
        %3381 = vmatpush1.bf16.msra.mxu0 %v2829
        %3382 = vmatprep.subr.bf16.mxu0 0
        %3383 = vmatpush1.bf16.msra.mxu0 %v2830
        %3384 = vmatprep.subr.bf16.mxu0 0
        %3385 = vmatpush1.bf16.msra.mxu0 %v2831
        %3386 = vmatprep.subr.bf16.mxu0 0
        %3387 = vmatpush1.bf16.msra.mxu0 %v2832
        %3388 = vmatprep.subr.bf16.mxu0 0
        %3389 = vmatpush1.bf16.msra.mxu0 %v2833
        %3390 = vmatprep.subr.bf16.mxu0 0
        %3391 = vmatpush1.bf16.msra.mxu0 %v2834
        %3392 = vmatprep.subr.bf16.mxu0 0
        %3393 = vmatpush1.bf16.msra.mxu0 %v2835
        %3394 = vmatprep.subr.bf16.mxu0 0
        %3395 = vmatpush1.bf16.msra.mxu0 %v2836
        %3396 = vmatprep.subr.bf16.mxu0 0
        %3397 = vmatpush1.bf16.msra.mxu0 %v2837
        %3398 = vmatprep.subr.bf16.mxu0 0
        %3399 = vmatpush1.bf16.msra.mxu0 %v2838
        %3400 = vmatprep.subr.bf16.mxu0 0
        %3401 = vmatpush1.bf16.msra.mxu0 %v2839
        %3402 = vmatprep.mubr.bf16.mxu0 %v2158
        %3403 = vmatmul.mubr.bf16.gmra.mrb[0].mxu0 %v2157
        %v3404 = vpop.f32.mrb[0].mxu0
        %v3405 = vadd.f32 %v3188, %v3404
        %v3406 = vpop.f32.mrb[0].mxu0
        %v3407 = vpop.f32.mrb[0].mxu0
        %v3408 = vadd.f32 %v3191, %v3407
        %v3409 = vpop.f32.mrb[0].mxu0
        %3410 = vmatprep.mubr.bf16.mxu0 %v2167
        %3411 = vmatmul.mubr.bf16.gmra.mrb[0].mxu0 %v2166
        %v3412 = vpop.f32.mrb[0].mxu0
        %v3413 = vadd.f32 %v3196, %v3412
        %v3414 = vpop.f32.mrb[0].mxu0
        %v3415 = vpop.f32.mrb[0].mxu0
        %v3416 = vadd.f32 %v3199, %v3415
        %v3417 = vpop.f32.mrb[0].mxu0
        %3418 = vmatprep.mubr.bf16.mxu0 %v2176
        %3419 = vmatmul.mubr.bf16.gmra.mrb[0].mxu0 %v2175
        %v3420 = vpop.f32.mrb[0].mxu0
        %v3421 = vadd.f32 %v3204, %v3420
        %v3422 = vpop.f32.mrb[0].mxu0
        %v3423 = vpop.f32.mrb[0].mxu0
        %v3424 = vadd.f32 %v3207, %v3423
        %v3425 = vpop.f32.mrb[0].mxu0
        %3426 = vmatprep.mubr.bf16.mxu0 %v2185
        %3427 = vmatmul.mubr.bf16.gmra.mrb[0].mxu0 %v2184
        %v3428 = vpop.f32.mrb[0].mxu0
        %v3429 = vadd.f32 %v3212, %v3428
        %v3430 = vpop.f32.mrb[0].mxu0
        %v3431 = vpop.f32.mrb[0].mxu0
        %v3432 = vadd.f32 %v3215, %v3431
        %v3433 = vpop.f32.mrb[0].mxu0
        %3434 = vmatprep.mubr.bf16.mxu0 %v2194
        %3435 = vmatmul.mubr.bf16.gmra.mrb[0].mxu0 %v2193
        %v3436 = vpop.f32.mrb[0].mxu0
        %v3437 = vadd.f32 %v3220, %v3436
        %v3438 = vpop.f32.mrb[0].mxu0
        %v3439 = vpop.f32.mrb[0].mxu0
        %v3440 = vadd.f32 %v3223, %v3439
        %v3441 = vpop.f32.mrb[0].mxu0
        %3442 = vmatprep.mubr.bf16.mxu0 %v2203
        %3443 = vmatmul.mubr.bf16.gmra.mrb[0].mxu0 %v2202
        %v3444 = vpop.f32.mrb[0].mxu0
        %v3445 = vadd.f32 %v3228, %v3444
        %v3446 = vpop.f32.mrb[0].mxu0
        %v3447 = vpop.f32.mrb[0].mxu0
        %v3448 = vadd.f32 %v3231, %v3447
        %v3449 = vpop.f32.mrb[0].mxu0
        %3450 = vmatprep.mubr.bf16.mxu0 %v2212
        %3451 = vmatmul.mubr.bf16.gmra.mrb[0].mxu0 %v2211
        %v3452 = vpop.f32.mrb[0].mxu0
        %v3453 = vadd.f32 %v3236, %v3452
        %v3454 = vpop.f32.mrb[0].mxu0
        %v3455 = vpop.f32.mrb[0].mxu0
        %v3456 = vadd.f32 %v3239, %v3455
        %v3457 = vpop.f32.mrb[0].mxu0
        %3458 = vmatprep.mubr.bf16.mxu0 %v2221
        %3459 = vmatmul.mubr.bf16.gmra.mrb[0].mxu0 %v2220
        %v3460 = vpop.f32.mrb[0].mxu0
        %v3461 = vadd.f32 %v3244, %v3460
        %v3462 = vpop.f32.mrb[0].mxu0
        %v3463 = vpop.f32.mrb[0].mxu0
        %v3464 = vadd.f32 %v3247, %v3463
        %v3465 = vpop.f32.mrb[0].mxu0
        %3466 = vmatprep.mubr.bf16.mxu0 %v2230
        %3467 = vmatmul.mubr.bf16.gmra.mrb[0].mxu0 %v2229
        %v3468 = vpop.f32.mrb[0].mxu0
        %v3469 = vadd.f32 %v3252, %v3468
        %v3470 = vpop.f32.mrb[0].mxu0
        %v3471 = vpop.f32.mrb[0].mxu0
        %v3472 = vadd.f32 %v3255, %v3471
        %v3473 = vpop.f32.mrb[0].mxu0
        %3474 = vmatprep.mubr.bf16.mxu0 %v2239
        %3475 = vmatmul.mubr.bf16.gmra.mrb[0].mxu0 %v2238
        %v3476 = vpop.f32.mrb[0].mxu0
        %v3477 = vadd.f32 %v3260, %v3476
        %v3478 = vpop.f32.mrb[0].mxu0
        %v3479 = vpop.f32.mrb[0].mxu0
        %v3480 = vadd.f32 %v3263, %v3479
        %v3481 = vpop.f32.mrb[0].mxu0
        %3482 = vmatprep.mubr.bf16.mxu0 %v2248
        %3483 = vmatmul.mubr.bf16.gmra.mrb[0].mxu0 %v2247
        %v3484 = vpop.f32.mrb[0].mxu0
        %v3485 = vadd.f32 %v3268, %v3484
        %v3486 = vpop.f32.mrb[0].mxu0
        %v3487 = vpop.f32.mrb[0].mxu0
        %v3488 = vadd.f32 %v3271, %v3487
        %v3489 = vpop.f32.mrb[0].mxu0
        %3490 = vmatprep.mubr.bf16.mxu0 %v2257
        %3491 = vmatmul.mubr.bf16.gmra.mrb[0].mxu0 %v2256
        %v3492 = vpop.f32.mrb[0].mxu0
        %v3493 = vadd.f32 %v3276, %v3492
        %v3494 = vpop.f32.mrb[0].mxu0
        %v3495 = vpop.f32.mrb[0].mxu0
        %v3496 = vadd.f32 %v3279, %v3495
        %v3497 = vpop.f32.mrb[0].mxu0
        %3498 = vmatprep.mubr.bf16.mxu0 %v2266
        %3499 = vmatmul.mubr.bf16.gmra.mrb[0].mxu0 %v2265
        %v3500 = vpop.f32.mrb[0].mxu0
        %v3501 = vadd.f32 %v3284, %v3500
        %v3502 = vpop.f32.mrb[0].mxu0
        %v3503 = vpop.f32.mrb[0].mxu0
        %v3504 = vadd.f32 %v3287, %v3503
        %v3505 = vpop.f32.mrb[0].mxu0
        %3506 = vmatprep.mubr.bf16.mxu0 %v2275
        %3507 = vmatmul.mubr.bf16.gmra.mrb[0].mxu0 %v2274
        %v3508 = vpop.f32.mrb[0].mxu0
        %v3509 = vadd.f32 %v3292, %v3508
        %v3510 = vpop.f32.mrb[0].mxu0
        %v3511 = vpop.f32.mrb[0].mxu0
        %v3512 = vadd.f32 %v3295, %v3511
        %v3513 = vpop.f32.mrb[0].mxu0
        %3514 = vmatprep.mubr.bf16.mxu0 %v2284
        %3515 = vmatmul.mubr.bf16.gmra.mrb[0].mxu0 %v2283
        %v3516 = vpop.f32.mrb[0].mxu0
        %v3517 = vadd.f32 %v3300, %v3516
        %v3518 = vpop.f32.mrb[0].mxu0
        %v3519 = vpop.f32.mrb[0].mxu0
        %v3520 = vadd.f32 %v3303, %v3519
        %v3521 = vpop.f32.mrb[0].mxu0
        %3522 = vmatprep.mubr.bf16.mxu0 %v2293
        %3523 = vmatmul.mubr.bf16.gmra.mrb[0].mxu0 %v2292
        %v3524 = vpop.f32.mrb[0].mxu0
        %v3525 = vadd.f32 %v3308, %v3524
        %v3526 = vpop.f32.mrb[0].mxu0
        %v3527 = vpop.f32.mrb[0].mxu0
        %v3528 = vadd.f32 %v3311, %v3527
        %v3529 = vpop.f32.mrb[0].mxu0
        %3530 = vmatprep.mubr.bf16.mxu0 %v2302
        %3531 = vmatmul.mubr.bf16.gmra.mrb[0].mxu0 %v2301
        %v3532 = vpop.f32.mrb[0].mxu0
        %v3533 = vadd.f32 %v3316, %v3532
        %v3534 = vpop.f32.mrb[0].mxu0
        %v3535 = vpop.f32.mrb[0].mxu0
        %v3536 = vadd.f32 %v3319, %v3535
        %v3537 = vpop.f32.mrb[0].mxu0
        %3538 = vmatprep.mubr.bf16.mxu0 %v2311
        %3539 = vmatmul.mubr.bf16.gmra.mrb[0].mxu0 %v2310
        %v3540 = vpop.f32.mrb[0].mxu0
        %v3541 = vadd.f32 %v3324, %v3540
        %v3542 = vpop.f32.mrb[0].mxu0
        %v3543 = vpop.f32.mrb[0].mxu0
        %v3544 = vadd.f32 %v3327, %v3543
        %v3545 = vpop.f32.mrb[0].mxu0
        %3546 = vmatprep.mubr.bf16.mxu0 %v2320
        %3547 = vmatmul.mubr.bf16.gmra.mrb[0].mxu0 %v2319
        %v3548 = vpop.f32.mrb[0].mxu0
        %v3549 = vadd.f32 %v3332, %v3548
        %v3550 = vpop.f32.mrb[0].mxu0
        %v3551 = vpop.f32.mrb[0].mxu0
        %v3552 = vadd.f32 %v3335, %v3551
        %v3553 = vpop.f32.mrb[0].mxu0
        %3554 = vmatprep.mubr.bf16.mxu0 %v2329
        %3555 = vmatmul.mubr.bf16.gmra.mrb[0].mxu0 %v2328
        %v3556 = vpop.f32.mrb[0].mxu0
        %v3557 = vadd.f32 %v3340, %v3556
        %v3558 = vpop.f32.mrb[0].mxu0
        %v3559 = vpop.f32.mrb[0].mxu0
        %v3560 = vadd.f32 %v3343, %v3559
        %v3561 = vpop.f32.mrb[0].mxu0
        %3562 = vmatprep.mubr.bf16.mxu0 %v2338
        %3563 = vmatmul.mubr.bf16.gmra.mrb[0].mxu0 %v2337
        %v3564 = vpop.f32.mrb[0].mxu0
        %v3565 = vadd.f32 %v3348, %v3564
        %v3566 = vpop.f32.mrb[0].mxu0
        %v3567 = vpop.f32.mrb[0].mxu0
        %v3568 = vadd.f32 %v3351, %v3567
        %v3569 = vpop.f32.mrb[0].mxu0
        %3570 = vmatprep.mubr.bf16.mxu0 %v2347
        %3571 = vmatmul.mubr.bf16.gmra.mrb[0].mxu0 %v2346
        %v3572 = vpop.f32.mrb[0].mxu0
        %v3573 = vadd.f32 %v3356, %v3572
        %v3574 = vpop.f32.mrb[0].mxu0
        %v3575 = vpop.f32.mrb[0].mxu0
        %v3576 = vadd.f32 %v3359, %v3575
        %v3577 = vpop.f32.mrb[0].mxu0
        %3578 = vmatprep.mubr.bf16.mxu0 %v2356
        %3579 = vmatmul.mubr.bf16.gmra.mrb[0].mxu0 %v2355
        %v3580 = vpop.f32.mrb[0].mxu0
        %v3581 = vadd.f32 %v3364, %v3580
        %v3582 = vpop.f32.mrb[0].mxu0
        %v3583 = vpop.f32.mrb[0].mxu0
        %v3584 = vadd.f32 %v3367, %v3583
        %v3585 = vpop.f32.mrb[0].mxu0
        %3586 = vdwg.mxu0
        %3587 = vmatprep.subr.bf16.mxu0 0
        %3588 = vmatpush1.bf16.msra.mxu0 %v2840
        %3589 = vmatprep.subr.bf16.mxu0 0
        %3590 = vmatpush1.bf16.msra.mxu0 %v2841
        %3591 = vmatprep.subr.bf16.mxu0 0
        %3592 = vmatpush1.bf16.msra.mxu0 %v2842
        %3593 = vmatprep.subr.bf16.mxu0 0
        %3594 = vmatpush1.bf16.msra.mxu0 %v2843
        %3595 = vmatprep.subr.bf16.mxu0 0
        %3596 = vmatpush1.bf16.msra.mxu0 %v2844
        %3597 = vmatprep.subr.bf16.mxu0 0
        %3598 = vmatpush1.bf16.msra.mxu0 %v2845
        %3599 = vmatprep.subr.bf16.mxu0 0
        %3600 = vmatpush1.bf16.msra.mxu0 %v2846
        %3601 = vmatprep.subr.bf16.mxu0 0
        %3602 = vmatpush1.bf16.msra.mxu0 %v2847
        %3603 = vmatprep.subr.bf16.mxu0 0
        %3604 = vmatpush1.bf16.msra.mxu0 %v2848
        %3605 = vmatprep.subr.bf16.mxu0 0
        %3606 = vmatpush1.bf16.msra.mxu0 %v2849
        %3607 = vmatprep.subr.bf16.mxu0 0
        %3608 = vmatpush1.bf16.msra.mxu0 %v2850
        %3609 = vmatprep.subr.bf16.mxu0 0
        %3610 = vmatpush1.bf16.msra.mxu0 %v2851
        %3611 = vmatprep.subr.bf16.mxu0 0
        %3612 = vmatpush1.bf16.msra.mxu0 %v2852
        %3613 = vmatprep.subr.bf16.mxu0 0
        %3614 = vmatpush1.bf16.msra.mxu0 %v2853
        %3615 = vmatprep.subr.bf16.mxu0 0
        %3616 = vmatpush1.bf16.msra.mxu0 %v2854
        %3617 = vmatprep.subr.bf16.mxu0 0
        %3618 = vmatpush1.bf16.msra.mxu0 %v2855
        %3619 = vmatprep.mubr.bf16.mxu0 %v2160
        %3620 = vmatmul.mubr.bf16.gmra.mrb[0].mxu0 %v2159
        %v3621 = vpop.f32.mrb[0].mxu0
        %v3622 = vadd.f32 %v3405, %v3621
        %v3623 = vpop.f32.mrb[0].mxu0
        %v3624 = vpop.f32.mrb[0].mxu0
        %v3625 = vadd.f32 %v3408, %v3624
        %v3626 = vpop.f32.mrb[0].mxu0
        %3627 = vmatprep.mubr.bf16.mxu0 %v2169
        %3628 = vmatmul.mubr.bf16.gmra.mrb[0].mxu0 %v2168
        %v3629 = vpop.f32.mrb[0].mxu0
        %v3630 = vadd.f32 %v3413, %v3629
        %v3631 = vpop.f32.mrb[0].mxu0
        %v3632 = vpop.f32.mrb[0].mxu0
        %v3633 = vadd.f32 %v3416, %v3632
        %v3634 = vpop.f32.mrb[0].mxu0
        %3635 = vmatprep.mubr.bf16.mxu0 %v2178
        %3636 = vmatmul.mubr.bf16.gmra.mrb[0].mxu0 %v2177
        %v3637 = vpop.f32.mrb[0].mxu0
        %v3638 = vadd.f32 %v3421, %v3637
        %v3639 = vpop.f32.mrb[0].mxu0
        %v3640 = vpop.f32.mrb[0].mxu0
        %v3641 = vadd.f32 %v3424, %v3640
        %v3642 = vpop.f32.mrb[0].mxu0
        %3643 = vmatprep.mubr.bf16.mxu0 %v2187
        %3644 = vmatmul.mubr.bf16.gmra.mrb[0].mxu0 %v2186
        %v3645 = vpop.f32.mrb[0].mxu0
        %v3646 = vadd.f32 %v3429, %v3645
        %v3647 = vpop.f32.mrb[0].mxu0
        %v3648 = vpop.f32.mrb[0].mxu0
        %v3649 = vadd.f32 %v3432, %v3648
        %v3650 = vpop.f32.mrb[0].mxu0
        %3651 = vmatprep.mubr.bf16.mxu0 %v2196
        %3652 = vmatmul.mubr.bf16.gmra.mrb[0].mxu0 %v2195
        %v3653 = vpop.f32.mrb[0].mxu0
        %v3654 = vadd.f32 %v3437, %v3653
        %v3655 = vpop.f32.mrb[0].mxu0
        %v3656 = vpop.f32.mrb[0].mxu0
        %v3657 = vadd.f32 %v3440, %v3656
        %v3658 = vpop.f32.mrb[0].mxu0
        %3659 = vmatprep.mubr.bf16.mxu0 %v2205
        %3660 = vmatmul.mubr.bf16.gmra.mrb[0].mxu0 %v2204
        %v3661 = vpop.f32.mrb[0].mxu0
        %v3662 = vadd.f32 %v3445, %v3661
        %v3663 = vpop.f32.mrb[0].mxu0
        %v3664 = vpop.f32.mrb[0].mxu0
        %v3665 = vadd.f32 %v3448, %v3664
        %v3666 = vpop.f32.mrb[0].mxu0
        %3667 = vmatprep.mubr.bf16.mxu0 %v2214
        %3668 = vmatmul.mubr.bf16.gmra.mrb[0].mxu0 %v2213
        %v3669 = vpop.f32.mrb[0].mxu0
        %v3670 = vadd.f32 %v3453, %v3669
        %v3671 = vpop.f32.mrb[0].mxu0
        %v3672 = vpop.f32.mrb[0].mxu0
        %v3673 = vadd.f32 %v3456, %v3672
        %v3674 = vpop.f32.mrb[0].mxu0
        %3675 = vmatprep.mubr.bf16.mxu0 %v2223
        %3676 = vmatmul.mubr.bf16.gmra.mrb[0].mxu0 %v2222
        %v3677 = vpop.f32.mrb[0].mxu0
        %v3678 = vadd.f32 %v3461, %v3677
        %v3679 = vpop.f32.mrb[0].mxu0
        %v3680 = vpop.f32.mrb[0].mxu0
        %v3681 = vadd.f32 %v3464, %v3680
        %v3682 = vpop.f32.mrb[0].mxu0
        %3683 = vmatprep.mubr.bf16.mxu0 %v2232
        %3684 = vmatmul.mubr.bf16.gmra.mrb[0].mxu0 %v2231
        %v3685 = vpop.f32.mrb[0].mxu0
        %v3686 = vadd.f32 %v3469, %v3685
        %v3687 = vpop.f32.mrb[0].mxu0
        %v3688 = vpop.f32.mrb[0].mxu0
        %v3689 = vadd.f32 %v3472, %v3688
        %v3690 = vpop.f32.mrb[0].mxu0
        %3691 = vmatprep.mubr.bf16.mxu0 %v2241
        %3692 = vmatmul.mubr.bf16.gmra.mrb[0].mxu0 %v2240
        %v3693 = vpop.f32.mrb[0].mxu0
        %v3694 = vadd.f32 %v3477, %v3693
        %v3695 = vpop.f32.mrb[0].mxu0
        %v3696 = vpop.f32.mrb[0].mxu0
        %v3697 = vadd.f32 %v3480, %v3696
        %v3698 = vpop.f32.mrb[0].mxu0
        %3699 = vmatprep.mubr.bf16.mxu0 %v2250
        %3700 = vmatmul.mubr.bf16.gmra.mrb[0].mxu0 %v2249
        %v3701 = vpop.f32.mrb[0].mxu0
        %v3702 = vadd.f32 %v3485, %v3701
        %v3703 = vpop.f32.mrb[0].mxu0
        %v3704 = vpop.f32.mrb[0].mxu0
        %v3705 = vadd.f32 %v3488, %v3704
        %v3706 = vpop.f32.mrb[0].mxu0
        %3707 = vmatprep.mubr.bf16.mxu0 %v2259
        %3708 = vmatmul.mubr.bf16.gmra.mrb[0].mxu0 %v2258
        %v3709 = vpop.f32.mrb[0].mxu0
        %v3710 = vadd.f32 %v3493, %v3709
        %v3711 = vpop.f32.mrb[0].mxu0
        %v3712 = vpop.f32.mrb[0].mxu0
        %v3713 = vadd.f32 %v3496, %v3712
        %v3714 = vpop.f32.mrb[0].mxu0
        %3715 = vmatprep.mubr.bf16.mxu0 %v2268
        %3716 = vmatmul.mubr.bf16.gmra.mrb[0].mxu0 %v2267
        %v3717 = vpop.f32.mrb[0].mxu0
        %v3718 = vadd.f32 %v3501, %v3717
        %v3719 = vpop.f32.mrb[0].mxu0
        %v3720 = vpop.f32.mrb[0].mxu0
        %v3721 = vadd.f32 %v3504, %v3720
        %v3722 = vpop.f32.mrb[0].mxu0
        %3723 = vmatprep.mubr.bf16.mxu0 %v2277
        %3724 = vmatmul.mubr.bf16.gmra.mrb[0].mxu0 %v2276
        %v3725 = vpop.f32.mrb[0].mxu0
        %v3726 = vadd.f32 %v3509, %v3725
        %v3727 = vpop.f32.mrb[0].mxu0
        %v3728 = vpop.f32.mrb[0].mxu0
        %v3729 = vadd.f32 %v3512, %v3728
        %v3730 = vpop.f32.mrb[0].mxu0
        %3731 = vmatprep.mubr.bf16.mxu0 %v2286
        %3732 = vmatmul.mubr.bf16.gmra.mrb[0].mxu0 %v2285
        %v3733 = vpop.f32.mrb[0].mxu0
        %v3734 = vadd.f32 %v3517, %v3733
        %v3735 = vpop.f32.mrb[0].mxu0
        %v3736 = vpop.f32.mrb[0].mxu0
        %v3737 = vadd.f32 %v3520, %v3736
        %v3738 = vpop.f32.mrb[0].mxu0
        %3739 = vmatprep.mubr.bf16.mxu0 %v2295
        %3740 = vmatmul.mubr.bf16.gmra.mrb[0].mxu0 %v2294
        %v3741 = vpop.f32.mrb[0].mxu0
        %v3742 = vadd.f32 %v3525, %v3741
        %v3743 = vpop.f32.mrb[0].mxu0
        %v3744 = vpop.f32.mrb[0].mxu0
        %v3745 = vadd.f32 %v3528, %v3744
        %v3746 = vpop.f32.mrb[0].mxu0
        %3747 = vmatprep.mubr.bf16.mxu0 %v2304
        %3748 = vmatmul.mubr.bf16.gmra.mrb[0].mxu0 %v2303
        %v3749 = vpop.f32.mrb[0].mxu0
        %v3750 = vadd.f32 %v3533, %v3749
        %v3751 = vpop.f32.mrb[0].mxu0
        %v3752 = vpop.f32.mrb[0].mxu0
        %v3753 = vadd.f32 %v3536, %v3752
        %v3754 = vpop.f32.mrb[0].mxu0
        %3755 = vmatprep.mubr.bf16.mxu0 %v2313
        %3756 = vmatmul.mubr.bf16.gmra.mrb[0].mxu0 %v2312
        %v3757 = vpop.f32.mrb[0].mxu0
        %v3758 = vadd.f32 %v3541, %v3757
        %v3759 = vpop.f32.mrb[0].mxu0
        %v3760 = vpop.f32.mrb[0].mxu0
        %v3761 = vadd.f32 %v3544, %v3760
        %v3762 = vpop.f32.mrb[0].mxu0
        %3763 = vmatprep.mubr.bf16.mxu0 %v2322
        %3764 = vmatmul.mubr.bf16.gmra.mrb[0].mxu0 %v2321
        %v3765 = vpop.f32.mrb[0].mxu0
        %v3766 = vadd.f32 %v3549, %v3765
        %v3767 = vpop.f32.mrb[0].mxu0
        %v3768 = vpop.f32.mrb[0].mxu0
        %v3769 = vadd.f32 %v3552, %v3768
        %v3770 = vpop.f32.mrb[0].mxu0
        %3771 = vmatprep.mubr.bf16.mxu0 %v2331
        %3772 = vmatmul.mubr.bf16.gmra.mrb[0].mxu0 %v2330
        %v3773 = vpop.f32.mrb[0].mxu0
        %v3774 = vadd.f32 %v3557, %v3773
        %v3775 = vpop.f32.mrb[0].mxu0
        %v3776 = vpop.f32.mrb[0].mxu0
        %v3777 = vadd.f32 %v3560, %v3776
        %v3778 = vpop.f32.mrb[0].mxu0
        %3779 = vmatprep.mubr.bf16.mxu0 %v2340
        %3780 = vmatmul.mubr.bf16.gmra.mrb[0].mxu0 %v2339
        %v3781 = vpop.f32.mrb[0].mxu0
        %v3782 = vadd.f32 %v3565, %v3781
        %v3783 = vpop.f32.mrb[0].mxu0
        %v3784 = vpop.f32.mrb[0].mxu0
        %v3785 = vadd.f32 %v3568, %v3784
        %v3786 = vpop.f32.mrb[0].mxu0
        %3787 = vmatprep.mubr.bf16.mxu0 %v2349
        %3788 = vmatmul.mubr.bf16.gmra.mrb[0].mxu0 %v2348
        %v3789 = vpop.f32.mrb[0].mxu0
        %v3790 = vadd.f32 %v3573, %v3789
        %v3791 = vpop.f32.mrb[0].mxu0
        %v3792 = vpop.f32.mrb[0].mxu0
        %v3793 = vadd.f32 %v3576, %v3792
        %v3794 = vpop.f32.mrb[0].mxu0
        %3795 = vmatprep.mubr.bf16.mxu0 %v2358
        %3796 = vmatmul.mubr.bf16.gmra.mrb[0].mxu0 %v2357
        %v3797 = vpop.f32.mrb[0].mxu0
        %v3798 = vadd.f32 %v3581, %v3797
        %v3799 = vpop.f32.mrb[0].mxu0
        %v3800 = vpop.f32.mrb[0].mxu0
        %v3801 = vadd.f32 %v3584, %v3800
        %v3802 = vpop.f32.mrb[0].mxu0
        %3803 = vdwg.mxu0
        %3804 = vmatprep.subr.bf16.mxu0 0
        %3805 = vmatpush1.bf16.msra.mxu0 %v2856
        %3806 = vmatprep.subr.bf16.mxu0 0
        %3807 = vmatpush1.bf16.msra.mxu0 %v2857
        %3808 = vmatprep.subr.bf16.mxu0 0
        %3809 = vmatpush1.bf16.msra.mxu0 %v2858
        %3810 = vmatprep.subr.bf16.mxu0 0
        %3811 = vmatpush1.bf16.msra.mxu0 %v2859
        %3812 = vmatprep.subr.bf16.mxu0 0
        %3813 = vmatpush1.bf16.msra.mxu0 %v2860
        %3814 = vmatprep.subr.bf16.mxu0 0
        %3815 = vmatpush1.bf16.msra.mxu0 %v2861
        %3816 = vmatprep.subr.bf16.mxu0 0
        %3817 = vmatpush1.bf16.msra.mxu0 %v2862
        %3818 = vmatprep.subr.bf16.mxu0 0
        %3819 = vmatpush1.bf16.msra.mxu0 %v2863
        %3820 = vmatprep.subr.bf16.mxu0 0
        %3821 = vmatpush1.bf16.msra.mxu0 0
        %3822 = vmatprep.subr.bf16.mxu0 0
        %3823 = vmatpush1.bf16.msra.mxu0 0
        %3824 = vmatprep.subr.bf16.mxu0 0
        %3825 = vmatpush1.bf16.msra.mxu0 0
        %3826 = vmatprep.subr.bf16.mxu0 0
        %3827 = vmatpush1.bf16.msra.mxu0 0
        %3828 = vmatprep.subr.bf16.mxu0 0
        %3829 = vmatpush1.bf16.msra.mxu0 0
        %3830 = vmatprep.subr.bf16.mxu0 0
        %3831 = vmatpush1.bf16.msra.mxu0 0
        %3832 = vmatprep.subr.bf16.mxu0 0
        %3833 = vmatpush1.bf16.msra.mxu0 0
        %3834 = vmatprep.subr.bf16.mxu0 0
        %3835 = vmatpush1.bf16.msra.mxu0 0
        %3836 = vmatprep.mubr.bf16.mxu0 0
        %3837 = vmatmul.mubr.bf16.gmra.mrb[0].mxu0 %v2161
        %v3838 = vpop.f32.mrb[0].mxu0
        %v3839 = vadd.f32 %v3622, %v3838
        %v3840 = vpop.f32.mrb[0].mxu0
        %v3841 = vpop.f32.mrb[0].mxu0
        %v3842 = vadd.f32 %v3625, %v3841
        %v3843 = vpop.f32.mrb[0].mxu0
        %3844 = vmatprep.mubr.bf16.mxu0 0
        %3845 = vmatmul.mubr.bf16.gmra.mrb[0].mxu0 %v2170
        %v3846 = vpop.f32.mrb[0].mxu0
        %v3847 = vadd.f32 %v3630, %v3846
        %v3848 = vpop.f32.mrb[0].mxu0
        %v3849 = vpop.f32.mrb[0].mxu0
        %v3850 = vadd.f32 %v3633, %v3849
        %v3851 = vpop.f32.mrb[0].mxu0
        %3852 = vmatprep.mubr.bf16.mxu0 0
        %3853 = vmatmul.mubr.bf16.gmra.mrb[0].mxu0 %v2179
        %v3854 = vpop.f32.mrb[0].mxu0
        %v3855 = vadd.f32 %v3638, %v3854
        %v3856 = vpop.f32.mrb[0].mxu0
        %v3857 = vpop.f32.mrb[0].mxu0
        %v3858 = vadd.f32 %v3641, %v3857
        %v3859 = vpop.f32.mrb[0].mxu0
        %3860 = vmatprep.mubr.bf16.mxu0 0
        %3861 = vmatmul.mubr.bf16.gmra.mrb[0].mxu0 %v2188
        %v3862 = vpop.f32.mrb[0].mxu0
        %v3863 = vadd.f32 %v3646, %v3862
        %v3864 = vpop.f32.mrb[0].mxu0
        %v3865 = vpop.f32.mrb[0].mxu0
        %v3866 = vadd.f32 %v3649, %v3865
        %v3867 = vpop.f32.mrb[0].mxu0
        %3868 = vmatprep.mubr.bf16.mxu0 0
        %3869 = vmatmul.mubr.bf16.gmra.mrb[0].mxu0 %v2197
        %v3870 = vpop.f32.mrb[0].mxu0
        %v3871 = vadd.f32 %v3654, %v3870
        %v3872 = vpop.f32.mrb[0].mxu0
        %v3873 = vpop.f32.mrb[0].mxu0
        %v3874 = vadd.f32 %v3657, %v3873
        %v3875 = vpop.f32.mrb[0].mxu0
        %3876 = vmatprep.mubr.bf16.mxu0 0
        %3877 = vmatmul.mubr.bf16.gmra.mrb[0].mxu0 %v2206
        %v3878 = vpop.f32.mrb[0].mxu0
        %v3879 = vadd.f32 %v3662, %v3878
        %v3880 = vpop.f32.mrb[0].mxu0
        %v3881 = vpop.f32.mrb[0].mxu0
        %v3882 = vadd.f32 %v3665, %v3881
        %v3883 = vpop.f32.mrb[0].mxu0
        %3884 = vmatprep.mubr.bf16.mxu0 0
        %3885 = vmatmul.mubr.bf16.gmra.mrb[0].mxu0 %v2215
        %v3886 = vpop.f32.mrb[0].mxu0
        %v3887 = vadd.f32 %v3670, %v3886
        %v3888 = vpop.f32.mrb[0].mxu0
        %v3889 = vpop.f32.mrb[0].mxu0
        %v3890 = vadd.f32 %v3673, %v3889
        %v3891 = vpop.f32.mrb[0].mxu0
        %3892 = vmatprep.mubr.bf16.mxu0 0
        %3893 = vmatmul.mubr.bf16.gmra.mrb[0].mxu0 %v2224
        %v3894 = vpop.f32.mrb[0].mxu0
        %v3895 = vadd.f32 %v3678, %v3894
        %v3896 = vpop.f32.mrb[0].mxu0
        %v3897 = vpop.f32.mrb[0].mxu0
        %v3898 = vadd.f32 %v3681, %v3897
        %v3899 = vpop.f32.mrb[0].mxu0
        %3900 = vmatprep.mubr.bf16.mxu0 0
        %3901 = vmatmul.mubr.bf16.gmra.mrb[0].mxu0 %v2233
        %v3902 = vpop.f32.mrb[0].mxu0
        %v3903 = vadd.f32 %v3686, %v3902
        %v3904 = vpop.f32.mrb[0].mxu0
        %v3905 = vpop.f32.mrb[0].mxu0
        %v3906 = vadd.f32 %v3689, %v3905
        %v3907 = vpop.f32.mrb[0].mxu0
        %3908 = vmatprep.mubr.bf16.mxu0 0
        %3909 = vmatmul.mubr.bf16.gmra.mrb[0].mxu0 %v2242
        %v3910 = vpop.f32.mrb[0].mxu0
        %v3911 = vadd.f32 %v3694, %v3910
        %v3912 = vpop.f32.mrb[0].mxu0
        %v3913 = vpop.f32.mrb[0].mxu0
        %v3914 = vadd.f32 %v3697, %v3913
        %v3915 = vpop.f32.mrb[0].mxu0
        %3916 = vmatprep.mubr.bf16.mxu0 0
        %3917 = vmatmul.mubr.bf16.gmra.mrb[0].mxu0 %v2251
        %v3918 = vpop.f32.mrb[0].mxu0
        %v3919 = vadd.f32 %v3702, %v3918
        %v3920 = vpop.f32.mrb[0].mxu0
        %v3921 = vpop.f32.mrb[0].mxu0
        %v3922 = vadd.f32 %v3705, %v3921
        %v3923 = vpop.f32.mrb[0].mxu0
        %3924 = vmatprep.mubr.bf16.mxu0 0
        %3925 = vmatmul.mubr.bf16.gmra.mrb[0].mxu0 %v2260
        %v3926 = vpop.f32.mrb[0].mxu0
        %v3927 = vadd.f32 %v3710, %v3926
        %v3928 = vpop.f32.mrb[0].mxu0
        %v3929 = vpop.f32.mrb[0].mxu0
        %v3930 = vadd.f32 %v3713, %v3929
        %v3931 = vpop.f32.mrb[0].mxu0
        %3932 = vmatprep.mubr.bf16.mxu0 0
        %3933 = vmatmul.mubr.bf16.gmra.mrb[0].mxu0 %v2269
        %v3934 = vpop.f32.mrb[0].mxu0
        %v3935 = vadd.f32 %v3718, %v3934
        %v3936 = vpop.f32.mrb[0].mxu0
        %v3937 = vpop.f32.mrb[0].mxu0
        %v3938 = vadd.f32 %v3721, %v3937
        %v3939 = vpop.f32.mrb[0].mxu0
        %3940 = vmatprep.mubr.bf16.mxu0 0
        %3941 = vmatmul.mubr.bf16.gmra.mrb[0].mxu0 %v2278
        %v3942 = vpop.f32.mrb[0].mxu0
        %v3943 = vadd.f32 %v3726, %v3942
        %v3944 = vpop.f32.mrb[0].mxu0
        %v3945 = vpop.f32.mrb[0].mxu0
        %v3946 = vadd.f32 %v3729, %v3945
        %v3947 = vpop.f32.mrb[0].mxu0
        %3948 = vmatprep.mubr.bf16.mxu0 0
        %3949 = vmatmul.mubr.bf16.gmra.mrb[0].mxu0 %v2287
        %v3950 = vpop.f32.mrb[0].mxu0
        %v3951 = vadd.f32 %v3734, %v3950
        %v3952 = vpop.f32.mrb[0].mxu0
        %v3953 = vpop.f32.mrb[0].mxu0
        %v3954 = vadd.f32 %v3737, %v3953
        %v3955 = vpop.f32.mrb[0].mxu0
        %3956 = vmatprep.mubr.bf16.mxu0 0
        %3957 = vmatmul.mubr.bf16.gmra.mrb[0].mxu0 %v2296
        %v3958 = vpop.f32.mrb[0].mxu0
        %v3959 = vadd.f32 %v3742, %v3958
        %v3960 = vpop.f32.mrb[0].mxu0
        %v3961 = vpop.f32.mrb[0].mxu0
        %v3962 = vadd.f32 %v3745, %v3961
        %v3963 = vpop.f32.mrb[0].mxu0
        %3964 = vmatprep.mubr.bf16.mxu0 0
        %3965 = vmatmul.mubr.bf16.gmra.mrb[0].mxu0 %v2305
        %v3966 = vpop.f32.mrb[0].mxu0
        %v3967 = vadd.f32 %v3750, %v3966
        %v3968 = vpop.f32.mrb[0].mxu0
        %v3969 = vpop.f32.mrb[0].mxu0
        %v3970 = vadd.f32 %v3753, %v3969
        %v3971 = vpop.f32.mrb[0].mxu0
        %3972 = vmatprep.mubr.bf16.mxu0 0
        %3973 = vmatmul.mubr.bf16.gmra.mrb[0].mxu0 %v2314
        %v3974 = vpop.f32.mrb[0].mxu0
        %v3975 = vadd.f32 %v3758, %v3974
        %v3976 = vpop.f32.mrb[0].mxu0
        %v3977 = vpop.f32.mrb[0].mxu0
        %v3978 = vadd.f32 %v3761, %v3977
        %v3979 = vpop.f32.mrb[0].mxu0
        %3980 = vmatprep.mubr.bf16.mxu0 0
        %3981 = vmatmul.mubr.bf16.gmra.mrb[0].mxu0 %v2323
        %v3982 = vpop.f32.mrb[0].mxu0
        %v3983 = vadd.f32 %v3766, %v3982
        %v3984 = vpop.f32.mrb[0].mxu0
        %v3985 = vpop.f32.mrb[0].mxu0
        %v3986 = vadd.f32 %v3769, %v3985
        %v3987 = vpop.f32.mrb[0].mxu0
        %3988 = vmatprep.mubr.bf16.mxu0 0
        %3989 = vmatmul.mubr.bf16.gmra.mrb[0].mxu0 %v2332
        %v3990 = vpop.f32.mrb[0].mxu0
        %v3991 = vadd.f32 %v3774, %v3990
        %v3992 = vpop.f32.mrb[0].mxu0
        %v3993 = vpop.f32.mrb[0].mxu0
        %v3994 = vadd.f32 %v3777, %v3993
        %v3995 = vpop.f32.mrb[0].mxu0
        %3996 = vmatprep.mubr.bf16.mxu0 0
        %3997 = vmatmul.mubr.bf16.gmra.mrb[0].mxu0 %v2341
        %v3998 = vpop.f32.mrb[0].mxu0
        %v3999 = vadd.f32 %v3782, %v3998
        %v4000 = vpop.f32.mrb[0].mxu0
        %v4001 = vpop.f32.mrb[0].mxu0
        %v4002 = vadd.f32 %v3785, %v4001
        %v4003 = vpop.f32.mrb[0].mxu0
        %4004 = vmatprep.mubr.bf16.mxu0 0
        %4005 = vmatmul.mubr.bf16.gmra.mrb[0].mxu0 %v2350
        %v4006 = vpop.f32.mrb[0].mxu0
        %v4007 = vadd.f32 %v3790, %v4006
        %v4008 = vpop.f32.mrb[0].mxu0
        %v4009 = vpop.f32.mrb[0].mxu0
        %v4010 = vadd.f32 %v3793, %v4009
        %v4011 = vpop.f32.mrb[0].mxu0
        %4012 = vmatprep.mubr.bf16.mxu0 0
        %4013 = vmatmul.mubr.bf16.gmra.mrb[0].mxu0 %v2359
        %v4014 = vpop.f32.mrb[0].mxu0
        %v4015 = vadd.f32 %v3798, %v4014
        %v4016 = vpop.f32.mrb[0].mxu0
        %v4017 = vpop.f32.mrb[0].mxu0
        %v4018 = vadd.f32 %v3801, %v4017
        %v4019 = vpop.f32.mrb[0].mxu0
        %4020 = vdwg.mxu0
        %v4021 = vlaneseq
        %v4022 = vand.u32 %v4021, 127
        %vm4023 = vcmp.lt.s32.totalorder %v4022, 4
        %v4024 = vld [vmem:[%s212] sm:$0xf]
        %v4025 = vld [vmem:[%s212 + $0x4] sm:$0xf]
        %v4026 = vld [vmem:[%s212 + $0x8] sm:$0xf]
        %v4027 = vld [vmem:[%s212 + $0xc] sm:$0xf]
        %v4028 = vld [vmem:[%s212 + $0x10] sm:$0xf]
        %v4029 = vld [vmem:[%s212 + $0x14] sm:$0xf]
        %v4030 = vld [vmem:[%s212 + $0x18] sm:$0xf]
        %v4031 = vld [vmem:[%s212 + $0x1c] sm:$0xf]
        %v4032 = vld [vmem:[%s212 + $0x20] sm:$0xf]
        %v4033 = vld [vmem:[%s212 + $0x24] sm:$0xf]
        %v4034 = vld [vmem:[%s212 + $0x28] sm:$0xf]
        %v4035 = vld [vmem:[%s212 + $0x2c] sm:$0xf]
        %v4036 = vld [vmem:[%s212 + $0x30] sm:$0xf]
        %v4037 = vld [vmem:[%s212 + $0x34] sm:$0xf]
        %v4038 = vld [vmem:[%s212 + $0x38] sm:$0xf]
        %v4039 = vld [vmem:[%s212 + $0x3c] sm:$0xf]
        %v4040 = vld [vmem:[%s212 + $0x40] sm:$0xf]
        %v4041 = vld [vmem:[%s212 + $0x44] sm:$0xf]
        %v4042 = vld [vmem:[%s212 + $0x48] sm:$0xf]
        %v4043 = vld [vmem:[%s212 + $0x4c] sm:$0xf]
        %v4044 = vld [vmem:[%s212 + $0x50] sm:$0xf]
        %v4045 = vld [vmem:[%s212 + $0x54] sm:$0xf]
        %v4046 = vld [vmem:[%s212 + $0x58] sm:$0xf]
        %v4047 = vld [vmem:[%s212 + $0x5c] sm:$0xf]
        %v4048 = vld [vmem:[%s212 + $0x60] sm:$0xf]
        %v4049 = vld [vmem:[%s212 + $0x64] sm:$0xf]
        %v4050 = vld [vmem:[%s212 + $0x68] sm:$0xf]
        %v4051 = vld [vmem:[%s212 + $0x6c] sm:$0xf]
        %v4052 = vld [vmem:[%s212 + $0x70] sm:$0xf]
        %v4053 = vld [vmem:[%s212 + $0x74] sm:$0xf]
        %v4054 = vld [vmem:[%s212 + $0x78] sm:$0xf]
        %v4055 = vld [vmem:[%s212 + $0x7c] sm:$0xf]
        %v4056 = vld [vmem:[%s212 + $0x80] sm:$0xf]
        %v4057 = vld [vmem:[%s212 + $0x84] sm:$0xf]
        %v4058 = vld [vmem:[%s212 + $0x88] sm:$0xf]
        %v4059 = vld [vmem:[%s212 + $0x8c] sm:$0xf]
        %v4060 = vld [vmem:[%s212 + $0x90] sm:$0xf]
        %v4061 = vld [vmem:[%s212 + $0x94] sm:$0xf]
        %v4062 = vld [vmem:[%s212 + $0x98] sm:$0xf]
        %v4063 = vld [vmem:[%s212 + $0x9c] sm:$0xf]
        %v4064 = vld [vmem:[%s212 + $0xa0] sm:$0xf]
        %v4065 = vld [vmem:[%s212 + $0xa4] sm:$0xf]
        %v4066 = vld [vmem:[%s212 + $0xa8] sm:$0xf]
        %v4067 = vld [vmem:[%s212 + $0xac] sm:$0xf]
        %v4068 = vld [vmem:[%s212 + $0xb0] sm:$0xf]
        %v4069 = vld [vmem:[%s212 + $0xb4] sm:$0xf]
        %v4070 = vunpack.c.l.bf16 %v4024
        %v4071 = vunpack.c.l.bf16 %v4025
        %v4072 = vunpack.c.l.bf16 %v4026
        %v4073 = vunpack.c.l.bf16 %v4027
        %v4074 = vunpack.c.l.bf16 %v4028
        %v4075 = vunpack.c.l.bf16 %v4029
        %v4076 = vunpack.c.l.bf16 %v4030
        %v4077 = vunpack.c.l.bf16 %v4031
        %v4078 = vunpack.c.l.bf16 %v4032
        %v4079 = vunpack.c.l.bf16 %v4033
        %v4080 = vunpack.c.l.bf16 %v4034
        %v4081 = vunpack.c.l.bf16 %v4035
        %v4082 = vunpack.c.l.bf16 %v4036
        %v4083 = vunpack.c.l.bf16 %v4037
        %v4084 = vunpack.c.l.bf16 %v4038
        %v4085 = vunpack.c.l.bf16 %v4039
        %v4086 = vunpack.c.l.bf16 %v4040
        %v4087 = vunpack.c.l.bf16 %v4041
        %v4088 = vunpack.c.l.bf16 %v4042
        %v4089 = vunpack.c.l.bf16 %v4043
        %v4090 = vunpack.c.l.bf16 %v4044
        %v4091 = vunpack.c.l.bf16 %v4045
        %v4092 = vunpack.c.l.bf16 %v4046
        %v4093 = vunpack.c.l.bf16 %v4047
        %v4094 = vunpack.c.l.bf16 %v4048
        %v4095 = vunpack.c.l.bf16 %v4049
        %v4096 = vunpack.c.l.bf16 %v4050
        %v4097 = vunpack.c.l.bf16 %v4051
        %v4098 = vunpack.c.l.bf16 %v4052
        %v4099 = vunpack.c.l.bf16 %v4053
        %v4100 = vunpack.c.l.bf16 %v4054
        %v4101 = vunpack.c.l.bf16 %v4055
        %v4102 = vunpack.c.l.bf16 %v4056
        %v4103 = vunpack.c.l.bf16 %v4057
        %v4104 = vunpack.c.l.bf16 %v4058
        %v4105 = vunpack.c.l.bf16 %v4059
        %v4106 = vunpack.c.l.bf16 %v4060
        %v4107 = vunpack.c.l.bf16 %v4061
        %v4108 = vunpack.c.l.bf16 %v4062
        %v4109 = vunpack.c.l.bf16 %v4063
        %v4110 = vunpack.c.l.bf16 %v4064
        %v4111 = vunpack.c.l.bf16 %v4065
        %v4112 = vunpack.c.l.bf16 %v4066
        %v4113 = vunpack.c.l.bf16 %v4067
        %v4114 = vunpack.c.l.bf16 %v4068
        %v4115 = vunpack.c.l.bf16 %v4069
        %v4116 = vsel %vm4023, %v4070, 0.0
        %v4117 = vsel %vm4023, %v4071, 0.0
        %v4118 = vsel %vm4023, %v4072, 0.0
        %v4119 = vsel %vm4023, %v4073, 0.0
        %v4120 = vsel %vm4023, %v4074, 0.0
        %v4121 = vsel %vm4023, %v4075, 0.0
        %v4122 = vsel %vm4023, %v4076, 0.0
        %v4123 = vsel %vm4023, %v4077, 0.0
        %v4124 = vsel %vm4023, %v4078, 0.0
        %v4125 = vsel %vm4023, %v4079, 0.0
        %v4126 = vsel %vm4023, %v4080, 0.0
        %v4127 = vsel %vm4023, %v4081, 0.0
        %v4128 = vsel %vm4023, %v4082, 0.0
        %v4129 = vsel %vm4023, %v4083, 0.0
        %v4130 = vsel %vm4023, %v4084, 0.0
        %v4131 = vsel %vm4023, %v4085, 0.0
        %v4132 = vsel %vm4023, %v4086, 0.0
        %v4133 = vsel %vm4023, %v4087, 0.0
        %v4134 = vsel %vm4023, %v4088, 0.0
        %v4135 = vsel %vm4023, %v4089, 0.0
        %v4136 = vsel %vm4023, %v4090, 0.0
        %v4137 = vsel %vm4023, %v4091, 0.0
        %v4138 = vsel %vm4023, %v4092, 0.0
        %v4139 = vsel %vm4023, %v4093, 0.0
        %v4140 = vsel %vm4023, %v4094, 0.0
        %v4141 = vsel %vm4023, %v4095, 0.0
        %v4142 = vsel %vm4023, %v4096, 0.0
        %v4143 = vsel %vm4023, %v4097, 0.0
        %v4144 = vsel %vm4023, %v4098, 0.0
        %v4145 = vsel %vm4023, %v4099, 0.0
        %v4146 = vsel %vm4023, %v4100, 0.0
        %v4147 = vsel %vm4023, %v4101, 0.0
        %v4148 = vsel %vm4023, %v4102, 0.0
        %v4149 = vsel %vm4023, %v4103, 0.0
        %v4150 = vsel %vm4023, %v4104, 0.0
        %v4151 = vsel %vm4023, %v4105, 0.0
        %v4152 = vsel %vm4023, %v4106, 0.0
        %v4153 = vsel %vm4023, %v4107, 0.0
        %v4154 = vsel %vm4023, %v4108, 0.0
        %v4155 = vsel %vm4023, %v4109, 0.0
        %v4156 = vsel %vm4023, %v4110, 0.0
        %v4157 = vsel %vm4023, %v4111, 0.0
        %v4158 = vsel %vm4023, %v4112, 0.0
        %v4159 = vsel %vm4023, %v4113, 0.0
        %v4160 = vsel %vm4023, %v4114, 0.0
        %v4161 = vsel %vm4023, %v4115, 0.0
        %v4162 = vlaneseq
        %v4163 = vshrl.u32 %v4162, 7
        %v4164 = vsub.s32 2, %v4163
        %v4165 = vrot.slane %v246, %v4164
        %v4166 = vmul.f32 %v3839, %v4165
        %v4167 = vmul.f32 %v3842, %v4165
        %v4168 = vmul.f32 %v3847, %v4165
        %v4169 = vmul.f32 %v3850, %v4165
        %v4170 = vmul.f32 %v3855, %v4165
        %v4171 = vmul.f32 %v3858, %v4165
        %v4172 = vmul.f32 %v3863, %v4165
        %v4173 = vmul.f32 %v3866, %v4165
        %v4174 = vmul.f32 %v3871, %v4165
        %v4175 = vmul.f32 %v3874, %v4165
        %v4176 = vmul.f32 %v3879, %v4165
        %v4177 = vmul.f32 %v3882, %v4165
        %v4178 = vmul.f32 %v3887, %v4165
        %v4179 = vmul.f32 %v3890, %v4165
        %v4180 = vmul.f32 %v3895, %v4165
        %v4181 = vmul.f32 %v3898, %v4165
        %v4182 = vmul.f32 %v3903, %v4165
        %v4183 = vmul.f32 %v3906, %v4165
        %v4184 = vmul.f32 %v3911, %v4165
        %v4185 = vmul.f32 %v3914, %v4165
        %v4186 = vmul.f32 %v3919, %v4165
        %v4187 = vmul.f32 %v3922, %v4165
        %v4188 = vmul.f32 %v3927, %v4165
        %v4189 = vmul.f32 %v3930, %v4165
        %v4190 = vmul.f32 %v3935, %v4165
        %v4191 = vmul.f32 %v3938, %v4165
        %v4192 = vmul.f32 %v3943, %v4165
        %v4193 = vmul.f32 %v3946, %v4165
        %v4194 = vmul.f32 %v3951, %v4165
        %v4195 = vmul.f32 %v3954, %v4165
        %v4196 = vmul.f32 %v3959, %v4165
        %v4197 = vmul.f32 %v3962, %v4165
        %v4198 = vmul.f32 %v3967, %v4165
        %v4199 = vmul.f32 %v3970, %v4165
        %v4200 = vmul.f32 %v3975, %v4165
        %v4201 = vmul.f32 %v3978, %v4165
        %v4202 = vmul.f32 %v3983, %v4165
        %v4203 = vmul.f32 %v3986, %v4165
        %v4204 = vmul.f32 %v3991, %v4165
        %v4205 = vmul.f32 %v3994, %v4165
        %v4206 = vmul.f32 %v3999, %v4165
        %v4207 = vmul.f32 %v4002, %v4165
        %v4208 = vmul.f32 %v4007, %v4165
        %v4209 = vmul.f32 %v4010, %v4165
        %v4210 = vmul.f32 %v4015, %v4165
        %v4211 = vmul.f32 %v4018, %v4165
        %v4212 = vlaneseq
        %v4213 = vshrl.u32 %v4212, 7
        %v4214 = vsub.s32 3, %v4213
        %v4215 = vrot.slane %v246, %v4214
        %v4216 = vadd.f32 %v4166, %v4215
        %v4217 = vadd.f32 %v4167, %v4215
        %v4218 = vadd.f32 %v4168, %v4215
        %v4219 = vadd.f32 %v4169, %v4215
        %v4220 = vadd.f32 %v4170, %v4215
        %v4221 = vadd.f32 %v4171, %v4215
        %v4222 = vadd.f32 %v4172, %v4215
        %v4223 = vadd.f32 %v4173, %v4215
        %v4224 = vadd.f32 %v4174, %v4215
        %v4225 = vadd.f32 %v4175, %v4215
        %v4226 = vadd.f32 %v4176, %v4215
        %v4227 = vadd.f32 %v4177, %v4215
        %v4228 = vadd.f32 %v4178, %v4215
        %v4229 = vadd.f32 %v4179, %v4215
        %v4230 = vadd.f32 %v4180, %v4215
        %v4231 = vadd.f32 %v4181, %v4215
        %v4232 = vadd.f32 %v4182, %v4215
        %v4233 = vadd.f32 %v4183, %v4215
        %v4234 = vadd.f32 %v4184, %v4215
        %v4235 = vadd.f32 %v4185, %v4215
        %v4236 = vadd.f32 %v4186, %v4215
        %v4237 = vadd.f32 %v4187, %v4215
        %v4238 = vadd.f32 %v4188, %v4215
        %v4239 = vadd.f32 %v4189, %v4215
        %v4240 = vadd.f32 %v4190, %v4215
        %v4241 = vadd.f32 %v4191, %v4215
        %v4242 = vadd.f32 %v4192, %v4215
        %v4243 = vadd.f32 %v4193, %v4215
        %v4244 = vadd.f32 %v4194, %v4215
        %v4245 = vadd.f32 %v4195, %v4215
        %v4246 = vadd.f32 %v4196, %v4215
        %v4247 = vadd.f32 %v4197, %v4215
        %v4248 = vadd.f32 %v4198, %v4215
        %v4249 = vadd.f32 %v4199, %v4215
        %v4250 = vadd.f32 %v4200, %v4215
        %v4251 = vadd.f32 %v4201, %v4215
        %v4252 = vadd.f32 %v4202, %v4215
        %v4253 = vadd.f32 %v4203, %v4215
        %v4254 = vadd.f32 %v4204, %v4215
        %v4255 = vadd.f32 %v4205, %v4215
        %v4256 = vadd.f32 %v4206, %v4215
        %v4257 = vadd.f32 %v4207, %v4215
        %v4258 = vadd.f32 %v4208, %v4215
        %v4259 = vadd.f32 %v4209, %v4215
        %v4260 = vadd.f32 %v4210, %v4215
        %v4261 = vadd.f32 %v4211, %v4215
        %v4262 = vadd.f32 %v4216, %v4116
        %v4263 = vadd.f32 %v4217, %v4117
        %v4264 = vadd.f32 %v4218, %v4118
        %v4265 = vadd.f32 %v4219, %v4119
        %v4266 = vadd.f32 %v4220, %v4120
        %v4267 = vadd.f32 %v4221, %v4121
        %v4268 = vadd.f32 %v4222, %v4122
        %v4269 = vadd.f32 %v4223, %v4123
        %v4270 = vadd.f32 %v4224, %v4124
        %v4271 = vadd.f32 %v4225, %v4125
        %v4272 = vadd.f32 %v4226, %v4126
        %v4273 = vadd.f32 %v4227, %v4127
        %v4274 = vadd.f32 %v4228, %v4128
        %v4275 = vadd.f32 %v4229, %v4129
        %v4276 = vadd.f32 %v4230, %v4130
        %v4277 = vadd.f32 %v4231, %v4131
        %v4278 = vadd.f32 %v4232, %v4132
        %v4279 = vadd.f32 %v4233, %v4133
        %v4280 = vadd.f32 %v4234, %v4134
        %v4281 = vadd.f32 %v4235, %v4135
        %v4282 = vadd.f32 %v4236, %v4136
        %v4283 = vadd.f32 %v4237, %v4137
        %v4284 = vadd.f32 %v4238, %v4138
        %v4285 = vadd.f32 %v4239, %v4139
        %v4286 = vadd.f32 %v4240, %v4140
        %v4287 = vadd.f32 %v4241, %v4141
        %v4288 = vadd.f32 %v4242, %v4142
        %v4289 = vadd.f32 %v4243, %v4143
        %v4290 = vadd.f32 %v4244, %v4144
        %v4291 = vadd.f32 %v4245, %v4145
        %v4292 = vadd.f32 %v4246, %v4146
        %v4293 = vadd.f32 %v4247, %v4147
        %v4294 = vadd.f32 %v4248, %v4148
        %v4295 = vadd.f32 %v4249, %v4149
        %v4296 = vadd.f32 %v4250, %v4150
        %v4297 = vadd.f32 %v4251, %v4151
        %v4298 = vadd.f32 %v4252, %v4152
        %v4299 = vadd.f32 %v4253, %v4153
        %v4300 = vadd.f32 %v4254, %v4154
        %v4301 = vadd.f32 %v4255, %v4155
        %v4302 = vadd.f32 %v4256, %v4156
        %v4303 = vadd.f32 %v4257, %v4157
        %v4304 = vadd.f32 %v4258, %v4158
        %v4305 = vadd.f32 %v4259, %v4159
        %v4306 = vadd.f32 %v4260, %v4160
        %v4307 = vadd.f32 %v4261, %v4161
        %v4308 = vmax.f32 %v4262, 0.0
        %v4309 = vmax.f32 %v4263, 0.0
        %v4310 = vmax.f32 %v4264, 0.0
        %v4311 = vmax.f32 %v4265, 0.0
        %v4312 = vmax.f32 %v4266, 0.0
        %v4313 = vmax.f32 %v4267, 0.0
        %v4314 = vmax.f32 %v4268, 0.0
        %v4315 = vmax.f32 %v4269, 0.0
        %v4316 = vmax.f32 %v4270, 0.0
        %v4317 = vmax.f32 %v4271, 0.0
        %v4318 = vmax.f32 %v4272, 0.0
        %v4319 = vmax.f32 %v4273, 0.0
        %v4320 = vmax.f32 %v4274, 0.0
        %v4321 = vmax.f32 %v4275, 0.0
        %v4322 = vmax.f32 %v4276, 0.0
        %v4323 = vmax.f32 %v4277, 0.0
        %v4324 = vmax.f32 %v4278, 0.0
        %v4325 = vmax.f32 %v4279, 0.0
        %v4326 = vmax.f32 %v4280, 0.0
        %v4327 = vmax.f32 %v4281, 0.0
        %v4328 = vmax.f32 %v4282, 0.0
        %v4329 = vmax.f32 %v4283, 0.0
        %v4330 = vmax.f32 %v4284, 0.0
        %v4331 = vmax.f32 %v4285, 0.0
        %v4332 = vmax.f32 %v4286, 0.0
        %v4333 = vmax.f32 %v4287, 0.0
        %v4334 = vmax.f32 %v4288, 0.0
        %v4335 = vmax.f32 %v4289, 0.0
        %v4336 = vmax.f32 %v4290, 0.0
        %v4337 = vmax.f32 %v4291, 0.0
        %v4338 = vmax.f32 %v4292, 0.0
        %v4339 = vmax.f32 %v4293, 0.0
        %v4340 = vmax.f32 %v4294, 0.0
        %v4341 = vmax.f32 %v4295, 0.0
        %v4342 = vmax.f32 %v4296, 0.0
        %v4343 = vmax.f32 %v4297, 0.0
        %v4344 = vmax.f32 %v4298, 0.0
        %v4345 = vmax.f32 %v4299, 0.0
        %v4346 = vmax.f32 %v4300, 0.0
        %v4347 = vmax.f32 %v4301, 0.0
        %v4348 = vmax.f32 %v4302, 0.0
        %v4349 = vmax.f32 %v4303, 0.0
        %v4350 = vmax.f32 %v4304, 0.0
        %v4351 = vmax.f32 %v4305, 0.0
        %v4352 = vmax.f32 %v4306, 0.0
        %v4353 = vmax.f32 %v4307, 0.0
        %4354 = vst [vmem:[%s244] sm:$0xff] %v4308
        %4355 = vst [vmem:[%s244 + $0x8] sm:$0xff] %v4309
        %4356 = vst [vmem:[%s244 + $0x10] sm:$0xff] %v4310
        %4357 = vst [vmem:[%s244 + $0x18] sm:$0xff] %v4311
        %4358 = vst [vmem:[%s244 + $0x20] sm:$0xff] %v4312
        %4359 = vst [vmem:[%s244 + $0x28] sm:$0xff] %v4313
        %4360 = vst [vmem:[%s244 + $0x30] sm:$0xff] %v4314
        %4361 = vst [vmem:[%s244 + $0x38] sm:$0xff] %v4315
        %4362 = vst [vmem:[%s244 + $0x40] sm:$0xff] %v4316
        %4363 = vst [vmem:[%s244 + $0x48] sm:$0xff] %v4317
        %4364 = vst [vmem:[%s244 + $0x50] sm:$0xff] %v4318
        %4365 = vst [vmem:[%s244 + $0x58] sm:$0xff] %v4319
        %4366 = vst [vmem:[%s244 + $0x60] sm:$0xff] %v4320
        %4367 = vst [vmem:[%s244 + $0x68] sm:$0xff] %v4321
        %4368 = vst [vmem:[%s244 + $0x70] sm:$0xff] %v4322
        %4369 = vst [vmem:[%s244 + $0x78] sm:$0xff] %v4323
        %4370 = vst [vmem:[%s244 + $0x80] sm:$0xff] %v4324
        %4371 = vst [vmem:[%s244 + $0x88] sm:$0xff] %v4325
        %4372 = vst [vmem:[%s244 + $0x90] sm:$0xff] %v4326
        %4373 = vst [vmem:[%s244 + $0x98] sm:$0xff] %v4327
        %4374 = vst [vmem:[%s244 + $0xa0] sm:$0xff] %v4328
        %4375 = vst [vmem:[%s244 + $0xa8] sm:$0xff] %v4329
        %4376 = vst [vmem:[%s244 + $0xb0] sm:$0xff] %v4330
        %4377 = vst [vmem:[%s244 + $0xb8] sm:$0xff] %v4331
        %4378 = vst [vmem:[%s244 + $0xc0] sm:$0xff] %v4332
        %4379 = vst [vmem:[%s244 + $0xc8] sm:$0xff] %v4333
        %4380 = vst [vmem:[%s244 + $0xd0] sm:$0xff] %v4334
        %4381 = vst [vmem:[%s244 + $0xd8] sm:$0xff] %v4335
        %4382 = vst [vmem:[%s244 + $0xe0] sm:$0xff] %v4336
        %4383 = vst [vmem:[%s244 + $0xe8] sm:$0xff] %v4337
        %4384 = vst [vmem:[%s244 + $0xf0] sm:$0xff] %v4338
        %4385 = vst [vmem:[%s244 + $0xf8] sm:$0xff] %v4339
        %4386 = vst [vmem:[%s244 + $0x100] sm:$0xff] %v4340
        %4387 = vst [vmem:[%s244 + $0x108] sm:$0xff] %v4341
        %4388 = vst [vmem:[%s244 + $0x110] sm:$0xff] %v4342
        %4389 = vst [vmem:[%s244 + $0x118] sm:$0xff] %v4343
        %4390 = vst [vmem:[%s244 + $0x120] sm:$0xff] %v4344
        %4391 = vst [vmem:[%s244 + $0x128] sm:$0xff] %v4345
        %4392 = vst [vmem:[%s244 + $0x130] sm:$0xff] %v4346
        %4393 = vst [vmem:[%s244 + $0x138] sm:$0xff] %v4347
        %4394 = vst [vmem:[%s244 + $0x140] sm:$0xff] %v4348
        %4395 = vst [vmem:[%s244 + $0x148] sm:$0xff] %v4349
        %4396 = vst [vmem:[%s244 + $0x150] sm:$0xff] %v4350
        %4397 = vst [vmem:[%s244 + $0x158] sm:$0xff] %v4351
        %4398 = vst [vmem:[%s244 + $0x160] sm:$0xff] %v4352
        %4399 = vst [vmem:[%s244 + $0x168] sm:$0xff] %v4353
        %s4400 = sand.u32 %s119, 1
        %s4401 = scalar_lea.sflag [#allocation6], %s4400
        %s4402 = sand.u32 %s119, 1
        %s4403 = smul.addr %s4402, 368
        %s4404 = scalar_lea.vmem [#allocation10], %s4403
        // Predicated region
        $region49: #{tpu_custom_call.1} parent=35 // pred_check
          %p4405 = pneg %p129
        $region50: #{tpu_custom_call.1} parent=35 // pred_check_branch
          %4407 = sbr.rel (%p4405) target = $region52
        $region51: #{tpu_custom_call.1} parent=35 // pred_region
          %s4409 = ssub.s32 5888, 5888
          %4410 = vsyncadd %s4401, %s4409
          %s4411 = smul.addr %s22, 46
          %s4412 = smul.addr %s4411, 128
          %s4413 = scalar_lea.hbm %s4, %s4412
          %s4414 = sshll.u32 %s4404, 4
          %s4415 = int_to_ptr.vmem [resolvable:$true] %s4414
          %4420 = dma.vmem_to_hbm [thread:$0]  %s4415, 5888, %s4413, %s4401, 128, 128, 8
        $region52: #{tpu_custom_call.1} parent=35 // pred_fallthru
          _
      $region36: #{tpu_custom_call.1} parent=5 // pred_fallthru
        _
      %p4421 = scmp.le.s32.totalorder 2, %s17
      // Predicated region
      $region53: #{tpu_custom_call.1} parent=5 // pred_check
        %p4422 = pneg %p4421
      $region54: #{tpu_custom_call.1} parent=5 // pred_check_branch
        %4424 = sbr.rel (%p4422) target = $region56
      $region55: #{tpu_custom_call.1} parent=5 // pred_region
        %s4425 = ssub.s32 %s17, 2
        // Predicated region
        $region57: #{tpu_custom_call.1} parent=55 // pred_check
          %p4426 = pneg %p135
        $region58: #{tpu_custom_call.1} parent=55 // pred_check_branch
          %4428 = sbr.rel (%p4426) target = $region60
        $region59: #{tpu_custom_call.1} parent=55 // pred_region
          %s4429 = sand.u32 %s120, 1
          %s4430 = scalar_lea.sflag [#allocation6], %s4429
          %s4431 = sand.u32 %s120, 1
          %s4432 = smul.addr %s4431, 368
          %s4433 = scalar_lea.vmem [#allocation10], %s4432
          %4434 = dma.done %s4430, 5888
        $region60: #{tpu_custom_call.1} parent=55 // pred_fallthru
          _
      $region56: #{tpu_custom_call.1} parent=5 // pred_fallthru
        _
    $region6: #{tpu_custom_call.1} parent=1 // loop_footer
      %s21 = sadd.s32 1, %s17
    $region7: #{tpu_custom_call.1} parent=1 // loop_footer_branch
      %16 = sbr.rel target = $region3
    $region8: #{tpu_custom_call.1} parent=1 // loop_exit
      _
    %4435 = vsyncpa [#allocation5], 1
    %s4436 = scalar_lea.sflag [#allocation5], 1
    %4437 = vsyncpa %s4436, 1
    %4438 = vsyncpa [#allocation8], 1
    %4439 = vsyncpa [#allocation6], 1
    %s4440 = scalar_lea.sflag [#allocation6], 1
    %4441 = vsyncpa %s4440, 1

</llo_original>
